<compile_context>
chip_gen: v7x
topology: tpu7x:2x2x1
jax: 0.10.0
libtpu: 0.0.40
codegen_flags: <defaults>
</compile_context>

<pallas_src>
import jax
import jax.numpy as jnp
from jax.experimental import pallas as pl
from jax.experimental.pallas import tpu as pltpu  # noqa: F401  (TPU backend)

D_MODEL = 32
N_HEADS = 4
D_FF = 64
EPS = 1e-6                       # LayerNorm eps in the Annotated Transformer
_N_FF_CHUNKS = D_FF // D_MODEL   # FFN handled as D-wide chunks (no lane concat)

# ---- weight-slab block indices (each block = D_MODEL rows of the bf16 slab) ----
_SA_WQ, _SA_WK, _SA_WV, _SA_WO = 0, 1, 2, 3
_CA_WQ, _CA_WK, _CA_WV, _CA_WO = 4, 5, 6, 7
_W1 = 8                         # _N_FF_CHUNKS blocks: w1 column-chunks
_W2 = _W1 + _N_FF_CHUNKS        # _N_FF_CHUNKS blocks: w2 row-chunks
_N_WBLOCKS = _W2 + _N_FF_CHUNKS

# ---- bias-slab row indices (f32 slab, D_MODEL lanes) ----
_LN_A, _LN_B = 0, 3
_SA_BQ, _SA_BK, _SA_BV, _SA_BO = 6, 7, 8, 9
_CA_BQ, _CA_BK, _CA_BV, _CA_BO = 10, 11, 12, 13
_B1 = 14                        # _N_FF_CHUNKS rows
_B2 = _B1 + _N_FF_CHUNKS


def _decoder_layer_kernel(x_ref, mem_ref, tmask_ref, smask_ref, w_ref, b_ref, o_ref):
    N, D = x_ref.shape                     # N = B*T rows of the residual stream
    B, _, S = smask_ref.shape
    T = tmask_ref.shape[-1]
    H = N_HEADS
    dk = D // H
    scale = 1.0 / (dk ** 0.5)
    f32, bf16 = jnp.float32, jnp.bfloat16

    # ---- slab views (static sublane offsets: zero-cost ref windows) ----------
    def wblk(i):                            # i-th (D, D) bf16 weight block
        return w_ref[i * D:(i + 1) * D, :]

    def brow(i):                            # i-th (1, D) f32 bias / LN row
        return b_ref[i:i + 1, :]

    def dense(v, wi, bi):                   # bf16 MXU matmul, f32 accumulation
        return jnp.dot(v.astype(bf16), wblk(wi),
                       preferred_element_type=f32) + brow(bi)

    def layer_norm(v, idx):                 # a*(v-mean)/(std+eps)+b, unbiased std
        a = brow(_LN_A + idx)
        b = brow(_LN_B + idx)
        mean = jnp.mean(v, axis=-1, keepdims=True)
        diff = v - mean
        var = jnp.sum(diff * diff, axis=-1, keepdims=True) * (1.0 / (D - 1))
        return a * (diff / (jnp.sqrt(var) + EPS)) + b     # exact reciprocal

    # ---- per-head lane mask: head h owns lanes [h*dk, (h+1)*dk) --------------
    hh = jax.lax.broadcasted_iota(jnp.int32, (H, D), 0)
    dd = jax.lax.broadcasted_iota(jnp.int32, (H, D), 1)
    headmask = ((dd >= hh * dk) & (dd < (hh + 1) * dk)).astype(f32)   # (H, D)

    # additive mask biases (0 keep / -1e9 drop); broadcast implicitly at use.
    tbias = ((tmask_ref[...] - 1.0) * 1e9).reshape(1, T, 1, T)
    sbias = ((smask_ref[...] - 1.0) * 1e9).reshape(B, 1, 1, S)

    def attention(q, k, v, bias, skv):
        # q: (B*T, D); k, v: (B*skv, D); bias broadcastable to (B, T, H, skv).
        # Heads batched via per-head lane masking of Q (cross-head lanes are 0, so
        # contracting the FULL D axis yields exact per-head scores); a single wide
        # softmax; PV merged back with a masked sublane reduction.
        qx = q.reshape(N, 1, D) * headmask.reshape(1, H, D)          # (B*T, H, D)
        qx = qx.reshape(B, T * H, D).astype(bf16)
        k3 = k.reshape(B, skv, D).astype(bf16)
        v3 = v.reshape(B, skv, D).astype(bf16)
        s = jnp.einsum('bxd,bsd->bxs', qx, k3,
                       preferred_element_type=f32)                   # (B, T*H, skv)
        s = s.reshape(B, T, H, skv) * scale + bias
        s = s - jnp.max(s, axis=-1, keepdims=True)
        e = jnp.exp(s)
        p = e * pl.reciprocal(jnp.sum(e, axis=-1, keepdims=True), approx=True)
        px = p.reshape(B, T * H, skv).astype(bf16)
        o = jnp.einsum('bxs,bsd->bxd', px, v3,
                       preferred_element_type=f32)                   # (B, T*H, D)
        o = o.reshape(N, H, D) * headmask.reshape(1, H, D)           # keep own-head lanes
        return jnp.sum(o, axis=1)                                    # (B*T, D)

    x = x_ref[...]                                                   # (B*T, D) f32
    mem = mem_ref[...]                                               # (B*S, D) f32

    # ---- sublayer 0: masked self attention -----------------------------------
    xn = layer_norm(x, 0)
    attn = attention(dense(xn, _SA_WQ, _SA_BQ),
                     dense(xn, _SA_WK, _SA_BK),
                     dense(xn, _SA_WV, _SA_BV), tbias, T)
    x = x + dense(attn, _SA_WO, _SA_BO)

    # ---- sublayer 1: cross attention over encoder memory ---------------------
    xn = layer_norm(x, 1)
    attn = attention(dense(xn, _CA_WQ, _CA_BQ),
                     dense(mem, _CA_WK, _CA_BK),
                     dense(mem, _CA_WV, _CA_BV), sbias, S)
    x = x + dense(attn, _CA_WO, _CA_BO)

    # ---- sublayer 2: position-wise feed forward  w2(relu(w1(x))) --------------
    xn = layer_norm(x, 2)
    ff = brow(_B2)
    for c in range(_N_FF_CHUNKS):            # static unroll over D-wide chunks
        hid = jnp.maximum(dense(xn, _W1 + c, _B1 + c), 0.0)
        ff = ff + jnp.dot(hid.astype(bf16), wblk(_W2 + c),
                          preferred_element_type=f32)
    x = x + ff

    o_ref[...] = x
    # TODO(synk): dropout layers are intentionally identity (inference mode).


def pack_params(params):
    """One-time repack of reference-layout params into two kernel slabs:
       wslab: (12*D, D) bf16 -- [sa q,k,v,o | ca q,k,v,o | w1 col-chunks | w2 row-chunks]
       bslab: (24,  D) f32   -- LN a/b rows, attention biases, b1 chunks, b2 (+pad)."""
    (ln_a, ln_b, sa_w, sa_b, ca_w, ca_b, w1, b1, w2, b2) = params
    D = D_MODEL
    assert D_FF % D == 0
    blocks = [sa_w[0], sa_w[1], sa_w[2], sa_w[3],
              ca_w[0], ca_w[1], ca_w[2], ca_w[3]]
    blocks += [w1[:, c * D:(c + 1) * D] for c in range(_N_FF_CHUNKS)]
    blocks += [w2[c * D:(c + 1) * D, :] for c in range(_N_FF_CHUNKS)]
    wslab = jnp.concatenate(blocks, axis=0).astype(jnp.bfloat16)     # (12*D, D)

    b1v = b1.reshape(-1)
    rows = [ln_a[0], ln_a[1], ln_a[2], ln_b[0], ln_b[1], ln_b[2],
            sa_b[0], sa_b[1], sa_b[2], sa_b[3],
            ca_b[0], ca_b[1], ca_b[2], ca_b[3]]
    rows += [b1v[c * D:(c + 1) * D] for c in range(_N_FF_CHUNKS)]
    rows += [b2.reshape(-1)]
    bslab = jnp.stack(rows, axis=0).astype(jnp.float32)              # (17, D)
    pad = (-bslab.shape[0]) % 8
    bslab = jnp.pad(bslab, ((0, pad), (0, 0)))                       # (24, D)
    return wslab, bslab


def decoder_layer(x, memory, src_mask, target_mask, wslab, bslab):
    """x: (B,T,D) f32, memory: (B,S,D) f32, src_mask: (B,1,S), target_mask: (1,T,T)."""
    B, T, D = x.shape
    S = memory.shape[1]
    out2 = pl.pallas_call(
        _decoder_layer_kernel,
        out_shape=jax.ShapeDtypeStruct((B * T, D), jnp.float32),
        # no grid / no BlockSpecs: every operand is mapped whole into VMEM once.
    )(x.reshape(B * T, D).astype(jnp.float32),
      memory.reshape(B * S, D).astype(jnp.float32),
      target_mask.astype(jnp.float32),
      src_mask.astype(jnp.float32),
      wslab, bslab)
    return out2.reshape(B, T, D)


# ----------------------- pure-JAX reference (for checking) -----------------------
def _reference(x, memory, src_mask, target_mask, params):
    (ln_a, ln_b, sa_w, sa_b, ca_w, ca_b, w1, b1, w2, b2) = params
    B, T, D = x.shape
    S = memory.shape[1]
    tmask = jnp.broadcast_to(target_mask.astype(jnp.float32), (B, T, T))
    smask = jnp.broadcast_to(src_mask.astype(jnp.float32), (B, T, S))

    def layer_norm(v, a, b):
        mean = v.mean(-1, keepdims=True)
        diff = v - mean
        var = (diff * diff).sum(-1, keepdims=True) / (v.shape[-1] - 1)
        return a * diff / (jnp.sqrt(var) + EPS) + b

    def mha(xq, xkv, mask, w, bb):
        q = xq @ w[0] + bb[0]
        k = xkv @ w[1] + bb[1]
        v = xkv @ w[2] + bb[2]
        dk = D // N_HEADS
        def split(z):
            return z.reshape(B, -1, N_HEADS, dk).transpose(0, 2, 1, 3)
        qh, kh, vh = split(q), split(k), split(v)
        s = jnp.einsum('bhtd,bhsd->bhts', qh, kh) / (dk ** 0.5)
        s = jnp.where(mask[:, None, :, :] == 0, -1e9, s)
        p = jax.nn.softmax(s, axis=-1)
        o = jnp.einsum('bhts,bhsd->bhtd', p, vh)
        o = o.transpose(0, 2, 1, 3).reshape(B, -1, D)
        return o @ w[3] + bb[3]

    xn = layer_norm(x, ln_a[0], ln_b[0])
    x = x + mha(xn, xn, tmask, sa_w, sa_b)
    xn = layer_norm(x, ln_a[1], ln_b[1])
    x = x + mha(xn, memory, smask, ca_w, ca_b)
    xn = layer_norm(x, ln_a[2], ln_b[2])
    return x + (jnp.maximum(xn @ w1 + b1[0], 0.0) @ w2 + b2[0])


def init_params(key):
    ks = jax.random.split(key, 8)
    f32 = jnp.float32
    ln_a = jnp.ones((3, D_MODEL), f32)
    ln_b = jnp.zeros((3, D_MODEL), f32)
    sw = 1.0 / (D_MODEL ** 0.5)
    sa_w = jax.random.normal(ks[0], (4, D_MODEL, D_MODEL), f32) * sw
    sa_b = jax.random.normal(ks[1], (4, D_MODEL), f32) * 0.02
    ca_w = jax.random.normal(ks[2], (4, D_MODEL, D_MODEL), f32) * sw
    ca_b = jax.random.normal(ks[3], (4, D_MODEL), f32) * 0.02
    w1 = jax.random.normal(ks[4], (D_MODEL, D_FF), f32) * sw
    b1 = jax.random.normal(ks[5], (1, D_FF), f32) * 0.02
    w2 = jax.random.normal(ks[6], (D_FF, D_MODEL), f32) * (1.0 / (D_FF ** 0.5))
    b2 = jax.random.normal(ks[7], (1, D_MODEL), f32) * 0.02
    return (ln_a, ln_b, sa_w, sa_b, ca_w, ca_b, w1, b1, w2, b2)


if __name__ == "__main__":
    B, T, S = 2, 8, 8
    key = jax.random.PRNGKey(0)
    kx, km, kp = jax.random.split(key, 3)

    x = jax.random.normal(kx, (B, T, D_MODEL), jnp.float32)
    memory = jax.random.normal(km, (B, S, D_MODEL), jnp.float32)
    # causal target mask (1, T, T); src mask with two padded trailing positions.
    target_mask = jnp.tril(jnp.ones((1, T, T), jnp.float32))
    src_mask = jnp.ones((B, 1, S), jnp.float32).at[:, :, S - 2:].set(0.0)

    params = init_params(kp)
    wslab, bslab = pack_params(params)     # one-time weight/bias slab repack

    out = decoder_layer(x, memory, src_mask, target_mask, wslab, bslab)
    out = jax.block_until_ready(out)

    ref = _reference(x, memory, src_mask, target_mask, params)
    assert out.shape == (B, T, D_MODEL)
    assert bool(jnp.all(jnp.isfinite(out)))
    # Tolerance reflects bf16 matmul operands / bf16 probabilities (f32 accumulation)
    # vs the all-f32 reference.
    assert bool(jnp.allclose(out, ref, rtol=4e-2, atol=4e-2)), "mismatch vs reference"
    print("KERNEL_OK")
</pallas_src>

<mosaic_0001>
module attributes {stable_mosaic.version = 11 : i64} {
  func.func @_decoder_layer_kernel(%arg0: memref<16x32xf32, #tpu.memory_space<vmem>>, %arg1: memref<16x32xf32, #tpu.memory_space<vmem>>, %arg2: memref<1x8x8xf32, #tpu.memory_space<vmem>>, %arg3: memref<2x1x8xf32, #tpu.memory_space<vmem>>, %arg4: memref<384x32xbf16, #tpu.memory_space<vmem>>, %arg5: memref<24x32xf32, #tpu.memory_space<vmem>>, %arg6: memref<16x32xf32, #tpu.memory_space<vmem>>) attributes {dimension_semantics = [], scalar_prefetch = 0 : i64, scratch_operands = 0 : i64, tpu.core_type = #tpu.core_type<tc>} {
    %0 = tpu.iota {dimensions = array<i32: 0>} : vector<4x32xi32>
    %1 = tpu.iota {dimensions = array<i32: 1>} : vector<4x32xi32>
    %c8_i32 = arith.constant 8 : i32
    %2 = vector.broadcast %c8_i32 : i32 to vector<4x32xi32>
    %3 = arith.muli %0, %2 : vector<4x32xi32>
    %4 = arith.cmpi sge, %1, %3 : vector<4x32xi32>
    %c1_i32 = arith.constant 1 : i32
    %5 = vector.broadcast %c1_i32 : i32 to vector<4x32xi32>
    %6 = arith.addi %0, %5 : vector<4x32xi32>
    %c8_i32_0 = arith.constant 8 : i32
    %7 = vector.broadcast %c8_i32_0 : i32 to vector<4x32xi32>
    %8 = arith.muli %6, %7 : vector<4x32xi32>
    %9 = arith.cmpi slt, %1, %8 : vector<4x32xi32>
    %10 = arith.andi %4, %9 : vector<4x32xi1>
    %11 = arith.extui %10 : vector<4x32xi1> to vector<4x32xi32>
    %12 = arith.sitofp %11 : vector<4x32xi32> to vector<4x32xf32>
    %c0 = arith.constant 0 : index
    %c0_1 = arith.constant 0 : index
    %c0_2 = arith.constant 0 : index
    %13 = vector.load %arg2[%c0, %c0_1, %c0_2] : memref<1x8x8xf32, #tpu.memory_space<vmem>>, vector<1x8x8xf32>
    %cst = arith.constant 1.000000e+00 : f32
    %14 = vector.broadcast %cst : f32 to vector<1x8x8xf32>
    %15 = arith.subf %13, %14 : vector<1x8x8xf32>
    %cst_3 = arith.constant 1.000000e+09 : f32
    %16 = vector.broadcast %cst_3 : f32 to vector<1x8x8xf32>
    %17 = arith.mulf %15, %16 : vector<1x8x8xf32>
    %18 = vector.shape_cast %17 : vector<1x8x8xf32> to vector<1x8x1x8xf32>
    %c0_4 = arith.constant 0 : index
    %c0_5 = arith.constant 0 : index
    %c0_6 = arith.constant 0 : index
    %19 = vector.load %arg3[%c0_4, %c0_5, %c0_6] : memref<2x1x8xf32, #tpu.memory_space<vmem>>, vector<2x1x8xf32>
    %cst_7 = arith.constant 1.000000e+00 : f32
    %20 = vector.broadcast %cst_7 : f32 to vector<2x1x8xf32>
    %21 = arith.subf %19, %20 : vector<2x1x8xf32>
    %cst_8 = arith.constant 1.000000e+09 : f32
    %22 = vector.broadcast %cst_8 : f32 to vector<2x1x8xf32>
    %23 = arith.mulf %21, %22 : vector<2x1x8xf32>
    %24 = vector.shape_cast %23 : vector<2x1x8xf32> to vector<2x1x1x8xf32>
    %c0_9 = arith.constant 0 : index
    %c0_10 = arith.constant 0 : index
    %25 = vector.load %arg0[%c0_9, %c0_10] : memref<16x32xf32, #tpu.memory_space<vmem>>, vector<16x32xf32>
    %c0_11 = arith.constant 0 : index
    %c0_12 = arith.constant 0 : index
    %26 = vector.load %arg1[%c0_11, %c0_12] : memref<16x32xf32, #tpu.memory_space<vmem>>, vector<16x32xf32>
    %c0_13 = arith.constant 0 : index
    %c0_14 = arith.constant 0 : index
    %27 = vector.load %arg5[%c0_13, %c0_14] : memref<24x32xf32, #tpu.memory_space<vmem>>, vector<1x32xf32>
    %c3 = arith.constant 3 : index
    %c0_15 = arith.constant 0 : index
    %28 = vector.load %arg5[%c3, %c0_15] : memref<24x32xf32, #tpu.memory_space<vmem>>, vector<1x32xf32>
    %cst_16 = arith.constant dense<0.000000e+00> : vector<16xf32>
    %29 = vector.multi_reduction <add>, %25, %cst_16 [1] : vector<16x32xf32> to vector<16xf32>
    %30 = vector.shape_cast %29 : vector<16xf32> to vector<16x1xf32>
    %cst_17 = arith.constant 3.200000e+01 : f32
    %31 = vector.broadcast %cst_17 : f32 to vector<16x1xf32>
    %32 = arith.divf %30, %31 : vector<16x1xf32>
    %33 = vector.broadcast %32 : vector<16x1xf32> to vector<16x32xf32>
    %34 = arith.subf %25, %33 : vector<16x32xf32>
    %35 = arith.mulf %34, %34 : vector<16x32xf32>
    %cst_18 = arith.constant dense<0.000000e+00> : vector<16xf32>
    %36 = vector.multi_reduction <add>, %35, %cst_18 [1] : vector<16x32xf32> to vector<16xf32>
    %37 = vector.shape_cast %36 : vector<16xf32> to vector<16x1xf32>
    %cst_19 = arith.constant 0.0322580636 : f32
    %38 = vector.broadcast %cst_19 : f32 to vector<16x1xf32>
    %39 = arith.mulf %37, %38 : vector<16x1xf32>
    %40 = math.sqrt %39 : vector<16x1xf32>
    %cst_20 = arith.constant 9.99999997E-7 : f32
    %41 = vector.broadcast %cst_20 : f32 to vector<16x1xf32>
    %42 = arith.addf %40, %41 : vector<16x1xf32>
    %43 = vector.broadcast %42 : vector<16x1xf32> to vector<16x32xf32>
    %44 = arith.divf %34, %43 : vector<16x32xf32>
    %45 = vector.broadcast %27 : vector<1x32xf32> to vector<16x32xf32>
    %46 = arith.mulf %45, %44 : vector<16x32xf32>
    %47 = vector.broadcast %28 : vector<1x32xf32> to vector<16x32xf32>
    %48 = arith.addf %46, %47 : vector<16x32xf32>
    %49 = arith.truncf %48 : vector<16x32xf32> to vector<16x32xbf16>
    %c0_21 = arith.constant 0 : index
    %c0_22 = arith.constant 0 : index
    %50 = vector.load %arg4[%c0_21, %c0_22] : memref<384x32xbf16, #tpu.memory_space<vmem>>, vector<32x32xbf16>
    %cst_23 = arith.constant dense<0.000000e+00> : vector<16x32xf32>
    %51 = tpu.matmul %49, %50, %cst_23 {dimension_numbers = #tpu.dot_dimension_numbers<[1], [0], [0], [1], [0, 0, 1, 1], [], []>} : vector<16x32xbf16>, vector<32x32xbf16>, vector<16x32xf32> -> vector<16x32xf32>
    %c6 = arith.constant 6 : index
    %c0_24 = arith.constant 0 : index
    %52 = vector.load %arg5[%c6, %c0_24] : memref<24x32xf32, #tpu.memory_space<vmem>>, vector<1x32xf32>
    %53 = vector.broadcast %52 : vector<1x32xf32> to vector<16x32xf32>
    %54 = arith.addf %51, %53 : vector<16x32xf32>
    %55 = arith.truncf %48 : vector<16x32xf32> to vector<16x32xbf16>
    %c32 = arith.constant 32 : index
    %c0_25 = arith.constant 0 : index
    %56 = vector.load %arg4[%c32, %c0_25] : memref<384x32xbf16, #tpu.memory_space<vmem>>, vector<32x32xbf16>
    %cst_26 = arith.constant dense<0.000000e+00> : vector<16x32xf32>
    %57 = tpu.matmul %55, %56, %cst_26 {dimension_numbers = #tpu.dot_dimension_numbers<[1], [0], [0], [1], [0, 0, 1, 1], [], []>} : vector<16x32xbf16>, vector<32x32xbf16>, vector<16x32xf32> -> vector<16x32xf32>
    %c7 = arith.constant 7 : index
    %c0_27 = arith.constant 0 : index
    %58 = vector.load %arg5[%c7, %c0_27] : memref<24x32xf32, #tpu.memory_space<vmem>>, vector<1x32xf32>
    %59 = vector.broadcast %58 : vector<1x32xf32> to vector<16x32xf32>
    %60 = arith.addf %57, %59 : vector<16x32xf32>
    %61 = arith.truncf %48 : vector<16x32xf32> to vector<16x32xbf16>
    %c64 = arith.constant 64 : index
    %c0_28 = arith.constant 0 : index
    %62 = vector.load %arg4[%c64, %c0_28] : memref<384x32xbf16, #tpu.memory_space<vmem>>, vector<32x32xbf16>
    %cst_29 = arith.constant dense<0.000000e+00> : vector<16x32xf32>
    %63 = tpu.matmul %61, %62, %cst_29 {dimension_numbers = #tpu.dot_dimension_numbers<[1], [0], [0], [1], [0, 0, 1, 1], [], []>} : vector<16x32xbf16>, vector<32x32xbf16>, vector<16x32xf32> -> vector<16x32xf32>
    %c8 = arith.constant 8 : index
    %c0_30 = arith.constant 0 : index
    %64 = vector.load %arg5[%c8, %c0_30] : memref<24x32xf32, #tpu.memory_space<vmem>>, vector<1x32xf32>
    %65 = vector.broadcast %64 : vector<1x32xf32> to vector<16x32xf32>
    %66 = arith.addf %63, %65 : vector<16x32xf32>
    %67 = vector.shape_cast %54 : vector<16x32xf32> to vector<16x1x32xf32>
    %68 = vector.shape_cast %12 : vector<4x32xf32> to vector<1x4x32xf32>
    %69 = vector.broadcast %67 : vector<16x1x32xf32> to vector<16x4x32xf32>
    %70 = vector.broadcast %68 : vector<1x4x32xf32> to vector<16x4x32xf32>
    %71 = arith.mulf %69, %70 : vector<16x4x32xf32>
    %72 = vector.shape_cast %71 : vector<16x4x32xf32> to vector<2x32x32xf32>
    %73 = arith.truncf %72 : vector<2x32x32xf32> to vector<2x32x32xbf16>
    %74 = vector.shape_cast %60 : vector<16x32xf32> to vector<2x8x32xf32>
    %75 = arith.truncf %74 : vector<2x8x32xf32> to vector<2x8x32xbf16>
    %76 = vector.shape_cast %66 : vector<16x32xf32> to vector<2x8x32xf32>
    %77 = arith.truncf %76 : vector<2x8x32xf32> to vector<2x8x32xbf16>
    "tpu.trace_start"() <{level = 10 : i32, message = "bxd,bsd->bxs"}> : () -> ()
    %cst_31 = arith.constant dense<0.000000e+00> : vector<2x32x8xf32>
    %78 = tpu.matmul %73, %75, %cst_31 {dimension_numbers = #tpu.dot_dimension_numbers<[2], [2], [1], [1], [0, 0, 0, 1, 1, 1], [0], [0]>} : vector<2x32x32xbf16>, vector<2x8x32xbf16>, vector<2x32x8xf32> -> vector<2x32x8xf32>
    "tpu.trace_stop"() : () -> ()
    %79 = vector.shape_cast %78 : vector<2x32x8xf32> to vector<2x8x4x8xf32>
    %cst_32 = arith.constant 0.353553385 : f32
    %80 = vector.broadcast %cst_32 : f32 to vector<2x8x4x8xf32>
    %81 = arith.mulf %79, %80 : vector<2x8x4x8xf32>
    %82 = vector.broadcast %18 : vector<1x8x1x8xf32> to vector<2x8x4x8xf32>
    %83 = arith.addf %81, %82 : vector<2x8x4x8xf32>
    %cst_33 = arith.constant dense<0xFF800000> : vector<2x8x4xf32>
    %84 = vector.multi_reduction <maximumf>, %83, %cst_33 [3] : vector<2x8x4x8xf32> to vector<2x8x4xf32>
    %85 = vector.shape_cast %84 : vector<2x8x4xf32> to vector<2x8x4x1xf32>
    %86 = vector.broadcast %85 : vector<2x8x4x1xf32> to vector<2x8x4x8xf32>
    %87 = arith.subf %83, %86 : vector<2x8x4x8xf32>
    %88 = math.exp %87 : vector<2x8x4x8xf32>
    %cst_34 = arith.constant dense<0.000000e+00> : vector<2x8x4xf32>
    %89 = vector.multi_reduction <add>, %88, %cst_34 [3] : vector<2x8x4x8xf32> to vector<2x8x4xf32>
    %90 = vector.shape_cast %89 : vector<2x8x4xf32> to vector<2x8x4x1xf32>
    %91 = tpu.reciprocal %90 {approx = true} : vector<2x8x4x1xf32> -> vector<2x8x4x1xf32>
    %92 = vector.broadcast %91 : vector<2x8x4x1xf32> to vector<2x8x4x8xf32>
    %93 = arith.mulf %88, %92 : vector<2x8x4x8xf32>
    %94 = vector.shape_cast %93 : vector<2x8x4x8xf32> to vector<2x32x8xf32>
    %95 = arith.truncf %94 : vector<2x32x8xf32> to vector<2x32x8xbf16>
    "tpu.trace_start"() <{level = 10 : i32, message = "bxs,bsd->bxd"}> : () -> ()
    %cst_35 = arith.constant dense<0.000000e+00> : vector<2x32x32xf32>
    %96 = tpu.matmul %95, %77, %cst_35 {dimension_numbers = #tpu.dot_dimension_numbers<[2], [1], [1], [2], [0, 0, 0, 1, 1, 2], [0], [0]>} : vector<2x32x8xbf16>, vector<2x8x32xbf16>, vector<2x32x32xf32> -> vector<2x32x32xf32>
    "tpu.trace_stop"() : () -> ()
    %97 = vector.shape_cast %96 : vector<2x32x32xf32> to vector<16x4x32xf32>
    %98 = vector.shape_cast %12 : vector<4x32xf32> to vector<1x4x32xf32>
    %99 = vector.broadcast %98 : vector<1x4x32xf32> to vector<16x4x32xf32>
    %100 = arith.mulf %97, %99 : vector<16x4x32xf32>
    %cst_36 = arith.constant dense<0.000000e+00> : vector<16x32xf32>
    %101 = vector.multi_reduction <add>, %100, %cst_36 [1] : vector<16x4x32xf32> to vector<16x32xf32>
    %102 = arith.truncf %101 : vector<16x32xf32> to vector<16x32xbf16>
    %c96 = arith.constant 96 : index
    %c0_37 = arith.constant 0 : index
    %103 = vector.load %arg4[%c96, %c0_37] : memref<384x32xbf16, #tpu.memory_space<vmem>>, vector<32x32xbf16>
    %cst_38 = arith.constant dense<0.000000e+00> : vector<16x32xf32>
    %104 = tpu.matmul %102, %103, %cst_38 {dimension_numbers = #tpu.dot_dimension_numbers<[1], [0], [0], [1], [0, 0, 1, 1], [], []>} : vector<16x32xbf16>, vector<32x32xbf16>, vector<16x32xf32> -> vector<16x32xf32>
    %c9 = arith.constant 9 : index
    %c0_39 = arith.constant 0 : index
    %105 = vector.load %arg5[%c9, %c0_39] : memref<24x32xf32, #tpu.memory_space<vmem>>, vector<1x32xf32>
    %106 = vector.broadcast %105 : vector<1x32xf32> to vector<16x32xf32>
    %107 = arith.addf %104, %106 : vector<16x32xf32>
    %108 = arith.addf %25, %107 : vector<16x32xf32>
    %c1 = arith.constant 1 : index
    %c0_40 = arith.constant 0 : index
    %109 = vector.load %arg5[%c1, %c0_40] : memref<24x32xf32, #tpu.memory_space<vmem>>, vector<1x32xf32>
    %c4 = arith.constant 4 : index
    %c0_41 = arith.constant 0 : index
    %110 = vector.load %arg5[%c4, %c0_41] : memref<24x32xf32, #tpu.memory_space<vmem>>, vector<1x32xf32>
    %cst_42 = arith.constant dense<0.000000e+00> : vector<16xf32>
    %111 = vector.multi_reduction <add>, %108, %cst_42 [1] : vector<16x32xf32> to vector<16xf32>
    %112 = vector.shape_cast %111 : vector<16xf32> to vector<16x1xf32>
    %cst_43 = arith.constant 3.200000e+01 : f32
    %113 = vector.broadcast %cst_43 : f32 to vector<16x1xf32>
    %114 = arith.divf %112, %113 : vector<16x1xf32>
    %115 = vector.broadcast %114 : vector<16x1xf32> to vector<16x32xf32>
    %116 = arith.subf %108, %115 : vector<16x32xf32>
    %117 = arith.mulf %116, %116 : vector<16x32xf32>
    %cst_44 = arith.constant dense<0.000000e+00> : vector<16xf32>
    %118 = vector.multi_reduction <add>, %117, %cst_44 [1] : vector<16x32xf32> to vector<16xf32>
    %119 = vector.shape_cast %118 : vector<16xf32> to vector<16x1xf32>
    %cst_45 = arith.constant 0.0322580636 : f32
    %120 = vector.broadcast %cst_45 : f32 to vector<16x1xf32>
    %121 = arith.mulf %119, %120 : vector<16x1xf32>
    %122 = math.sqrt %121 : vector<16x1xf32>
    %cst_46 = arith.constant 9.99999997E-7 : f32
    %123 = vector.broadcast %cst_46 : f32 to vector<16x1xf32>
    %124 = arith.addf %122, %123 : vector<16x1xf32>
    %125 = vector.broadcast %124 : vector<16x1xf32> to vector<16x32xf32>
    %126 = arith.divf %116, %125 : vector<16x32xf32>
    %127 = vector.broadcast %109 : vector<1x32xf32> to vector<16x32xf32>
    %128 = arith.mulf %127, %126 : vector<16x32xf32>
    %129 = vector.broadcast %110 : vector<1x32xf32> to vector<16x32xf32>
    %130 = arith.addf %128, %129 : vector<16x32xf32>
    %131 = arith.truncf %130 : vector<16x32xf32> to vector<16x32xbf16>
    %c128 = arith.constant 128 : index
    %c0_47 = arith.constant 0 : index
    %132 = vector.load %arg4[%c128, %c0_47] : memref<384x32xbf16, #tpu.memory_space<vmem>>, vector<32x32xbf16>
    %cst_48 = arith.constant dense<0.000000e+00> : vector<16x32xf32>
    %133 = tpu.matmul %131, %132, %cst_48 {dimension_numbers = #tpu.dot_dimension_numbers<[1], [0], [0], [1], [0, 0, 1, 1], [], []>} : vector<16x32xbf16>, vector<32x32xbf16>, vector<16x32xf32> -> vector<16x32xf32>
    %c10 = arith.constant 10 : index
    %c0_49 = arith.constant 0 : index
    %134 = vector.load %arg5[%c10, %c0_49] : memref<24x32xf32, #tpu.memory_space<vmem>>, vector<1x32xf32>
    %135 = vector.broadcast %134 : vector<1x32xf32> to vector<16x32xf32>
    %136 = arith.addf %133, %135 : vector<16x32xf32>
    %137 = arith.truncf %26 : vector<16x32xf32> to vector<16x32xbf16>
    %c160 = arith.constant 160 : index
    %c0_50 = arith.constant 0 : index
    %138 = vector.load %arg4[%c160, %c0_50] : memref<384x32xbf16, #tpu.memory_space<vmem>>, vector<32x32xbf16>
    %cst_51 = arith.constant dense<0.000000e+00> : vector<16x32xf32>
    %139 = tpu.matmul %137, %138, %cst_51 {dimension_numbers = #tpu.dot_dimension_numbers<[1], [0], [0], [1], [0, 0, 1, 1], [], []>} : vector<16x32xbf16>, vector<32x32xbf16>, vector<16x32xf32> -> vector<16x32xf32>
    %c11 = arith.constant 11 : index
    %c0_52 = arith.constant 0 : index
    %140 = vector.load %arg5[%c11, %c0_52] : memref<24x32xf32, #tpu.memory_space<vmem>>, vector<1x32xf32>
    %141 = vector.broadcast %140 : vector<1x32xf32> to vector<16x32xf32>
    %142 = arith.addf %139, %141 : vector<16x32xf32>
    %143 = arith.truncf %26 : vector<16x32xf32> to vector<16x32xbf16>
    %c192 = arith.constant 192 : index
    %c0_53 = arith.constant 0 : index
    %144 = vector.load %arg4[%c192, %c0_53] : memref<384x32xbf16, #tpu.memory_space<vmem>>, vector<32x32xbf16>
    %cst_54 = arith.constant dense<0.000000e+00> : vector<16x32xf32>
    %145 = tpu.matmul %143, %144, %cst_54 {dimension_numbers = #tpu.dot_dimension_numbers<[1], [0], [0], [1], [0, 0, 1, 1], [], []>} : vector<16x32xbf16>, vector<32x32xbf16>, vector<16x32xf32> -> vector<16x32xf32>
    %c12 = arith.constant 12 : index
    %c0_55 = arith.constant 0 : index
    %146 = vector.load %arg5[%c12, %c0_55] : memref<24x32xf32, #tpu.memory_space<vmem>>, vector<1x32xf32>
    %147 = vector.broadcast %146 : vector<1x32xf32> to vector<16x32xf32>
    %148 = arith.addf %145, %147 : vector<16x32xf32>
    %149 = vector.shape_cast %136 : vector<16x32xf32> to vector<16x1x32xf32>
    %150 = vector.shape_cast %12 : vector<4x32xf32> to vector<1x4x32xf32>
    %151 = vector.broadcast %149 : vector<16x1x32xf32> to vector<16x4x32xf32>
    %152 = vector.broadcast %150 : vector<1x4x32xf32> to vector<16x4x32xf32>
    %153 = arith.mulf %151, %152 : vector<16x4x32xf32>
    %154 = vector.shape_cast %153 : vector<16x4x32xf32> to vector<2x32x32xf32>
    %155 = arith.truncf %154 : vector<2x32x32xf32> to vector<2x32x32xbf16>
    %156 = vector.shape_cast %142 : vector<16x32xf32> to vector<2x8x32xf32>
    %157 = arith.truncf %156 : vector<2x8x32xf32> to vector<2x8x32xbf16>
    %158 = vector.shape_cast %148 : vector<16x32xf32> to vector<2x8x32xf32>
    %159 = arith.truncf %158 : vector<2x8x32xf32> to vector<2x8x32xbf16>
    "tpu.trace_start"() <{level = 10 : i32, message = "bxd,bsd->bxs"}> : () -> ()
    %cst_56 = arith.constant dense<0.000000e+00> : vector<2x32x8xf32>
    %160 = tpu.matmul %155, %157, %cst_56 {dimension_numbers = #tpu.dot_dimension_numbers<[2], [2], [1], [1], [0, 0, 0, 1, 1, 1], [0], [0]>} : vector<2x32x32xbf16>, vector<2x8x32xbf16>, vector<2x32x8xf32> -> vector<2x32x8xf32>
    "tpu.trace_stop"() : () -> ()
    %161 = vector.shape_cast %160 : vector<2x32x8xf32> to vector<2x8x4x8xf32>
    %cst_57 = arith.constant 0.353553385 : f32
    %162 = vector.broadcast %cst_57 : f32 to vector<2x8x4x8xf32>
    %163 = arith.mulf %161, %162 : vector<2x8x4x8xf32>
    %164 = vector.broadcast %24 : vector<2x1x1x8xf32> to vector<2x8x4x8xf32>
    %165 = arith.addf %163, %164 : vector<2x8x4x8xf32>
    %cst_58 = arith.constant dense<0xFF800000> : vector<2x8x4xf32>
    %166 = vector.multi_reduction <maximumf>, %165, %cst_58 [3] : vector<2x8x4x8xf32> to vector<2x8x4xf32>
    %167 = vector.shape_cast %166 : vector<2x8x4xf32> to vector<2x8x4x1xf32>
    %168 = vector.broadcast %167 : vector<2x8x4x1xf32> to vector<2x8x4x8xf32>
    %169 = arith.subf %165, %168 : vector<2x8x4x8xf32>
    %170 = math.exp %169 : vector<2x8x4x8xf32>
    %cst_59 = arith.constant dense<0.000000e+00> : vector<2x8x4xf32>
    %171 = vector.multi_reduction <add>, %170, %cst_59 [3] : vector<2x8x4x8xf32> to vector<2x8x4xf32>
    %172 = vector.shape_cast %171 : vector<2x8x4xf32> to vector<2x8x4x1xf32>
    %173 = tpu.reciprocal %172 {approx = true} : vector<2x8x4x1xf32> -> vector<2x8x4x1xf32>
    %174 = vector.broadcast %173 : vector<2x8x4x1xf32> to vector<2x8x4x8xf32>
    %175 = arith.mulf %170, %174 : vector<2x8x4x8xf32>
    %176 = vector.shape_cast %175 : vector<2x8x4x8xf32> to vector<2x32x8xf32>
    %177 = arith.truncf %176 : vector<2x32x8xf32> to vector<2x32x8xbf16>
    "tpu.trace_start"() <{level = 10 : i32, message = "bxs,bsd->bxd"}> : () -> ()
    %cst_60 = arith.constant dense<0.000000e+00> : vector<2x32x32xf32>
    %178 = tpu.matmul %177, %159, %cst_60 {dimension_numbers = #tpu.dot_dimension_numbers<[2], [1], [1], [2], [0, 0, 0, 1, 1, 2], [0], [0]>} : vector<2x32x8xbf16>, vector<2x8x32xbf16>, vector<2x32x32xf32> -> vector<2x32x32xf32>
    "tpu.trace_stop"() : () -> ()
    %179 = vector.shape_cast %178 : vector<2x32x32xf32> to vector<16x4x32xf32>
    %180 = vector.shape_cast %12 : vector<4x32xf32> to vector<1x4x32xf32>
    %181 = vector.broadcast %180 : vector<1x4x32xf32> to vector<16x4x32xf32>
    %182 = arith.mulf %179, %181 : vector<16x4x32xf32>
    %cst_61 = arith.constant dense<0.000000e+00> : vector<16x32xf32>
    %183 = vector.multi_reduction <add>, %182, %cst_61 [1] : vector<16x4x32xf32> to vector<16x32xf32>
    %184 = arith.truncf %183 : vector<16x32xf32> to vector<16x32xbf16>
    %c224 = arith.constant 224 : index
    %c0_62 = arith.constant 0 : index
    %185 = vector.load %arg4[%c224, %c0_62] : memref<384x32xbf16, #tpu.memory_space<vmem>>, vector<32x32xbf16>
    %cst_63 = arith.constant dense<0.000000e+00> : vector<16x32xf32>
    %186 = tpu.matmul %184, %185, %cst_63 {dimension_numbers = #tpu.dot_dimension_numbers<[1], [0], [0], [1], [0, 0, 1, 1], [], []>} : vector<16x32xbf16>, vector<32x32xbf16>, vector<16x32xf32> -> vector<16x32xf32>
    %c13 = arith.constant 13 : index
    %c0_64 = arith.constant 0 : index
    %187 = vector.load %arg5[%c13, %c0_64] : memref<24x32xf32, #tpu.memory_space<vmem>>, vector<1x32xf32>
    %188 = vector.broadcast %187 : vector<1x32xf32> to vector<16x32xf32>
    %189 = arith.addf %186, %188 : vector<16x32xf32>
    %190 = arith.addf %108, %189 : vector<16x32xf32>
    %c2 = arith.constant 2 : index
    %c0_65 = arith.constant 0 : index
    %191 = vector.load %arg5[%c2, %c0_65] : memref<24x32xf32, #tpu.memory_space<vmem>>, vector<1x32xf32>
    %c5 = arith.constant 5 : index
    %c0_66 = arith.constant 0 : index
    %192 = vector.load %arg5[%c5, %c0_66] : memref<24x32xf32, #tpu.memory_space<vmem>>, vector<1x32xf32>
    %cst_67 = arith.constant dense<0.000000e+00> : vector<16xf32>
    %193 = vector.multi_reduction <add>, %190, %cst_67 [1] : vector<16x32xf32> to vector<16xf32>
    %194 = vector.shape_cast %193 : vector<16xf32> to vector<16x1xf32>
    %cst_68 = arith.constant 3.200000e+01 : f32
    %195 = vector.broadcast %cst_68 : f32 to vector<16x1xf32>
    %196 = arith.divf %194, %195 : vector<16x1xf32>
    %197 = vector.broadcast %196 : vector<16x1xf32> to vector<16x32xf32>
    %198 = arith.subf %190, %197 : vector<16x32xf32>
    %199 = arith.mulf %198, %198 : vector<16x32xf32>
    %cst_69 = arith.constant dense<0.000000e+00> : vector<16xf32>
    %200 = vector.multi_reduction <add>, %199, %cst_69 [1] : vector<16x32xf32> to vector<16xf32>
    %201 = vector.shape_cast %200 : vector<16xf32> to vector<16x1xf32>
    %cst_70 = arith.constant 0.0322580636 : f32
    %202 = vector.broadcast %cst_70 : f32 to vector<16x1xf32>
    %203 = arith.mulf %201, %202 : vector<16x1xf32>
    %204 = math.sqrt %203 : vector<16x1xf32>
    %cst_71 = arith.constant 9.99999997E-7 : f32
    %205 = vector.broadcast %cst_71 : f32 to vector<16x1xf32>
    %206 = arith.addf %204, %205 : vector<16x1xf32>
    %207 = vector.broadcast %206 : vector<16x1xf32> to vector<16x32xf32>
    %208 = arith.divf %198, %207 : vector<16x32xf32>
    %209 = vector.broadcast %191 : vector<1x32xf32> to vector<16x32xf32>
    %210 = arith.mulf %209, %208 : vector<16x32xf32>
    %211 = vector.broadcast %192 : vector<1x32xf32> to vector<16x32xf32>
    %212 = arith.addf %210, %211 : vector<16x32xf32>
    %c16 = arith.constant 16 : index
    %c0_72 = arith.constant 0 : index
    %213 = vector.load %arg5[%c16, %c0_72] : memref<24x32xf32, #tpu.memory_space<vmem>>, vector<1x32xf32>
    %214 = arith.truncf %212 : vector<16x32xf32> to vector<16x32xbf16>
    %c256 = arith.constant 256 : index
    %c0_73 = arith.constant 0 : index
    %215 = vector.load %arg4[%c256, %c0_73] : memref<384x32xbf16, #tpu.memory_space<vmem>>, vector<32x32xbf16>
    %cst_74 = arith.constant dense<0.000000e+00> : vector<16x32xf32>
    %216 = tpu.matmul %214, %215, %cst_74 {dimension_numbers = #tpu.dot_dimension_numbers<[1], [0], [0], [1], [0, 0, 1, 1], [], []>} : vector<16x32xbf16>, vector<32x32xbf16>, vector<16x32xf32> -> vector<16x32xf32>
    %c14 = arith.constant 14 : index
    %c0_75 = arith.constant 0 : index
    %217 = vector.load %arg5[%c14, %c0_75] : memref<24x32xf32, #tpu.memory_space<vmem>>, vector<1x32xf32>
    %218 = vector.broadcast %217 : vector<1x32xf32> to vector<16x32xf32>
    %219 = arith.addf %216, %218 : vector<16x32xf32>
    %cst_76 = arith.constant 0.000000e+00 : f32
    %220 = vector.broadcast %cst_76 : f32 to vector<16x32xf32>
    %221 = arith.maximumf %219, %220 : vector<16x32xf32>
    %222 = arith.truncf %221 : vector<16x32xf32> to vector<16x32xbf16>
    %c320 = arith.constant 320 : index
    %c0_77 = arith.constant 0 : index
    %223 = vector.load %arg4[%c320, %c0_77] : memref<384x32xbf16, #tpu.memory_space<vmem>>, vector<32x32xbf16>
    %cst_78 = arith.constant dense<0.000000e+00> : vector<16x32xf32>
    %224 = tpu.matmul %222, %223, %cst_78 {dimension_numbers = #tpu.dot_dimension_numbers<[1], [0], [0], [1], [0, 0, 1, 1], [], []>} : vector<16x32xbf16>, vector<32x32xbf16>, vector<16x32xf32> -> vector<16x32xf32>
    %225 = vector.broadcast %213 : vector<1x32xf32> to vector<16x32xf32>
    %226 = arith.addf %225, %224 : vector<16x32xf32>
    %227 = arith.truncf %212 : vector<16x32xf32> to vector<16x32xbf16>
    %c288 = arith.constant 288 : index
    %c0_79 = arith.constant 0 : index
    %228 = vector.load %arg4[%c288, %c0_79] : memref<384x32xbf16, #tpu.memory_space<vmem>>, vector<32x32xbf16>
    %cst_80 = arith.constant dense<0.000000e+00> : vector<16x32xf32>
    %229 = tpu.matmul %227, %228, %cst_80 {dimension_numbers = #tpu.dot_dimension_numbers<[1], [0], [0], [1], [0, 0, 1, 1], [], []>} : vector<16x32xbf16>, vector<32x32xbf16>, vector<16x32xf32> -> vector<16x32xf32>
    %c15 = arith.constant 15 : index
    %c0_81 = arith.constant 0 : index
    %230 = vector.load %arg5[%c15, %c0_81] : memref<24x32xf32, #tpu.memory_space<vmem>>, vector<1x32xf32>
    %231 = vector.broadcast %230 : vector<1x32xf32> to vector<16x32xf32>
    %232 = arith.addf %229, %231 : vector<16x32xf32>
    %cst_82 = arith.constant 0.000000e+00 : f32
    %233 = vector.broadcast %cst_82 : f32 to vector<16x32xf32>
    %234 = arith.maximumf %232, %233 : vector<16x32xf32>
    %235 = arith.truncf %234 : vector<16x32xf32> to vector<16x32xbf16>
    %c352 = arith.constant 352 : index
    %c0_83 = arith.constant 0 : index
    %236 = vector.load %arg4[%c352, %c0_83] : memref<384x32xbf16, #tpu.memory_space<vmem>>, vector<32x32xbf16>
    %cst_84 = arith.constant dense<0.000000e+00> : vector<16x32xf32>
    %237 = tpu.matmul %235, %236, %cst_84 {dimension_numbers = #tpu.dot_dimension_numbers<[1], [0], [0], [1], [0, 0, 1, 1], [], []>} : vector<16x32xbf16>, vector<32x32xbf16>, vector<16x32xf32> -> vector<16x32xf32>
    %238 = arith.addf %226, %237 : vector<16x32xf32>
    %239 = arith.addf %190, %238 : vector<16x32xf32>
    %c0_85 = arith.constant 0 : index
    %c0_86 = arith.constant 0 : index
    %240 = vector.load %arg6[%c0_85, %c0_86] : memref<16x32xf32, #tpu.memory_space<vmem>>, vector<16x32xf32>
    tpu.vector_store %arg6[%c0_85, %c0_86], %239 {strides = array<i32>} : memref<16x32xf32, #tpu.memory_space<vmem>>, vector<16x32xf32>,
    return
  }
}

</mosaic_0001>

<llo_original>
// kernel: tpu_custom_call.1
$region0: #{tpu_custom_call.1}
  #allocation0 [shape = 'u32[]', space=smem, size = 0x4, offset = 0x4, fixed_abs, tag = 'smem constant byte address 0x4 - core index']
  #allocation1 [shape = 'u32[144,128]{1,0:T(1,128)}', space=vmem, size = 0x12000, scoped, tag = 'internal scratch']
  %s0 = inlined_call_operand.vmem [shape: f32[16,32], index: 0, kind: input, shape index: {}]
  %s1 = inlined_call_operand.vmem [shape: f32[16,32], index: 1, kind: input, shape index: {}]
  %s2 = inlined_call_operand.vmem [shape: f32[1,8,8], index: 2, kind: input, shape index: {}]
  %s3 = inlined_call_operand.vmem [shape: f32[2,1,8], index: 3, kind: input, shape index: {}]
  %s4 = inlined_call_operand.vmem [shape: bf16[384,32], index: 4, kind: input, shape index: {}]
  %s5 = inlined_call_operand.vmem [shape: f32[24,32], index: 5, kind: input, shape index: {}]
  %s6 = inlined_call_operand.hbm [shape: f32[16,32], index: 6, kind: output, shape index: {}]
  %s7 = sld [smem:[#allocation0]]
  $region34: #{tpu_custom_call.1} parent=0
    _
  %s9 = ssub.s32 1, %s7
  %s10 = scalar_select 0, %s9, %s7
  $region1: #{tpu_custom_call.1} parent=0
    #allocation2 [shape = 'u8[8192]{0}', space=vmem, size = 0x2000, scoped, tag = 'output window, operand 0, single buffered']
    #allocation3 [shape = 's32[1]{0}', space=sflag, size = 0x4, scoped, tag = 'scoped memory for tpu_custom_call.1']
    %11 = vsyncpa [#allocation3], 0
    // Predicated region
    $region2: #{tpu_custom_call.1} parent=1 // pred_check
      _
    $region3: #{tpu_custom_call.1} parent=1 // pred_check_branch
      %13 = sbr.rel (0) target = $region5
    $region4: #{tpu_custom_call.1} parent=1 // pred_region
      _
    $region5: #{tpu_custom_call.1} parent=1 // pred_fallthru
      _
    // Predicated region
    $region6: #{tpu_custom_call.1} parent=1 // pred_check
      _
    $region7: #{tpu_custom_call.1} parent=1 // pred_check_branch
      %15 = sbr.rel (0) target = $region9
    $region8: #{tpu_custom_call.1} parent=1 // pred_region
      _
    $region9: #{tpu_custom_call.1} parent=1 // pred_fallthru
      _
    // Predicated region
    $region10: #{tpu_custom_call.1} parent=1 // pred_check
      _
    $region11: #{tpu_custom_call.1} parent=1 // pred_check_branch
      %17 = sbr.rel (0) target = $region13
    $region12: #{tpu_custom_call.1} parent=1 // pred_region
      _
    $region13: #{tpu_custom_call.1} parent=1 // pred_fallthru
      _
    // Predicated region
    $region14: #{tpu_custom_call.1} parent=1 // pred_check
      _
    $region15: #{tpu_custom_call.1} parent=1 // pred_check_branch
      %19 = sbr.rel (0) target = $region17
    $region16: #{tpu_custom_call.1} parent=1 // pred_region
      _
    $region17: #{tpu_custom_call.1} parent=1 // pred_fallthru
      _
    // Predicated region
    $region18: #{tpu_custom_call.1} parent=1 // pred_check
      _
    $region19: #{tpu_custom_call.1} parent=1 // pred_check_branch
      %21 = sbr.rel (0) target = $region21
    $region20: #{tpu_custom_call.1} parent=1 // pred_region
      _
    $region21: #{tpu_custom_call.1} parent=1 // pred_fallthru
      _
    // Predicated region
    $region22: #{tpu_custom_call.1} parent=1 // pred_check
      _
    $region23: #{tpu_custom_call.1} parent=1 // pred_check_branch
      %23 = sbr.rel (0) target = $region25
    $region24: #{tpu_custom_call.1} parent=1 // pred_region
      _
    $region25: #{tpu_custom_call.1} parent=1 // pred_fallthru
      _
    %v25 = vlaneseq
    %v26 = vshrl.u32 %v25, 7
    %v27 = vlaneseq
    %v28 = vand.u32 %v27, 127
    %v29 = vmul.u32 %v26, 8
    %vm30 = vcmp.ge.s32.totalorder %v28, %v29
    %v31 = vadd.s32 %v26, 1
    %v32 = vmul.u32 %v31, 8
    %vm33 = vcmp.lt.s32.totalorder %v28, %v32
    %vm34 = vmand %vm30, %vm33
    %v35 = vsel %vm34, 1, 0
    %v36 = vcvt.s32.f32 %v35
    %v37 = vld [vmem:[%s2] sm:$0xff]
    %v38 = vsub.f32 %v37, 1.0
    %v39 = vmul.f32 %v38, 1e+09
    %v41 = vcombine.high %v39, %v39
    %v43 = vunpack.c.l.s4 1966171168
    %v44 = vunpack.c.0.s8 %v43
    %v45 = vlaneseq
    %v46 = vshrl.u32 %v45, 7
    %v47 = vsub.s32 %v44, %v46
    %v48 = vrot.slane %v39, %v47
    %v50 = vunpack.c.l.s4 1966171168
    %v51 = vunpack.c.0.s8 %v50
    %v52 = vlaneseq
    %v53 = vshrl.u32 %v52, 7
    %v54 = vsub.s32 %v51, %v53
    %v55 = vrot.slane %v41, %v54
    %v56 = vcombine.high %v48, %v48
    %v57 = vcombine.high %v55, %v55
    %v59 = vunpack.c.l.s4 1966171168
    %v60 = vunpack.c.0.s8 %v59
    %v61 = vlaneseq
    %v62 = vshrl.u32 %v61, 7
    %v63 = vsub.s32 %v60, %v62
    %v64 = vrot.slane %v48, %v63
    %v66 = vunpack.c.l.s4 1966171168
    %v67 = vunpack.c.0.s8 %v66
    %v68 = vlaneseq
    %v69 = vshrl.u32 %v68, 7
    %v70 = vsub.s32 %v67, %v69
    %v71 = vrot.slane %v55, %v70
    %v73 = vunpack.c.l.s4 1966171168
    %v74 = vunpack.c.0.s8 %v73
    %v75 = vlaneseq
    %v76 = vshrl.u32 %v75, 7
    %v77 = vsub.s32 %v74, %v76
    %v78 = vrot.slane %v56, %v77
    %v80 = vunpack.c.l.s4 1966171168
    %v81 = vunpack.c.0.s8 %v80
    %v82 = vlaneseq
    %v83 = vshrl.u32 %v82, 7
    %v84 = vsub.s32 %v81, %v83
    %v85 = vrot.slane %v57, %v84
    %v86 = vcombine.high %v64, %v64
    %v87 = vcombine.high %v71, %v71
    %v88 = vcombine.high %v78, %v78
    %v89 = vcombine.high %v85, %v85
    %v90 = vld [vmem:[%s3] sm:$0x1]
    %v91 = vld [vmem:[%s3 + $0x1] sm:$0x1]
    %v92 = vsub.f32 %v90, 1.0
    %v93 = vsub.f32 %v91, 1.0
    %v94 = vmul.f32 %v92, 1e+09
    %v95 = vmul.f32 %v93, 1e+09
    %v96 = vld [vmem:[%s0] sm:$0xff]
    %v97 = vld [vmem:[%s0 + $0x8] sm:$0xff]
    %v98 = vld [vmem:[%s1] sm:$0xff]
    %v99 = vld [vmem:[%s1 + $0x8] sm:$0xff]
    %v100 = vld [vmem:[%s5] sm:$0x1]
    %v101 = vld [vmem:[%s5 + $0x3] sm:$0x1]
    %vm102 = vcmask 261120
    %v103 = vsel %vm102, %v96, 0.0
    %104 = vadd.xlane.f32.xlu0 %v103
    %v105 = vpop.xlane.xlu0 %104
    %v106 = vsel %vm102, %v97, 0.0
    %107 = vadd.xlane.f32.xlu0 %v106
    %v108 = vpop.xlane.xlu0 %107
    %v109 = vrcp.pop 32.0
    %v110 = vmul.f32 %v105, %v109
    %v111 = vmul.f32 %v108, %v109
    %v112 = vsub.f32 %v96, %v110
    %v113 = vsub.f32 %v97, %v111
    %v114 = vmul.f32 %v112, %v112
    %v115 = vmul.f32 %v113, %v113
    %v116 = vsel %vm102, %v114, 0.0
    %117 = vadd.xlane.f32.xlu0 %v116
    %v118 = vpop.xlane.xlu0 %117
    %v119 = vsel %vm102, %v115, 0.0
    %120 = vadd.xlane.f32.xlu0 %v119
    %v121 = vpop.xlane.xlu0 %120
    %v122 = vmul.f32 %v118, 0.032258064
    %v123 = vmul.f32 %v121, 0.032258064
    %v124 = vrsqrt.pop %v122
    %v125 = vmul.f32 %v122, %v124
    %vm126 = vcmp.eq.f32.partialorder %v122, inf
    %v127 = vsel %vm126, %v122, %v125
    %vm128 = vcmp.eq.f32.partialorder %v122, 0.0
    %v129 = vand.u32 %v122, 2147483648
    %v130 = vsel %vm128, %v129, %v127
    %v131 = vrsqrt.pop %v123
    %v132 = vmul.f32 %v123, %v131
    %vm133 = vcmp.eq.f32.partialorder %v123, inf
    %v134 = vsel %vm133, %v123, %v132
    %vm135 = vcmp.eq.f32.partialorder %v123, 0.0
    %v136 = vand.u32 %v123, 2147483648
    %v137 = vsel %vm135, %v136, %v134
    %v138 = vadd.f32 %v130, 1e-06
    %v139 = vadd.f32 %v137, 1e-06
    %v140 = vrcp.pop %v138
    %v141 = vmul.f32 %v112, %v140
    %v142 = vrcp.pop %v139
    %v143 = vmul.f32 %v113, %v142
    %v144 = vlaneseq
    %v145 = vshrl.u32 %v144, 7
    %v146 = vsub.s32 0, %v145
    %v147 = vrot.slane %v100, %v146
    %v148 = vmul.f32 %v147, %v141
    %v149 = vmul.f32 %v147, %v143
    %v150 = vlaneseq
    %v151 = vshrl.u32 %v150, 7
    %v152 = vsub.s32 0, %v151
    %v153 = vrot.slane %v101, %v152
    %v154 = vadd.f32 %v148, %v153
    %v155 = vadd.f32 %v149, %v153
    %v156 = vpack.c.bf16 %v155, %v154
    %v157 = vld [vmem:[%s4] sm:$0xf]
    %v158 = vld [vmem:[%s4 + $0x4] sm:$0xf]
    %v159 = vld [vmem:[%s4 + $0x8] sm:$0xf]
    %v160 = vld [vmem:[%s4 + $0xc] sm:$0xf]
    %v161 = vld [vmem:[%s5 + $0x6] sm:$0x1]
    %v162 = vlaneseq
    %v163 = vshrl.u32 %v162, 7
    %v164 = vsub.s32 0, %v163
    %v165 = vrot.slane %v161, %v164
    %v170 = vunpack.c.l.b16 %v157
    %v171 = vunpack.c.l.b16 %v158
    %v172 = vunpack.c.l.b16 %v159
    %v173 = vunpack.c.l.b16 %v160
    %v174 = vpack.c.b16 %v171, %v170
    %v175 = vpack.c.b16 %v173, %v172
    %v179 = vsel %vm102, %v156, 0
    %181 = vmatprep.subr.bf16.mxu0 0
    %182 = vmatpush1.bf16.msra.mxu0 %v174
    %183 = vmatprep.subr.bf16.mxu0 0
    %184 = vmatpush1.bf16.msra.mxu0 %v175
    %185 = vmatprep.subr.bf16.mxu0 0
    %186 = vmatpush1.bf16.msra.mxu0 0
    %187 = vmatprep.subr.bf16.mxu0 0
    %188 = vmatpush1.bf16.msra.mxu0 0
    %189 = vmatprep.subr.bf16.mxu0 0
    %190 = vmatpush1.bf16.msra.mxu0 0
    %191 = vmatprep.subr.bf16.mxu0 0
    %192 = vmatpush1.bf16.msra.mxu0 0
    %193 = vmatprep.subr.bf16.mxu0 0
    %194 = vmatpush1.bf16.msra.mxu0 0
    %195 = vmatprep.subr.bf16.mxu0 0
    %196 = vmatpush1.bf16.msra.mxu0 0
    %197 = vmatprep.subr.bf16.mxu0 0
    %198 = vmatpush1.bf16.msra.mxu0 0
    %199 = vmatprep.subr.bf16.mxu0 0
    %200 = vmatpush1.bf16.msra.mxu0 0
    %201 = vmatprep.subr.bf16.mxu0 0
    %202 = vmatpush1.bf16.msra.mxu0 0
    %203 = vmatprep.subr.bf16.mxu0 0
    %204 = vmatpush1.bf16.msra.mxu0 0
    %205 = vmatprep.subr.bf16.mxu0 0
    %206 = vmatpush1.bf16.msra.mxu0 0
    %207 = vmatprep.subr.bf16.mxu0 0
    %208 = vmatpush1.bf16.msra.mxu0 0
    %209 = vmatprep.subr.bf16.mxu0 0
    %210 = vmatpush1.bf16.msra.mxu0 0
    %211 = vmatprep.subr.bf16.mxu0 0
    %212 = vmatpush1.bf16.msra.mxu0 0
    %213 = vmatprep.mubr.bf16.mxu0 0
    %214 = vmatmul.mubr.bf16.gmra.mrb[0].mxu0 %v179
    %v215 = vpop.f32.mrb[0].mxu0
    %v216 = vadd.f32 %v165, %v215
    %v217 = vpop.f32.mrb[0].mxu0
    %v218 = vpop.f32.mrb[0].mxu0
    %v219 = vadd.f32 %v165, %v218
    %v220 = vpop.f32.mrb[0].mxu0
    %221 = vdwg.mxu0
    %v222 = vld [vmem:[%s4 + $0x10] sm:$0xf]
    %v223 = vld [vmem:[%s4 + $0x14] sm:$0xf]
    %v224 = vld [vmem:[%s4 + $0x18] sm:$0xf]
    %v225 = vld [vmem:[%s4 + $0x1c] sm:$0xf]
    %v226 = vld [vmem:[%s5 + $0x7] sm:$0x1]
    %v227 = vlaneseq
    %v228 = vshrl.u32 %v227, 7
    %v229 = vsub.s32 0, %v228
    %v230 = vrot.slane %v226, %v229
    %v235 = vunpack.c.l.b16 %v222
    %v236 = vunpack.c.l.b16 %v223
    %v237 = vunpack.c.l.b16 %v224
    %v238 = vunpack.c.l.b16 %v225
    %v239 = vpack.c.b16 %v236, %v235
    %v240 = vpack.c.b16 %v238, %v237
    %243 = vmatprep.subr.bf16.mxu0 0
    %244 = vmatpush1.bf16.msra.mxu0 %v239
    %245 = vmatprep.subr.bf16.mxu0 0
    %246 = vmatpush1.bf16.msra.mxu0 %v240
    %247 = vmatprep.subr.bf16.mxu0 0
    %248 = vmatpush1.bf16.msra.mxu0 0
    %249 = vmatprep.subr.bf16.mxu0 0
    %250 = vmatpush1.bf16.msra.mxu0 0
    %251 = vmatprep.subr.bf16.mxu0 0
    %252 = vmatpush1.bf16.msra.mxu0 0
    %253 = vmatprep.subr.bf16.mxu0 0
    %254 = vmatpush1.bf16.msra.mxu0 0
    %255 = vmatprep.subr.bf16.mxu0 0
    %256 = vmatpush1.bf16.msra.mxu0 0
    %257 = vmatprep.subr.bf16.mxu0 0
    %258 = vmatpush1.bf16.msra.mxu0 0
    %259 = vmatprep.subr.bf16.mxu0 0
    %260 = vmatpush1.bf16.msra.mxu0 0
    %261 = vmatprep.subr.bf16.mxu0 0
    %262 = vmatpush1.bf16.msra.mxu0 0
    %263 = vmatprep.subr.bf16.mxu0 0
    %264 = vmatpush1.bf16.msra.mxu0 0
    %265 = vmatprep.subr.bf16.mxu0 0
    %266 = vmatpush1.bf16.msra.mxu0 0
    %267 = vmatprep.subr.bf16.mxu0 0
    %268 = vmatpush1.bf16.msra.mxu0 0
    %269 = vmatprep.subr.bf16.mxu0 0
    %270 = vmatpush1.bf16.msra.mxu0 0
    %271 = vmatprep.subr.bf16.mxu0 0
    %272 = vmatpush1.bf16.msra.mxu0 0
    %273 = vmatprep.subr.bf16.mxu0 0
    %274 = vmatpush1.bf16.msra.mxu0 0
    %275 = vmatprep.mubr.bf16.mxu0 0
    %276 = vmatmul.mubr.bf16.gmra.mrb[0].mxu0 %v179
    %v277 = vpop.f32.mrb[0].mxu0
    %v278 = vadd.f32 %v230, %v277
    %v279 = vpop.f32.mrb[0].mxu0
    %v280 = vpop.f32.mrb[0].mxu0
    %v281 = vadd.f32 %v230, %v280
    %v282 = vpop.f32.mrb[0].mxu0
    %283 = vdwg.mxu0
    %v284 = vld [vmem:[%s4 + $0x20] sm:$0xf]
    %v285 = vld [vmem:[%s4 + $0x24] sm:$0xf]
    %v286 = vld [vmem:[%s4 + $0x28] sm:$0xf]
    %v287 = vld [vmem:[%s4 + $0x2c] sm:$0xf]
    %v288 = vld [vmem:[%s5 + $0x8] sm:$0x1]
    %v289 = vlaneseq
    %v290 = vshrl.u32 %v289, 7
    %v291 = vsub.s32 0, %v290
    %v292 = vrot.slane %v288, %v291
    %v297 = vunpack.c.l.b16 %v284
    %v298 = vunpack.c.l.b16 %v285
    %v299 = vunpack.c.l.b16 %v286
    %v300 = vunpack.c.l.b16 %v287
    %v301 = vpack.c.b16 %v298, %v297
    %v302 = vpack.c.b16 %v300, %v299
    %305 = vmatprep.subr.bf16.mxu0 0
    %306 = vmatpush1.bf16.msra.mxu0 %v301
    %307 = vmatprep.subr.bf16.mxu0 0
    %308 = vmatpush1.bf16.msra.mxu0 %v302
    %309 = vmatprep.subr.bf16.mxu0 0
    %310 = vmatpush1.bf16.msra.mxu0 0
    %311 = vmatprep.subr.bf16.mxu0 0
    %312 = vmatpush1.bf16.msra.mxu0 0
    %313 = vmatprep.subr.bf16.mxu0 0
    %314 = vmatpush1.bf16.msra.mxu0 0
    %315 = vmatprep.subr.bf16.mxu0 0
    %316 = vmatpush1.bf16.msra.mxu0 0
    %317 = vmatprep.subr.bf16.mxu0 0
    %318 = vmatpush1.bf16.msra.mxu0 0
    %319 = vmatprep.subr.bf16.mxu0 0
    %320 = vmatpush1.bf16.msra.mxu0 0
    %321 = vmatprep.subr.bf16.mxu0 0
    %322 = vmatpush1.bf16.msra.mxu0 0
    %323 = vmatprep.subr.bf16.mxu0 0
    %324 = vmatpush1.bf16.msra.mxu0 0
    %325 = vmatprep.subr.bf16.mxu0 0
    %326 = vmatpush1.bf16.msra.mxu0 0
    %327 = vmatprep.subr.bf16.mxu0 0
    %328 = vmatpush1.bf16.msra.mxu0 0
    %329 = vmatprep.subr.bf16.mxu0 0
    %330 = vmatpush1.bf16.msra.mxu0 0
    %331 = vmatprep.subr.bf16.mxu0 0
    %332 = vmatpush1.bf16.msra.mxu0 0
    %333 = vmatprep.subr.bf16.mxu0 0
    %334 = vmatpush1.bf16.msra.mxu0 0
    %335 = vmatprep.subr.bf16.mxu0 0
    %336 = vmatpush1.bf16.msra.mxu0 0
    %337 = vmatprep.mubr.bf16.mxu0 0
    %338 = vmatmul.mubr.bf16.gmra.mrb[0].mxu0 %v179
    %v339 = vpop.f32.mrb[0].mxu0
    %v340 = vadd.f32 %v292, %v339
    %v341 = vpop.f32.mrb[0].mxu0
    %v342 = vpop.f32.mrb[0].mxu0
    %v343 = vadd.f32 %v292, %v342
    %v344 = vpop.f32.mrb[0].mxu0
    %345 = vdwg.mxu0
    %v348 = vcombine.high %v216, %v216
    %v350 = vunpack.c.l.s4 1966171168
    %v351 = vunpack.c.0.s8 %v350
    %v352 = vlaneseq
    %v353 = vshrl.u32 %v352, 7
    %v354 = vsub.s32 %v351, %v353
    %v355 = vrot.slane %v216, %v354
    %v357 = vunpack.c.l.s4 1966171168
    %v358 = vunpack.c.0.s8 %v357
    %v359 = vlaneseq
    %v360 = vshrl.u32 %v359, 7
    %v361 = vsub.s32 %v358, %v360
    %v362 = vrot.slane %v348, %v361
    %v363 = vcombine.high %v355, %v355
    %v364 = vcombine.high %v362, %v362
    %v366 = vunpack.c.l.s4 1966171168
    %v367 = vunpack.c.0.s8 %v366
    %v368 = vlaneseq
    %v369 = vshrl.u32 %v368, 7
    %v370 = vsub.s32 %v367, %v369
    %v371 = vrot.slane %v355, %v370
    %v373 = vunpack.c.l.s4 1966171168
    %v374 = vunpack.c.0.s8 %v373
    %v375 = vlaneseq
    %v376 = vshrl.u32 %v375, 7
    %v377 = vsub.s32 %v374, %v376
    %v378 = vrot.slane %v362, %v377
    %v380 = vunpack.c.l.s4 1966171168
    %v381 = vunpack.c.0.s8 %v380
    %v382 = vlaneseq
    %v383 = vshrl.u32 %v382, 7
    %v384 = vsub.s32 %v381, %v383
    %v385 = vrot.slane %v363, %v384
    %v387 = vunpack.c.l.s4 1966171168
    %v388 = vunpack.c.0.s8 %v387
    %v389 = vlaneseq
    %v390 = vshrl.u32 %v389, 7
    %v391 = vsub.s32 %v388, %v390
    %v392 = vrot.slane %v364, %v391
    %v393 = vcombine.high %v371, %v371
    %v394 = vcombine.high %v378, %v378
    %v395 = vcombine.high %v385, %v385
    %v396 = vcombine.high %v392, %v392
    %v397 = vcombine.high %v219, %v219
    %v399 = vunpack.c.l.s4 1966171168
    %v400 = vunpack.c.0.s8 %v399
    %v401 = vlaneseq
    %v402 = vshrl.u32 %v401, 7
    %v403 = vsub.s32 %v400, %v402
    %v404 = vrot.slane %v219, %v403
    %v406 = vunpack.c.l.s4 1966171168
    %v407 = vunpack.c.0.s8 %v406
    %v408 = vlaneseq
    %v409 = vshrl.u32 %v408, 7
    %v410 = vsub.s32 %v407, %v409
    %v411 = vrot.slane %v397, %v410
    %v412 = vcombine.high %v404, %v404
    %v413 = vcombine.high %v411, %v411
    %v415 = vunpack.c.l.s4 1966171168
    %v416 = vunpack.c.0.s8 %v415
    %v417 = vlaneseq
    %v418 = vshrl.u32 %v417, 7
    %v419 = vsub.s32 %v416, %v418
    %v420 = vrot.slane %v404, %v419
    %v422 = vunpack.c.l.s4 1966171168
    %v423 = vunpack.c.0.s8 %v422
    %v424 = vlaneseq
    %v425 = vshrl.u32 %v424, 7
    %v426 = vsub.s32 %v423, %v425
    %v427 = vrot.slane %v411, %v426
    %v429 = vunpack.c.l.s4 1966171168
    %v430 = vunpack.c.0.s8 %v429
    %v431 = vlaneseq
    %v432 = vshrl.u32 %v431, 7
    %v433 = vsub.s32 %v430, %v432
    %v434 = vrot.slane %v412, %v433
    %v436 = vunpack.c.l.s4 1966171168
    %v437 = vunpack.c.0.s8 %v436
    %v438 = vlaneseq
    %v439 = vshrl.u32 %v438, 7
    %v440 = vsub.s32 %v437, %v439
    %v441 = vrot.slane %v413, %v440
    %v442 = vcombine.high %v420, %v420
    %v443 = vcombine.high %v427, %v427
    %v444 = vcombine.high %v434, %v434
    %v445 = vcombine.high %v441, %v441
    %v446 = vlaneseq
    %v447 = vshrl.u32 %v446, 7
    %v448 = vsub.s32 0, %v447
    %v449 = vrot.slane %v371, %v448
    %v450 = vlaneseq
    %v451 = vshrl.u32 %v450, 7
    %v452 = vsub.s32 0, %v451
    %v453 = vrot.slane %v385, %v452
    %v454 = vlaneseq
    %v455 = vshrl.u32 %v454, 7
    %v456 = vsub.s32 0, %v455
    %v457 = vrot.slane %v393, %v456
    %v458 = vlaneseq
    %v459 = vshrl.u32 %v458, 7
    %v460 = vsub.s32 0, %v459
    %v461 = vrot.slane %v395, %v460
    %v462 = vlaneseq
    %v463 = vshrl.u32 %v462, 7
    %v464 = vsub.s32 0, %v463
    %v465 = vrot.slane %v378, %v464
    %v466 = vlaneseq
    %v467 = vshrl.u32 %v466, 7
    %v468 = vsub.s32 0, %v467
    %v469 = vrot.slane %v392, %v468
    %v470 = vlaneseq
    %v471 = vshrl.u32 %v470, 7
    %v472 = vsub.s32 0, %v471
    %v473 = vrot.slane %v394, %v472
    %v474 = vlaneseq
    %v475 = vshrl.u32 %v474, 7
    %v476 = vsub.s32 0, %v475
    %v477 = vrot.slane %v396, %v476
    %v478 = vlaneseq
    %v479 = vshrl.u32 %v478, 7
    %v480 = vsub.s32 0, %v479
    %v481 = vrot.slane %v420, %v480
    %v482 = vlaneseq
    %v483 = vshrl.u32 %v482, 7
    %v484 = vsub.s32 0, %v483
    %v485 = vrot.slane %v434, %v484
    %v486 = vlaneseq
    %v487 = vshrl.u32 %v486, 7
    %v488 = vsub.s32 0, %v487
    %v489 = vrot.slane %v442, %v488
    %v490 = vlaneseq
    %v491 = vshrl.u32 %v490, 7
    %v492 = vsub.s32 0, %v491
    %v493 = vrot.slane %v444, %v492
    %v494 = vlaneseq
    %v495 = vshrl.u32 %v494, 7
    %v496 = vsub.s32 0, %v495
    %v497 = vrot.slane %v427, %v496
    %v498 = vlaneseq
    %v499 = vshrl.u32 %v498, 7
    %v500 = vsub.s32 0, %v499
    %v501 = vrot.slane %v441, %v500
    %v502 = vlaneseq
    %v503 = vshrl.u32 %v502, 7
    %v504 = vsub.s32 0, %v503
    %v505 = vrot.slane %v443, %v504
    %v506 = vlaneseq
    %v507 = vshrl.u32 %v506, 7
    %v508 = vsub.s32 0, %v507
    %v509 = vrot.slane %v445, %v508
    %v526 = vmul.f32 %v449, %v36
    %v527 = vmul.f32 %v453, %v36
    %v528 = vmul.f32 %v457, %v36
    %v529 = vmul.f32 %v461, %v36
    %v530 = vmul.f32 %v465, %v36
    %v531 = vmul.f32 %v469, %v36
    %v532 = vmul.f32 %v473, %v36
    %v533 = vmul.f32 %v477, %v36
    %v534 = vmul.f32 %v481, %v36
    %v535 = vmul.f32 %v485, %v36
    %v536 = vmul.f32 %v489, %v36
    %v537 = vmul.f32 %v493, %v36
    %v538 = vmul.f32 %v497, %v36
    %v539 = vmul.f32 %v501, %v36
    %v540 = vmul.f32 %v505, %v36
    %v541 = vmul.f32 %v509, %v36
    %v558 = vcombine.low %v526, %v527
    %v559 = vcombine.low %v528, %v529
    %v560 = vcombine.low %v530, %v531
    %v561 = vcombine.low %v532, %v533
    %v562 = vcombine.low %v534, %v535
    %v563 = vcombine.low %v536, %v537
    %v564 = vcombine.low %v538, %v539
    %v565 = vcombine.low %v540, %v541
    %v574 = vpack.c.bf16 %v559, %v558
    %v575 = vpack.c.bf16 %v561, %v560
    %v576 = vpack.c.bf16 %v563, %v562
    %v577 = vpack.c.bf16 %v565, %v564
    %v578 = vpack.c.bf16 %v278, %v278
    %v579 = vpack.c.bf16 %v281, %v281
    %v580 = vpack.c.bf16 %v340, %v340
    %v581 = vpack.c.bf16 %v343, %v343
    %v583 = vsel %vm102, %v574, 0
    %v586 = vsel %vm102, %v575, 0
    %v589 = vsel %vm102, %v578, 0
    %591 = vmatprep.subr.bf16.mxu0 0
    %592 = vmatpush1.bf16.xpose.msra.mxu0 %v589
    %593 = vmatprep.subr.bf16.mxu0 0
    %594 = vmatpush1.bf16.xpose.msra.mxu0 0
    %595 = vmatprep.subr.bf16.mxu0 0
    %596 = vmatpush1.bf16.xpose.msra.mxu0 0
    %597 = vmatprep.subr.bf16.mxu0 0
    %598 = vmatpush1.bf16.xpose.msra.mxu0 0
    %599 = vmatprep.subr.bf16.mxu0 0
    %600 = vmatpush1.bf16.xpose.msra.mxu0 0
    %601 = vmatprep.subr.bf16.mxu0 0
    %602 = vmatpush1.bf16.xpose.msra.mxu0 0
    %603 = vmatprep.subr.bf16.mxu0 0
    %604 = vmatpush1.bf16.xpose.msra.mxu0 0
    %605 = vmatprep.subr.bf16.mxu0 0
    %606 = vmatpush1.bf16.xpose.msra.mxu0 0
    %607 = vmatprep.subr.bf16.mxu0 0
    %608 = vmatpush1.bf16.xpose.msra.mxu0 0
    %609 = vmatprep.subr.bf16.mxu0 0
    %610 = vmatpush1.bf16.xpose.msra.mxu0 0
    %611 = vmatprep.subr.bf16.mxu0 0
    %612 = vmatpush1.bf16.xpose.msra.mxu0 0
    %613 = vmatprep.subr.bf16.mxu0 0
    %614 = vmatpush1.bf16.xpose.msra.mxu0 0
    %615 = vmatprep.subr.bf16.mxu0 0
    %616 = vmatpush1.bf16.xpose.msra.mxu0 0
    %617 = vmatprep.subr.bf16.mxu0 0
    %618 = vmatpush1.bf16.xpose.msra.mxu0 0
    %619 = vmatprep.subr.bf16.mxu0 0
    %620 = vmatpush1.bf16.xpose.msra.mxu0 0
    %621 = vmatprep.subr.bf16.mxu0 0
    %622 = vmatpush1.bf16.xpose.msra.mxu0 0
    %623 = vmatprep.mubr.bf16.mxu0 0
    %624 = vmatmul.mubr.bf16.gmra.mrb[0].mxu0 %v583
    %v625 = vpop.f32.mrb[0].mxu0
    %v626 = vadd.f32 0.0, %v625
    %v627 = vpop.f32.mrb[0].mxu0
    %v628 = vpop.f32.mrb[0].mxu0
    %v629 = vadd.f32 0.0, %v628
    %v630 = vpop.f32.mrb[0].mxu0
    %631 = vmatprep.mubr.bf16.mxu0 0
    %632 = vmatmul.mubr.bf16.gmra.mrb[0].mxu0 %v586
    %v633 = vpop.f32.mrb[0].mxu0
    %v634 = vadd.f32 0.0, %v633
    %v635 = vpop.f32.mrb[0].mxu0
    %v636 = vpop.f32.mrb[0].mxu0
    %v637 = vadd.f32 0.0, %v636
    %v638 = vpop.f32.mrb[0].mxu0
    %639 = vdwg.mxu0
    %v641 = vsel %vm102, %v576, 0
    %v644 = vsel %vm102, %v577, 0
    %v647 = vsel %vm102, %v579, 0
    %649 = vmatprep.subr.bf16.mxu0 0
    %650 = vmatpush1.bf16.xpose.msra.mxu0 %v647
    %651 = vmatprep.subr.bf16.mxu0 0
    %652 = vmatpush1.bf16.xpose.msra.mxu0 0
    %653 = vmatprep.subr.bf16.mxu0 0
    %654 = vmatpush1.bf16.xpose.msra.mxu0 0
    %655 = vmatprep.subr.bf16.mxu0 0
    %656 = vmatpush1.bf16.xpose.msra.mxu0 0
    %657 = vmatprep.subr.bf16.mxu0 0
    %658 = vmatpush1.bf16.xpose.msra.mxu0 0
    %659 = vmatprep.subr.bf16.mxu0 0
    %660 = vmatpush1.bf16.xpose.msra.mxu0 0
    %661 = vmatprep.subr.bf16.mxu0 0
    %662 = vmatpush1.bf16.xpose.msra.mxu0 0
    %663 = vmatprep.subr.bf16.mxu0 0
    %664 = vmatpush1.bf16.xpose.msra.mxu0 0
    %665 = vmatprep.subr.bf16.mxu0 0
    %666 = vmatpush1.bf16.xpose.msra.mxu0 0
    %667 = vmatprep.subr.bf16.mxu0 0
    %668 = vmatpush1.bf16.xpose.msra.mxu0 0
    %669 = vmatprep.subr.bf16.mxu0 0
    %670 = vmatpush1.bf16.xpose.msra.mxu0 0
    %671 = vmatprep.subr.bf16.mxu0 0
    %672 = vmatpush1.bf16.xpose.msra.mxu0 0
    %673 = vmatprep.subr.bf16.mxu0 0
    %674 = vmatpush1.bf16.xpose.msra.mxu0 0
    %675 = vmatprep.subr.bf16.mxu0 0
    %676 = vmatpush1.bf16.xpose.msra.mxu0 0
    %677 = vmatprep.subr.bf16.mxu0 0
    %678 = vmatpush1.bf16.xpose.msra.mxu0 0
    %679 = vmatprep.subr.bf16.mxu0 0
    %680 = vmatpush1.bf16.xpose.msra.mxu0 0
    %681 = vmatprep.mubr.bf16.mxu0 0
    %682 = vmatmul.mubr.bf16.gmra.mrb[0].mxu0 %v641
    %v683 = vpop.f32.mrb[0].mxu0
    %v684 = vadd.f32 0.0, %v683
    %v685 = vpop.f32.mrb[0].mxu0
    %v686 = vpop.f32.mrb[0].mxu0
    %v687 = vadd.f32 0.0, %v686
    %v688 = vpop.f32.mrb[0].mxu0
    %689 = vmatprep.mubr.bf16.mxu0 0
    %690 = vmatmul.mubr.bf16.gmra.mrb[0].mxu0 %v644
    %v691 = vpop.f32.mrb[0].mxu0
    %v692 = vadd.f32 0.0, %v691
    %v693 = vpop.f32.mrb[0].mxu0
    %v694 = vpop.f32.mrb[0].mxu0
    %v695 = vadd.f32 0.0, %v694
    %v696 = vpop.f32.mrb[0].mxu0
    %697 = vdwg.mxu0
    %v706 = vcombine.high %v626, %v626
    %v707 = vcombine.high %v629, %v629
    %v708 = vcombine.high %v634, %v634
    %v709 = vcombine.high %v637, %v637
    %v710 = vcombine.high %v684, %v684
    %v711 = vcombine.high %v687, %v687
    %v712 = vcombine.high %v692, %v692
    %v713 = vcombine.high %v695, %v695
    %v722 = vmul.f32 %v626, 0.35355338
    %v723 = vmul.f32 %v706, 0.35355338
    %v724 = vmul.f32 %v629, 0.35355338
    %v725 = vmul.f32 %v707, 0.35355338
    %v726 = vmul.f32 %v634, 0.35355338
    %v727 = vmul.f32 %v708, 0.35355338
    %v728 = vmul.f32 %v637, 0.35355338
    %v729 = vmul.f32 %v709, 0.35355338
    %v730 = vmul.f32 %v684, 0.35355338
    %v731 = vmul.f32 %v710, 0.35355338
    %v732 = vmul.f32 %v687, 0.35355338
    %v733 = vmul.f32 %v711, 0.35355338
    %v734 = vmul.f32 %v692, 0.35355338
    %v735 = vmul.f32 %v712, 0.35355338
    %v736 = vmul.f32 %v695, 0.35355338
    %v737 = vmul.f32 %v713, 0.35355338
    %v738 = vlaneseq
    %v739 = vshrl.u32 %v738, 7
    %v740 = vsub.s32 0, %v739
    %v741 = vrot.slane %v64, %v740
    %v742 = vlaneseq
    %v743 = vshrl.u32 %v742, 7
    %v744 = vsub.s32 0, %v743
    %v745 = vrot.slane %v78, %v744
    %v746 = vlaneseq
    %v747 = vshrl.u32 %v746, 7
    %v748 = vsub.s32 0, %v747
    %v749 = vrot.slane %v86, %v748
    %v750 = vlaneseq
    %v751 = vshrl.u32 %v750, 7
    %v752 = vsub.s32 0, %v751
    %v753 = vrot.slane %v88, %v752
    %v754 = vlaneseq
    %v755 = vshrl.u32 %v754, 7
    %v756 = vsub.s32 0, %v755
    %v757 = vrot.slane %v71, %v756
    %v758 = vlaneseq
    %v759 = vshrl.u32 %v758, 7
    %v760 = vsub.s32 0, %v759
    %v761 = vrot.slane %v85, %v760
    %v762 = vlaneseq
    %v763 = vshrl.u32 %v762, 7
    %v764 = vsub.s32 0, %v763
    %v765 = vrot.slane %v87, %v764
    %v766 = vlaneseq
    %v767 = vshrl.u32 %v766, 7
    %v768 = vsub.s32 0, %v767
    %v769 = vrot.slane %v89, %v768
    %v778 = vadd.f32 %v722, %v741
    %v779 = vadd.f32 %v723, %v745
    %v780 = vadd.f32 %v724, %v749
    %v781 = vadd.f32 %v725, %v753
    %v782 = vadd.f32 %v726, %v757
    %v783 = vadd.f32 %v727, %v761
    %v784 = vadd.f32 %v728, %v765
    %v785 = vadd.f32 %v729, %v769
    %v786 = vadd.f32 %v730, %v741
    %v787 = vadd.f32 %v731, %v745
    %v788 = vadd.f32 %v732, %v749
    %v789 = vadd.f32 %v733, %v753
    %v790 = vadd.f32 %v734, %v757
    %v791 = vadd.f32 %v735, %v761
    %v792 = vadd.f32 %v736, %v765
    %v793 = vadd.f32 %v737, %v769
    %vm794 = vcmask 60416
    %v795 = vsel %vm794, %v778, -inf
    %796 = vmax.xlane.f32.xlu0 %v795
    %v797 = vpop.xlane.xlu0 %796
    %v798 = vsel %vm794, %v779, -inf
    %799 = vmax.xlane.f32.xlu0 %v798
    %v800 = vpop.xlane.xlu0 %799
    %v801 = vsel %vm794, %v780, -inf
    %802 = vmax.xlane.f32.xlu0 %v801
    %v803 = vpop.xlane.xlu0 %802
    %v804 = vsel %vm794, %v781, -inf
    %805 = vmax.xlane.f32.xlu0 %v804
    %v806 = vpop.xlane.xlu0 %805
    %v807 = vsel %vm794, %v782, -inf
    %808 = vmax.xlane.f32.xlu0 %v807
    %v809 = vpop.xlane.xlu0 %808
    %v810 = vsel %vm794, %v783, -inf
    %811 = vmax.xlane.f32.xlu0 %v810
    %v812 = vpop.xlane.xlu0 %811
    %v813 = vsel %vm794, %v784, -inf
    %814 = vmax.xlane.f32.xlu0 %v813
    %v815 = vpop.xlane.xlu0 %814
    %v816 = vsel %vm794, %v785, -inf
    %817 = vmax.xlane.f32.xlu0 %v816
    %v818 = vpop.xlane.xlu0 %817
    %v819 = vsel %vm794, %v786, -inf
    %820 = vmax.xlane.f32.xlu0 %v819
    %v821 = vpop.xlane.xlu0 %820
    %v822 = vsel %vm794, %v787, -inf
    %823 = vmax.xlane.f32.xlu0 %v822
    %v824 = vpop.xlane.xlu0 %823
    %v825 = vsel %vm794, %v788, -inf
    %826 = vmax.xlane.f32.xlu0 %v825
    %v827 = vpop.xlane.xlu0 %826
    %v828 = vsel %vm794, %v789, -inf
    %829 = vmax.xlane.f32.xlu0 %v828
    %v830 = vpop.xlane.xlu0 %829
    %v831 = vsel %vm794, %v790, -inf
    %832 = vmax.xlane.f32.xlu0 %v831
    %v833 = vpop.xlane.xlu0 %832
    %v834 = vsel %vm794, %v791, -inf
    %835 = vmax.xlane.f32.xlu0 %v834
    %v836 = vpop.xlane.xlu0 %835
    %v837 = vsel %vm794, %v792, -inf
    %838 = vmax.xlane.f32.xlu0 %v837
    %v839 = vpop.xlane.xlu0 %838
    %v840 = vsel %vm794, %v793, -inf
    %841 = vmax.xlane.f32.xlu0 %v840
    %v842 = vpop.xlane.xlu0 %841
    %v843 = vsub.f32 %v778, %v797
    %v844 = vsub.f32 %v779, %v800
    %v845 = vsub.f32 %v780, %v803
    %v846 = vsub.f32 %v781, %v806
    %v847 = vsub.f32 %v782, %v809
    %v848 = vsub.f32 %v783, %v812
    %v849 = vsub.f32 %v784, %v815
    %v850 = vsub.f32 %v785, %v818
    %v851 = vsub.f32 %v786, %v821
    %v852 = vsub.f32 %v787, %v824
    %v853 = vsub.f32 %v788, %v827
    %v854 = vsub.f32 %v789, %v830
    %v855 = vsub.f32 %v790, %v833
    %v856 = vsub.f32 %v791, %v836
    %v857 = vsub.f32 %v792, %v839
    %v858 = vsub.f32 %v793, %v842
    %v859 = vmul.f32 %v843, 1.442695
    %v860 = vpow.pop %v859
    %v861 = vmul.f32 %v844, 1.442695
    %v862 = vpow.pop %v861
    %v863 = vmul.f32 %v845, 1.442695
    %v864 = vpow.pop %v863
    %v865 = vmul.f32 %v846, 1.442695
    %v866 = vpow.pop %v865
    %v867 = vmul.f32 %v847, 1.442695
    %v868 = vpow.pop %v867
    %v869 = vmul.f32 %v848, 1.442695
    %v870 = vpow.pop %v869
    %v871 = vmul.f32 %v849, 1.442695
    %v872 = vpow.pop %v871
    %v873 = vmul.f32 %v850, 1.442695
    %v874 = vpow.pop %v873
    %v875 = vmul.f32 %v851, 1.442695
    %v876 = vpow.pop %v875
    %v877 = vmul.f32 %v852, 1.442695
    %v878 = vpow.pop %v877
    %v879 = vmul.f32 %v853, 1.442695
    %v880 = vpow.pop %v879
    %v881 = vmul.f32 %v854, 1.442695
    %v882 = vpow.pop %v881
    %v883 = vmul.f32 %v855, 1.442695
    %v884 = vpow.pop %v883
    %v885 = vmul.f32 %v856, 1.442695
    %v886 = vpow.pop %v885
    %v887 = vmul.f32 %v857, 1.442695
    %v888 = vpow.pop %v887
    %v889 = vmul.f32 %v858, 1.442695
    %v890 = vpow.pop %v889
    %v891 = vsel %vm794, %v860, 0.0
    %892 = vadd.xlane.f32.xlu0 %v891
    %v893 = vpop.xlane.xlu0 %892
    %v894 = vsel %vm794, %v862, 0.0
    %895 = vadd.xlane.f32.xlu0 %v894
    %v896 = vpop.xlane.xlu0 %895
    %v897 = vsel %vm794, %v864, 0.0
    %898 = vadd.xlane.f32.xlu0 %v897
    %v899 = vpop.xlane.xlu0 %898
    %v900 = vsel %vm794, %v866, 0.0
    %901 = vadd.xlane.f32.xlu0 %v900
    %v902 = vpop.xlane.xlu0 %901
    %v903 = vsel %vm794, %v868, 0.0
    %904 = vadd.xlane.f32.xlu0 %v903
    %v905 = vpop.xlane.xlu0 %904
    %v906 = vsel %vm794, %v870, 0.0
    %907 = vadd.xlane.f32.xlu0 %v906
    %v908 = vpop.xlane.xlu0 %907
    %v909 = vsel %vm794, %v872, 0.0
    %910 = vadd.xlane.f32.xlu0 %v909
    %v911 = vpop.xlane.xlu0 %910
    %v912 = vsel %vm794, %v874, 0.0
    %913 = vadd.xlane.f32.xlu0 %v912
    %v914 = vpop.xlane.xlu0 %913
    %v915 = vsel %vm794, %v876, 0.0
    %916 = vadd.xlane.f32.xlu0 %v915
    %v917 = vpop.xlane.xlu0 %916
    %v918 = vsel %vm794, %v878, 0.0
    %919 = vadd.xlane.f32.xlu0 %v918
    %v920 = vpop.xlane.xlu0 %919
    %v921 = vsel %vm794, %v880, 0.0
    %922 = vadd.xlane.f32.xlu0 %v921
    %v923 = vpop.xlane.xlu0 %922
    %v924 = vsel %vm794, %v882, 0.0
    %925 = vadd.xlane.f32.xlu0 %v924
    %v926 = vpop.xlane.xlu0 %925
    %v927 = vsel %vm794, %v884, 0.0
    %928 = vadd.xlane.f32.xlu0 %v927
    %v929 = vpop.xlane.xlu0 %928
    %v930 = vsel %vm794, %v886, 0.0
    %931 = vadd.xlane.f32.xlu0 %v930
    %v932 = vpop.xlane.xlu0 %931
    %v933 = vsel %vm794, %v888, 0.0
    %934 = vadd.xlane.f32.xlu0 %v933
    %v935 = vpop.xlane.xlu0 %934
    %v936 = vsel %vm794, %v890, 0.0
    %937 = vadd.xlane.f32.xlu0 %v936
    %v938 = vpop.xlane.xlu0 %937
    %v939 = vrcp.pop %v893
    %v940 = vrcp.pop %v896
    %v941 = vrcp.pop %v899
    %v942 = vrcp.pop %v902
    %v943 = vrcp.pop %v905
    %v944 = vrcp.pop %v908
    %v945 = vrcp.pop %v911
    %v946 = vrcp.pop %v914
    %v947 = vrcp.pop %v917
    %v948 = vrcp.pop %v920
    %v949 = vrcp.pop %v923
    %v950 = vrcp.pop %v926
    %v951 = vrcp.pop %v929
    %v952 = vrcp.pop %v932
    %v953 = vrcp.pop %v935
    %v954 = vrcp.pop %v938
    %v955 = vmul.f32 %v860, %v939
    %v956 = vmul.f32 %v862, %v940
    %v957 = vmul.f32 %v864, %v941
    %v958 = vmul.f32 %v866, %v942
    %v959 = vmul.f32 %v868, %v943
    %v960 = vmul.f32 %v870, %v944
    %v961 = vmul.f32 %v872, %v945
    %v962 = vmul.f32 %v874, %v946
    %v963 = vmul.f32 %v876, %v947
    %v964 = vmul.f32 %v878, %v948
    %v965 = vmul.f32 %v880, %v949
    %v966 = vmul.f32 %v882, %v950
    %v967 = vmul.f32 %v884, %v951
    %v968 = vmul.f32 %v886, %v952
    %v969 = vmul.f32 %v888, %v953
    %v970 = vmul.f32 %v890, %v954
    %v987 = vcombine.low %v955, %v956
    %v988 = vcombine.low %v957, %v958
    %v989 = vcombine.low %v959, %v960
    %v990 = vcombine.low %v961, %v962
    %v991 = vcombine.low %v963, %v964
    %v992 = vcombine.low %v965, %v966
    %v993 = vcombine.low %v967, %v968
    %v994 = vcombine.low %v969, %v970
    %v1003 = vpack.c.bf16 %v988, %v987
    %v1004 = vpack.c.bf16 %v990, %v989
    %v1005 = vpack.c.bf16 %v992, %v991
    %v1006 = vpack.c.bf16 %v994, %v993
    %vm1007 = vcmask 64512
    %v1009 = vsel %vm1007, %v1003, 0
    %v1012 = vsel %vm1007, %v1004, 0
    %vm1014 = vcmask 1043456
    %v1016 = vsel %vm1014, %v580, 0
    %1018 = vmatprep.subr.bf16.mxu0 0
    %1019 = vmatpush1.bf16.msra.mxu0 %v1016
    %1020 = vmatprep.subr.bf16.mxu0 0
    %1021 = vmatpush1.bf16.msra.mxu0 0
    %1022 = vmatprep.subr.bf16.mxu0 0
    %1023 = vmatpush1.bf16.msra.mxu0 0
    %1024 = vmatprep.subr.bf16.mxu0 0
    %1025 = vmatpush1.bf16.msra.mxu0 0
    %1026 = vmatprep.subr.bf16.mxu0 0
    %1027 = vmatpush1.bf16.msra.mxu0 0
    %1028 = vmatprep.subr.bf16.mxu0 0
    %1029 = vmatpush1.bf16.msra.mxu0 0
    %1030 = vmatprep.subr.bf16.mxu0 0
    %1031 = vmatpush1.bf16.msra.mxu0 0
    %1032 = vmatprep.subr.bf16.mxu0 0
    %1033 = vmatpush1.bf16.msra.mxu0 0
    %1034 = vmatprep.subr.bf16.mxu0 0
    %1035 = vmatpush1.bf16.msra.mxu0 0
    %1036 = vmatprep.subr.bf16.mxu0 0
    %1037 = vmatpush1.bf16.msra.mxu0 0
    %1038 = vmatprep.subr.bf16.mxu0 0
    %1039 = vmatpush1.bf16.msra.mxu0 0
    %1040 = vmatprep.subr.bf16.mxu0 0
    %1041 = vmatpush1.bf16.msra.mxu0 0
    %1042 = vmatprep.subr.bf16.mxu0 0
    %1043 = vmatpush1.bf16.msra.mxu0 0
    %1044 = vmatprep.subr.bf16.mxu0 0
    %1045 = vmatpush1.bf16.msra.mxu0 0
    %1046 = vmatprep.subr.bf16.mxu0 0
    %1047 = vmatpush1.bf16.msra.mxu0 0
    %1048 = vmatprep.subr.bf16.mxu0 0
    %1049 = vmatpush1.bf16.msra.mxu0 0
    %1050 = vmatprep.mubr.bf16.mxu0 0
    %1051 = vmatmul.mubr.bf16.gmra.mrb[0].mxu0 %v1009
    %v1052 = vpop.f32.mrb[0].mxu0
    %v1053 = vadd.f32 0.0, %v1052
    %v1054 = vpop.f32.mrb[0].mxu0
    %v1055 = vpop.f32.mrb[0].mxu0
    %v1056 = vadd.f32 0.0, %v1055
    %v1057 = vpop.f32.mrb[0].mxu0
    %1058 = vmatprep.mubr.bf16.mxu0 0
    %1059 = vmatmul.mubr.bf16.gmra.mrb[0].mxu0 %v1012
    %v1060 = vpop.f32.mrb[0].mxu0
    %v1061 = vadd.f32 0.0, %v1060
    %v1062 = vpop.f32.mrb[0].mxu0
    %v1063 = vpop.f32.mrb[0].mxu0
    %v1064 = vadd.f32 0.0, %v1063
    %v1065 = vpop.f32.mrb[0].mxu0
    %1066 = vdwg.mxu0
    %v1068 = vsel %vm1007, %v1005, 0
    %v1071 = vsel %vm1007, %v1006, 0
    %v1074 = vsel %vm1014, %v581, 0
    %1076 = vmatprep.subr.bf16.mxu0 0
    %1077 = vmatpush1.bf16.msra.mxu0 %v1074
    %1078 = vmatprep.subr.bf16.mxu0 0
    %1079 = vmatpush1.bf16.msra.mxu0 0
    %1080 = vmatprep.subr.bf16.mxu0 0
    %1081 = vmatpush1.bf16.msra.mxu0 0
    %1082 = vmatprep.subr.bf16.mxu0 0
    %1083 = vmatpush1.bf16.msra.mxu0 0
    %1084 = vmatprep.subr.bf16.mxu0 0
    %1085 = vmatpush1.bf16.msra.mxu0 0
    %1086 = vmatprep.subr.bf16.mxu0 0
    %1087 = vmatpush1.bf16.msra.mxu0 0
    %1088 = vmatprep.subr.bf16.mxu0 0
    %1089 = vmatpush1.bf16.msra.mxu0 0
    %1090 = vmatprep.subr.bf16.mxu0 0
    %1091 = vmatpush1.bf16.msra.mxu0 0
    %1092 = vmatprep.subr.bf16.mxu0 0
    %1093 = vmatpush1.bf16.msra.mxu0 0
    %1094 = vmatprep.subr.bf16.mxu0 0
    %1095 = vmatpush1.bf16.msra.mxu0 0
    %1096 = vmatprep.subr.bf16.mxu0 0
    %1097 = vmatpush1.bf16.msra.mxu0 0
    %1098 = vmatprep.subr.bf16.mxu0 0
    %1099 = vmatpush1.bf16.msra.mxu0 0
    %1100 = vmatprep.subr.bf16.mxu0 0
    %1101 = vmatpush1.bf16.msra.mxu0 0
    %1102 = vmatprep.subr.bf16.mxu0 0
    %1103 = vmatpush1.bf16.msra.mxu0 0
    %1104 = vmatprep.subr.bf16.mxu0 0
    %1105 = vmatpush1.bf16.msra.mxu0 0
    %1106 = vmatprep.subr.bf16.mxu0 0
    %1107 = vmatpush1.bf16.msra.mxu0 0
    %1108 = vmatprep.mubr.bf16.mxu0 0
    %1109 = vmatmul.mubr.bf16.gmra.mrb[0].mxu0 %v1068
    %v1110 = vpop.f32.mrb[0].mxu0
    %v1111 = vadd.f32 0.0, %v1110
    %v1112 = vpop.f32.mrb[0].mxu0
    %v1113 = vpop.f32.mrb[0].mxu0
    %v1114 = vadd.f32 0.0, %v1113
    %v1115 = vpop.f32.mrb[0].mxu0
    %1116 = vmatprep.mubr.bf16.mxu0 0
    %1117 = vmatmul.mubr.bf16.gmra.mrb[0].mxu0 %v1071
    %v1118 = vpop.f32.mrb[0].mxu0
    %v1119 = vadd.f32 0.0, %v1118
    %v1120 = vpop.f32.mrb[0].mxu0
    %v1121 = vpop.f32.mrb[0].mxu0
    %v1122 = vadd.f32 0.0, %v1121
    %v1123 = vpop.f32.mrb[0].mxu0
    %1124 = vdwg.mxu0
    %v1133 = vcombine.high %v1053, %v1053
    %v1134 = vcombine.high %v1056, %v1056
    %v1135 = vcombine.high %v1061, %v1061
    %v1136 = vcombine.high %v1064, %v1064
    %v1137 = vcombine.high %v1111, %v1111
    %v1138 = vcombine.high %v1114, %v1114
    %v1139 = vcombine.high %v1119, %v1119
    %v1140 = vcombine.high %v1122, %v1122
    %v1149 = vmul.f32 %v1053, %v36
    %v1150 = vmul.f32 %v1133, %v36
    %v1151 = vmul.f32 %v1056, %v36
    %v1152 = vmul.f32 %v1134, %v36
    %v1153 = vmul.f32 %v1061, %v36
    %v1154 = vmul.f32 %v1135, %v36
    %v1155 = vmul.f32 %v1064, %v36
    %v1156 = vmul.f32 %v1136, %v36
    %v1157 = vmul.f32 %v1111, %v36
    %v1158 = vmul.f32 %v1137, %v36
    %v1159 = vmul.f32 %v1114, %v36
    %v1160 = vmul.f32 %v1138, %v36
    %v1161 = vmul.f32 %v1119, %v36
    %v1162 = vmul.f32 %v1139, %v36
    %v1163 = vmul.f32 %v1122, %v36
    %v1164 = vmul.f32 %v1140, %v36
    %vm1165 = vcmask 257024
    %v1166 = vsel %vm1165, %v1149, 0.0
    %v1167 = vrot.slane %v1166, 4
    %v1168 = vadd.f32 %v1166, %v1167
    %v1169 = vrot.slane %v1168, 2
    %v1170 = vadd.f32 %v1168, %v1169
    %v1171 = vrot.slane %v1170, 1
    %v1172 = vadd.f32 %v1170, %v1171
    %v1173 = vsel %vm1165, %v1150, 0.0
    %v1174 = vrot.slane %v1173, 4
    %v1175 = vadd.f32 %v1173, %v1174
    %v1176 = vrot.slane %v1175, 2
    %v1177 = vadd.f32 %v1175, %v1176
    %v1178 = vrot.slane %v1177, 1
    %v1179 = vadd.f32 %v1177, %v1178
    %v1180 = vsel %vm1165, %v1151, 0.0
    %v1181 = vrot.slane %v1180, 4
    %v1182 = vadd.f32 %v1180, %v1181
    %v1183 = vrot.slane %v1182, 2
    %v1184 = vadd.f32 %v1182, %v1183
    %v1185 = vrot.slane %v1184, 1
    %v1186 = vadd.f32 %v1184, %v1185
    %v1187 = vsel %vm1165, %v1152, 0.0
    %v1188 = vrot.slane %v1187, 4
    %v1189 = vadd.f32 %v1187, %v1188
    %v1190 = vrot.slane %v1189, 2
    %v1191 = vadd.f32 %v1189, %v1190
    %v1192 = vrot.slane %v1191, 1
    %v1193 = vadd.f32 %v1191, %v1192
    %v1194 = vsel %vm1165, %v1153, 0.0
    %v1195 = vrot.slane %v1194, 4
    %v1196 = vadd.f32 %v1194, %v1195
    %v1197 = vrot.slane %v1196, 2
    %v1198 = vadd.f32 %v1196, %v1197
    %v1199 = vrot.slane %v1198, 1
    %v1200 = vadd.f32 %v1198, %v1199
    %v1201 = vsel %vm1165, %v1154, 0.0
    %v1202 = vrot.slane %v1201, 4
    %v1203 = vadd.f32 %v1201, %v1202
    %v1204 = vrot.slane %v1203, 2
    %v1205 = vadd.f32 %v1203, %v1204
    %v1206 = vrot.slane %v1205, 1
    %v1207 = vadd.f32 %v1205, %v1206
    %v1208 = vsel %vm1165, %v1155, 0.0
    %v1209 = vrot.slane %v1208, 4
    %v1210 = vadd.f32 %v1208, %v1209
    %v1211 = vrot.slane %v1210, 2
    %v1212 = vadd.f32 %v1210, %v1211
    %v1213 = vrot.slane %v1212, 1
    %v1214 = vadd.f32 %v1212, %v1213
    %v1215 = vsel %vm1165, %v1156, 0.0
    %v1216 = vrot.slane %v1215, 4
    %v1217 = vadd.f32 %v1215, %v1216
    %v1218 = vrot.slane %v1217, 2
    %v1219 = vadd.f32 %v1217, %v1218
    %v1220 = vrot.slane %v1219, 1
    %v1221 = vadd.f32 %v1219, %v1220
    %v1222 = vsel %vm1165, %v1157, 0.0
    %v1223 = vrot.slane %v1222, 4
    %v1224 = vadd.f32 %v1222, %v1223
    %v1225 = vrot.slane %v1224, 2
    %v1226 = vadd.f32 %v1224, %v1225
    %v1227 = vrot.slane %v1226, 1
    %v1228 = vadd.f32 %v1226, %v1227
    %v1229 = vsel %vm1165, %v1158, 0.0
    %v1230 = vrot.slane %v1229, 4
    %v1231 = vadd.f32 %v1229, %v1230
    %v1232 = vrot.slane %v1231, 2
    %v1233 = vadd.f32 %v1231, %v1232
    %v1234 = vrot.slane %v1233, 1
    %v1235 = vadd.f32 %v1233, %v1234
    %v1236 = vsel %vm1165, %v1159, 0.0
    %v1237 = vrot.slane %v1236, 4
    %v1238 = vadd.f32 %v1236, %v1237
    %v1239 = vrot.slane %v1238, 2
    %v1240 = vadd.f32 %v1238, %v1239
    %v1241 = vrot.slane %v1240, 1
    %v1242 = vadd.f32 %v1240, %v1241
    %v1243 = vsel %vm1165, %v1160, 0.0
    %v1244 = vrot.slane %v1243, 4
    %v1245 = vadd.f32 %v1243, %v1244
    %v1246 = vrot.slane %v1245, 2
    %v1247 = vadd.f32 %v1245, %v1246
    %v1248 = vrot.slane %v1247, 1
    %v1249 = vadd.f32 %v1247, %v1248
    %v1250 = vsel %vm1165, %v1161, 0.0
    %v1251 = vrot.slane %v1250, 4
    %v1252 = vadd.f32 %v1250, %v1251
    %v1253 = vrot.slane %v1252, 2
    %v1254 = vadd.f32 %v1252, %v1253
    %v1255 = vrot.slane %v1254, 1
    %v1256 = vadd.f32 %v1254, %v1255
    %v1257 = vsel %vm1165, %v1162, 0.0
    %v1258 = vrot.slane %v1257, 4
    %v1259 = vadd.f32 %v1257, %v1258
    %v1260 = vrot.slane %v1259, 2
    %v1261 = vadd.f32 %v1259, %v1260
    %v1262 = vrot.slane %v1261, 1
    %v1263 = vadd.f32 %v1261, %v1262
    %v1264 = vsel %vm1165, %v1163, 0.0
    %v1265 = vrot.slane %v1264, 4
    %v1266 = vadd.f32 %v1264, %v1265
    %v1267 = vrot.slane %v1266, 2
    %v1268 = vadd.f32 %v1266, %v1267
    %v1269 = vrot.slane %v1268, 1
    %v1270 = vadd.f32 %v1268, %v1269
    %v1271 = vsel %vm1165, %v1164, 0.0
    %v1272 = vrot.slane %v1271, 4
    %v1273 = vadd.f32 %v1271, %v1272
    %v1274 = vrot.slane %v1273, 2
    %v1275 = vadd.f32 %v1273, %v1274
    %v1276 = vrot.slane %v1275, 1
    %v1277 = vadd.f32 %v1275, %v1276
    %v1278 = vpack.c.bf16 %v1172, %v1172
    %v1279 = vpack.c.bf16 %v1179, %v1179
    %v1280 = vpack.c.bf16 %v1186, %v1186
    %v1281 = vpack.c.bf16 %v1193, %v1193
    %v1282 = vpack.c.bf16 %v1200, %v1200
    %v1283 = vpack.c.bf16 %v1207, %v1207
    %v1284 = vpack.c.bf16 %v1214, %v1214
    %v1285 = vpack.c.bf16 %v1221, %v1221
    %v1286 = vpack.c.bf16 %v1228, %v1228
    %v1287 = vpack.c.bf16 %v1235, %v1235
    %v1288 = vpack.c.bf16 %v1242, %v1242
    %v1289 = vpack.c.bf16 %v1249, %v1249
    %v1290 = vpack.c.bf16 %v1256, %v1256
    %v1291 = vpack.c.bf16 %v1263, %v1263
    %v1292 = vpack.c.bf16 %v1270, %v1270
    %v1293 = vpack.c.bf16 %v1277, %v1277
    %v1294 = vld [vmem:[%s4 + $0x30] sm:$0xf]
    %v1295 = vld [vmem:[%s4 + $0x34] sm:$0xf]
    %v1296 = vld [vmem:[%s4 + $0x38] sm:$0xf]
    %v1297 = vld [vmem:[%s4 + $0x3c] sm:$0xf]
    %v1298 = vld [vmem:[%s5 + $0x9] sm:$0x1]
    %v1299 = vlaneseq
    %v1300 = vshrl.u32 %v1299, 7
    %v1301 = vsub.s32 0, %v1300
    %v1302 = vrot.slane %v1298, %v1301
    %v1319 = vunpack.c.l.b16 %v1278
    %v1320 = vunpack.c.l.b16 %v1279
    %v1321 = vunpack.c.l.b16 %v1280
    %v1322 = vunpack.c.l.b16 %v1281
    %v1323 = vunpack.c.l.b16 %v1282
    %v1324 = vunpack.c.l.b16 %v1283
    %v1325 = vunpack.c.l.b16 %v1284
    %v1326 = vunpack.c.l.b16 %v1285
    %v1327 = vunpack.c.l.b16 %v1286
    %v1328 = vunpack.c.l.b16 %v1287
    %v1329 = vunpack.c.l.b16 %v1288
    %v1330 = vunpack.c.l.b16 %v1289
    %v1331 = vunpack.c.l.b16 %v1290
    %v1332 = vunpack.c.l.b16 %v1291
    %v1333 = vunpack.c.l.b16 %v1292
    %v1334 = vunpack.c.l.b16 %v1293
    %vm1335 = vcmask 1041409
    %v1336 = vsel %vm1335, %v1320, %v1319
    %vm1337 = vcmask 1042434
    %v1338 = vsel %vm1337, %v1321, %v1336
    %vm1339 = vcmask 1043459
    %v1340 = vsel %vm1339, %v1322, %v1338
    %vm1341 = vcmask 1044484
    %v1342 = vsel %vm1341, %v1323, %v1340
    %vm1343 = vcmask 1045509
    %v1344 = vsel %vm1343, %v1324, %v1342
    %vm1345 = vcmask 1046534
    %v1346 = vsel %vm1345, %v1325, %v1344
    %vm1347 = vcmask 1047559
    %v1348 = vsel %vm1347, %v1326, %v1346
    %v1349 = vsel %vm1335, %v1328, %v1327
    %v1350 = vsel %vm1337, %v1329, %v1349
    %v1351 = vsel %vm1339, %v1330, %v1350
    %v1352 = vsel %vm1341, %v1331, %v1351
    %v1353 = vsel %vm1343, %v1332, %v1352
    %v1354 = vsel %vm1345, %v1333, %v1353
    %v1355 = vsel %vm1347, %v1334, %v1354
    %v1356 = vpack.c.b16 %v1355, %v1348
    %v1361 = vunpack.c.l.b16 %v1294
    %v1362 = vunpack.c.l.b16 %v1295
    %v1363 = vunpack.c.l.b16 %v1296
    %v1364 = vunpack.c.l.b16 %v1297
    %v1365 = vpack.c.b16 %v1362, %v1361
    %v1366 = vpack.c.b16 %v1364, %v1363
    %v1370 = vsel %vm102, %v1356, 0
    %1372 = vmatprep.subr.bf16.mxu0 0
    %1373 = vmatpush1.bf16.msra.mxu0 %v1365
    %1374 = vmatprep.subr.bf16.mxu0 0
    %1375 = vmatpush1.bf16.msra.mxu0 %v1366
    %1376 = vmatprep.subr.bf16.mxu0 0
    %1377 = vmatpush1.bf16.msra.mxu0 0
    %1378 = vmatprep.subr.bf16.mxu0 0
    %1379 = vmatpush1.bf16.msra.mxu0 0
    %1380 = vmatprep.subr.bf16.mxu0 0
    %1381 = vmatpush1.bf16.msra.mxu0 0
    %1382 = vmatprep.subr.bf16.mxu0 0
    %1383 = vmatpush1.bf16.msra.mxu0 0
    %1384 = vmatprep.subr.bf16.mxu0 0
    %1385 = vmatpush1.bf16.msra.mxu0 0
    %1386 = vmatprep.subr.bf16.mxu0 0
    %1387 = vmatpush1.bf16.msra.mxu0 0
    %1388 = vmatprep.subr.bf16.mxu0 0
    %1389 = vmatpush1.bf16.msra.mxu0 0
    %1390 = vmatprep.subr.bf16.mxu0 0
    %1391 = vmatpush1.bf16.msra.mxu0 0
    %1392 = vmatprep.subr.bf16.mxu0 0
    %1393 = vmatpush1.bf16.msra.mxu0 0
    %1394 = vmatprep.subr.bf16.mxu0 0
    %1395 = vmatpush1.bf16.msra.mxu0 0
    %1396 = vmatprep.subr.bf16.mxu0 0
    %1397 = vmatpush1.bf16.msra.mxu0 0
    %1398 = vmatprep.subr.bf16.mxu0 0
    %1399 = vmatpush1.bf16.msra.mxu0 0
    %1400 = vmatprep.subr.bf16.mxu0 0
    %1401 = vmatpush1.bf16.msra.mxu0 0
    %1402 = vmatprep.subr.bf16.mxu0 0
    %1403 = vmatpush1.bf16.msra.mxu0 0
    %1404 = vmatprep.mubr.bf16.mxu0 0
    %1405 = vmatmul.mubr.bf16.gmra.mrb[0].mxu0 %v1370
    %v1406 = vpop.f32.mrb[0].mxu0
    %v1407 = vadd.f32 %v1302, %v1406
    %v1408 = vpop.f32.mrb[0].mxu0
    %v1409 = vpop.f32.mrb[0].mxu0
    %v1410 = vadd.f32 %v1302, %v1409
    %v1411 = vpop.f32.mrb[0].mxu0
    %1412 = vdwg.mxu0
    %v1413 = vadd.f32 %v96, %v1407
    %v1414 = vadd.f32 %v97, %v1410
    %v1415 = vld [vmem:[%s5 + $0x1] sm:$0x1]
    %v1416 = vld [vmem:[%s5 + $0x4] sm:$0x1]
    %v1417 = vsel %vm102, %v1413, 0.0
    %1418 = vadd.xlane.f32.xlu0 %v1417
    %v1419 = vpop.xlane.xlu0 %1418
    %v1420 = vsel %vm102, %v1414, 0.0
    %1421 = vadd.xlane.f32.xlu0 %v1420
    %v1422 = vpop.xlane.xlu0 %1421
    %v1423 = vmul.f32 %v1419, %v109
    %v1424 = vmul.f32 %v1422, %v109
    %v1425 = vsub.f32 %v1413, %v1423
    %v1426 = vsub.f32 %v1414, %v1424
    %v1427 = vmul.f32 %v1425, %v1425
    %v1428 = vmul.f32 %v1426, %v1426
    %v1429 = vsel %vm102, %v1427, 0.0
    %1430 = vadd.xlane.f32.xlu0 %v1429
    %v1431 = vpop.xlane.xlu0 %1430
    %v1432 = vsel %vm102, %v1428, 0.0
    %1433 = vadd.xlane.f32.xlu0 %v1432
    %v1434 = vpop.xlane.xlu0 %1433
    %v1435 = vmul.f32 %v1431, 0.032258064
    %v1436 = vmul.f32 %v1434, 0.032258064
    %v1437 = vrsqrt.pop %v1435
    %v1438 = vmul.f32 %v1435, %v1437
    %vm1439 = vcmp.eq.f32.partialorder %v1435, inf
    %v1440 = vsel %vm1439, %v1435, %v1438
    %vm1441 = vcmp.eq.f32.partialorder %v1435, 0.0
    %v1442 = vand.u32 %v1435, 2147483648
    %v1443 = vsel %vm1441, %v1442, %v1440
    %v1444 = vrsqrt.pop %v1436
    %v1445 = vmul.f32 %v1436, %v1444
    %vm1446 = vcmp.eq.f32.partialorder %v1436, inf
    %v1447 = vsel %vm1446, %v1436, %v1445
    %vm1448 = vcmp.eq.f32.partialorder %v1436, 0.0
    %v1449 = vand.u32 %v1436, 2147483648
    %v1450 = vsel %vm1448, %v1449, %v1447
    %v1451 = vadd.f32 %v1443, 1e-06
    %v1452 = vadd.f32 %v1450, 1e-06
    %v1453 = vrcp.pop %v1451
    %v1454 = vmul.f32 %v1425, %v1453
    %v1455 = vrcp.pop %v1452
    %v1456 = vmul.f32 %v1426, %v1455
    %v1457 = vlaneseq
    %v1458 = vshrl.u32 %v1457, 7
    %v1459 = vsub.s32 0, %v1458
    %v1460 = vrot.slane %v1415, %v1459
    %v1461 = vmul.f32 %v1460, %v1454
    %v1462 = vmul.f32 %v1460, %v1456
    %v1463 = vlaneseq
    %v1464 = vshrl.u32 %v1463, 7
    %v1465 = vsub.s32 0, %v1464
    %v1466 = vrot.slane %v1416, %v1465
    %v1467 = vadd.f32 %v1461, %v1466
    %v1468 = vadd.f32 %v1462, %v1466
    %v1469 = vpack.c.bf16 %v1468, %v1467
    %v1470 = vld [vmem:[%s4 + $0x40] sm:$0xf]
    %v1471 = vld [vmem:[%s4 + $0x44] sm:$0xf]
    %v1472 = vld [vmem:[%s4 + $0x48] sm:$0xf]
    %v1473 = vld [vmem:[%s4 + $0x4c] sm:$0xf]
    %v1474 = vld [vmem:[%s5 + $0xa] sm:$0x1]
    %v1475 = vlaneseq
    %v1476 = vshrl.u32 %v1475, 7
    %v1477 = vsub.s32 0, %v1476
    %v1478 = vrot.slane %v1474, %v1477
    %v1483 = vunpack.c.l.b16 %v1470
    %v1484 = vunpack.c.l.b16 %v1471
    %v1485 = vunpack.c.l.b16 %v1472
    %v1486 = vunpack.c.l.b16 %v1473
    %v1487 = vpack.c.b16 %v1484, %v1483
    %v1488 = vpack.c.b16 %v1486, %v1485
    %v1492 = vsel %vm102, %v1469, 0
    %1494 = vmatprep.subr.bf16.mxu0 0
    %1495 = vmatpush1.bf16.msra.mxu0 %v1487
    %1496 = vmatprep.subr.bf16.mxu0 0
    %1497 = vmatpush1.bf16.msra.mxu0 %v1488
    %1498 = vmatprep.subr.bf16.mxu0 0
    %1499 = vmatpush1.bf16.msra.mxu0 0
    %1500 = vmatprep.subr.bf16.mxu0 0
    %1501 = vmatpush1.bf16.msra.mxu0 0
    %1502 = vmatprep.subr.bf16.mxu0 0
    %1503 = vmatpush1.bf16.msra.mxu0 0
    %1504 = vmatprep.subr.bf16.mxu0 0
    %1505 = vmatpush1.bf16.msra.mxu0 0
    %1506 = vmatprep.subr.bf16.mxu0 0
    %1507 = vmatpush1.bf16.msra.mxu0 0
    %1508 = vmatprep.subr.bf16.mxu0 0
    %1509 = vmatpush1.bf16.msra.mxu0 0
    %1510 = vmatprep.subr.bf16.mxu0 0
    %1511 = vmatpush1.bf16.msra.mxu0 0
    %1512 = vmatprep.subr.bf16.mxu0 0
    %1513 = vmatpush1.bf16.msra.mxu0 0
    %1514 = vmatprep.subr.bf16.mxu0 0
    %1515 = vmatpush1.bf16.msra.mxu0 0
    %1516 = vmatprep.subr.bf16.mxu0 0
    %1517 = vmatpush1.bf16.msra.mxu0 0
    %1518 = vmatprep.subr.bf16.mxu0 0
    %1519 = vmatpush1.bf16.msra.mxu0 0
    %1520 = vmatprep.subr.bf16.mxu0 0
    %1521 = vmatpush1.bf16.msra.mxu0 0
    %1522 = vmatprep.subr.bf16.mxu0 0
    %1523 = vmatpush1.bf16.msra.mxu0 0
    %1524 = vmatprep.subr.bf16.mxu0 0
    %1525 = vmatpush1.bf16.msra.mxu0 0
    %1526 = vmatprep.mubr.bf16.mxu0 0
    %1527 = vmatmul.mubr.bf16.gmra.mrb[0].mxu0 %v1492
    %v1528 = vpop.f32.mrb[0].mxu0
    %v1529 = vadd.f32 %v1478, %v1528
    %v1530 = vpop.f32.mrb[0].mxu0
    %v1531 = vpop.f32.mrb[0].mxu0
    %v1532 = vadd.f32 %v1478, %v1531
    %v1533 = vpop.f32.mrb[0].mxu0
    %1534 = vdwg.mxu0
    %v1535 = vpack.c.bf16 %v99, %v98
    %v1536 = vld [vmem:[%s4 + $0x50] sm:$0xf]
    %v1537 = vld [vmem:[%s4 + $0x54] sm:$0xf]
    %v1538 = vld [vmem:[%s4 + $0x58] sm:$0xf]
    %v1539 = vld [vmem:[%s4 + $0x5c] sm:$0xf]
    %v1540 = vld [vmem:[%s5 + $0xb] sm:$0x1]
    %v1541 = vlaneseq
    %v1542 = vshrl.u32 %v1541, 7
    %v1543 = vsub.s32 0, %v1542
    %v1544 = vrot.slane %v1540, %v1543
    %v1549 = vunpack.c.l.b16 %v1536
    %v1550 = vunpack.c.l.b16 %v1537
    %v1551 = vunpack.c.l.b16 %v1538
    %v1552 = vunpack.c.l.b16 %v1539
    %v1553 = vpack.c.b16 %v1550, %v1549
    %v1554 = vpack.c.b16 %v1552, %v1551
    %v1558 = vsel %vm102, %v1535, 0
    %1560 = vmatprep.subr.bf16.mxu0 0
    %1561 = vmatpush1.bf16.msra.mxu0 %v1553
    %1562 = vmatprep.subr.bf16.mxu0 0
    %1563 = vmatpush1.bf16.msra.mxu0 %v1554
    %1564 = vmatprep.subr.bf16.mxu0 0
    %1565 = vmatpush1.bf16.msra.mxu0 0
    %1566 = vmatprep.subr.bf16.mxu0 0
    %1567 = vmatpush1.bf16.msra.mxu0 0
    %1568 = vmatprep.subr.bf16.mxu0 0
    %1569 = vmatpush1.bf16.msra.mxu0 0
    %1570 = vmatprep.subr.bf16.mxu0 0
    %1571 = vmatpush1.bf16.msra.mxu0 0
    %1572 = vmatprep.subr.bf16.mxu0 0
    %1573 = vmatpush1.bf16.msra.mxu0 0
    %1574 = vmatprep.subr.bf16.mxu0 0
    %1575 = vmatpush1.bf16.msra.mxu0 0
    %1576 = vmatprep.subr.bf16.mxu0 0
    %1577 = vmatpush1.bf16.msra.mxu0 0
    %1578 = vmatprep.subr.bf16.mxu0 0
    %1579 = vmatpush1.bf16.msra.mxu0 0
    %1580 = vmatprep.subr.bf16.mxu0 0
    %1581 = vmatpush1.bf16.msra.mxu0 0
    %1582 = vmatprep.subr.bf16.mxu0 0
    %1583 = vmatpush1.bf16.msra.mxu0 0
    %1584 = vmatprep.subr.bf16.mxu0 0
    %1585 = vmatpush1.bf16.msra.mxu0 0
    %1586 = vmatprep.subr.bf16.mxu0 0
    %1587 = vmatpush1.bf16.msra.mxu0 0
    %1588 = vmatprep.subr.bf16.mxu0 0
    %1589 = vmatpush1.bf16.msra.mxu0 0
    %1590 = vmatprep.subr.bf16.mxu0 0
    %1591 = vmatpush1.bf16.msra.mxu0 0
    %1592 = vmatprep.mubr.bf16.mxu0 0
    %1593 = vmatmul.mubr.bf16.gmra.mrb[0].mxu0 %v1558
    %v1594 = vpop.f32.mrb[0].mxu0
    %v1595 = vadd.f32 %v1544, %v1594
    %v1596 = vpop.f32.mrb[0].mxu0
    %v1597 = vpop.f32.mrb[0].mxu0
    %v1598 = vadd.f32 %v1544, %v1597
    %v1599 = vpop.f32.mrb[0].mxu0
    %1600 = vdwg.mxu0
    %v1601 = vld [vmem:[%s4 + $0x60] sm:$0xf]
    %v1602 = vld [vmem:[%s4 + $0x64] sm:$0xf]
    %v1603 = vld [vmem:[%s4 + $0x68] sm:$0xf]
    %v1604 = vld [vmem:[%s4 + $0x6c] sm:$0xf]
    %v1605 = vld [vmem:[%s5 + $0xc] sm:$0x1]
    %v1606 = vlaneseq
    %v1607 = vshrl.u32 %v1606, 7
    %v1608 = vsub.s32 0, %v1607
    %v1609 = vrot.slane %v1605, %v1608
    %v1614 = vunpack.c.l.b16 %v1601
    %v1615 = vunpack.c.l.b16 %v1602
    %v1616 = vunpack.c.l.b16 %v1603
    %v1617 = vunpack.c.l.b16 %v1604
    %v1618 = vpack.c.b16 %v1615, %v1614
    %v1619 = vpack.c.b16 %v1617, %v1616
    %1622 = vmatprep.subr.bf16.mxu0 0
    %1623 = vmatpush1.bf16.msra.mxu0 %v1618
    %1624 = vmatprep.subr.bf16.mxu0 0
    %1625 = vmatpush1.bf16.msra.mxu0 %v1619
    %1626 = vmatprep.subr.bf16.mxu0 0
    %1627 = vmatpush1.bf16.msra.mxu0 0
    %1628 = vmatprep.subr.bf16.mxu0 0
    %1629 = vmatpush1.bf16.msra.mxu0 0
    %1630 = vmatprep.subr.bf16.mxu0 0
    %1631 = vmatpush1.bf16.msra.mxu0 0
    %1632 = vmatprep.subr.bf16.mxu0 0
    %1633 = vmatpush1.bf16.msra.mxu0 0
    %1634 = vmatprep.subr.bf16.mxu0 0
    %1635 = vmatpush1.bf16.msra.mxu0 0
    %1636 = vmatprep.subr.bf16.mxu0 0
    %1637 = vmatpush1.bf16.msra.mxu0 0
    %1638 = vmatprep.subr.bf16.mxu0 0
    %1639 = vmatpush1.bf16.msra.mxu0 0
    %1640 = vmatprep.subr.bf16.mxu0 0
    %1641 = vmatpush1.bf16.msra.mxu0 0
    %1642 = vmatprep.subr.bf16.mxu0 0
    %1643 = vmatpush1.bf16.msra.mxu0 0
    %1644 = vmatprep.subr.bf16.mxu0 0
    %1645 = vmatpush1.bf16.msra.mxu0 0
    %1646 = vmatprep.subr.bf16.mxu0 0
    %1647 = vmatpush1.bf16.msra.mxu0 0
    %1648 = vmatprep.subr.bf16.mxu0 0
    %1649 = vmatpush1.bf16.msra.mxu0 0
    %1650 = vmatprep.subr.bf16.mxu0 0
    %1651 = vmatpush1.bf16.msra.mxu0 0
    %1652 = vmatprep.subr.bf16.mxu0 0
    %1653 = vmatpush1.bf16.msra.mxu0 0
    %1654 = vmatprep.mubr.bf16.mxu0 0
    %1655 = vmatmul.mubr.bf16.gmra.mrb[0].mxu0 %v1558
    %v1656 = vpop.f32.mrb[0].mxu0
    %v1657 = vadd.f32 %v1609, %v1656
    %v1658 = vpop.f32.mrb[0].mxu0
    %v1659 = vpop.f32.mrb[0].mxu0
    %v1660 = vadd.f32 %v1609, %v1659
    %v1661 = vpop.f32.mrb[0].mxu0
    %1662 = vdwg.mxu0
    %v1665 = vcombine.high %v1529, %v1529
    %v1667 = vunpack.c.l.s4 1966171168
    %v1668 = vunpack.c.0.s8 %v1667
    %v1669 = vlaneseq
    %v1670 = vshrl.u32 %v1669, 7
    %v1671 = vsub.s32 %v1668, %v1670
    %v1672 = vrot.slane %v1529, %v1671
    %v1674 = vunpack.c.l.s4 1966171168
    %v1675 = vunpack.c.0.s8 %v1674
    %v1676 = vlaneseq
    %v1677 = vshrl.u32 %v1676, 7
    %v1678 = vsub.s32 %v1675, %v1677
    %v1679 = vrot.slane %v1665, %v1678
    %v1680 = vcombine.high %v1672, %v1672
    %v1681 = vcombine.high %v1679, %v1679
    %v1683 = vunpack.c.l.s4 1966171168
    %v1684 = vunpack.c.0.s8 %v1683
    %v1685 = vlaneseq
    %v1686 = vshrl.u32 %v1685, 7
    %v1687 = vsub.s32 %v1684, %v1686
    %v1688 = vrot.slane %v1672, %v1687
    %v1690 = vunpack.c.l.s4 1966171168
    %v1691 = vunpack.c.0.s8 %v1690
    %v1692 = vlaneseq
    %v1693 = vshrl.u32 %v1692, 7
    %v1694 = vsub.s32 %v1691, %v1693
    %v1695 = vrot.slane %v1679, %v1694
    %v1697 = vunpack.c.l.s4 1966171168
    %v1698 = vunpack.c.0.s8 %v1697
    %v1699 = vlaneseq
    %v1700 = vshrl.u32 %v1699, 7
    %v1701 = vsub.s32 %v1698, %v1700
    %v1702 = vrot.slane %v1680, %v1701
    %v1704 = vunpack.c.l.s4 1966171168
    %v1705 = vunpack.c.0.s8 %v1704
    %v1706 = vlaneseq
    %v1707 = vshrl.u32 %v1706, 7
    %v1708 = vsub.s32 %v1705, %v1707
    %v1709 = vrot.slane %v1681, %v1708
    %v1710 = vcombine.high %v1688, %v1688
    %v1711 = vcombine.high %v1695, %v1695
    %v1712 = vcombine.high %v1702, %v1702
    %v1713 = vcombine.high %v1709, %v1709
    %v1714 = vcombine.high %v1532, %v1532
    %v1716 = vunpack.c.l.s4 1966171168
    %v1717 = vunpack.c.0.s8 %v1716
    %v1718 = vlaneseq
    %v1719 = vshrl.u32 %v1718, 7
    %v1720 = vsub.s32 %v1717, %v1719
    %v1721 = vrot.slane %v1532, %v1720
    %v1723 = vunpack.c.l.s4 1966171168
    %v1724 = vunpack.c.0.s8 %v1723
    %v1725 = vlaneseq
    %v1726 = vshrl.u32 %v1725, 7
    %v1727 = vsub.s32 %v1724, %v1726
    %v1728 = vrot.slane %v1714, %v1727
    %v1729 = vcombine.high %v1721, %v1721
    %v1730 = vcombine.high %v1728, %v1728
    %v1732 = vunpack.c.l.s4 1966171168
    %v1733 = vunpack.c.0.s8 %v1732
    %v1734 = vlaneseq
    %v1735 = vshrl.u32 %v1734, 7
    %v1736 = vsub.s32 %v1733, %v1735
    %v1737 = vrot.slane %v1721, %v1736
    %v1739 = vunpack.c.l.s4 1966171168
    %v1740 = vunpack.c.0.s8 %v1739
    %v1741 = vlaneseq
    %v1742 = vshrl.u32 %v1741, 7
    %v1743 = vsub.s32 %v1740, %v1742
    %v1744 = vrot.slane %v1728, %v1743
    %v1746 = vunpack.c.l.s4 1966171168
    %v1747 = vunpack.c.0.s8 %v1746
    %v1748 = vlaneseq
    %v1749 = vshrl.u32 %v1748, 7
    %v1750 = vsub.s32 %v1747, %v1749
    %v1751 = vrot.slane %v1729, %v1750
    %v1753 = vunpack.c.l.s4 1966171168
    %v1754 = vunpack.c.0.s8 %v1753
    %v1755 = vlaneseq
    %v1756 = vshrl.u32 %v1755, 7
    %v1757 = vsub.s32 %v1754, %v1756
    %v1758 = vrot.slane %v1730, %v1757
    %v1759 = vcombine.high %v1737, %v1737
    %v1760 = vcombine.high %v1744, %v1744
    %v1761 = vcombine.high %v1751, %v1751
    %v1762 = vcombine.high %v1758, %v1758
    %v1763 = vlaneseq
    %v1764 = vshrl.u32 %v1763, 7
    %v1765 = vsub.s32 0, %v1764
    %v1766 = vrot.slane %v1688, %v1765
    %v1767 = vlaneseq
    %v1768 = vshrl.u32 %v1767, 7
    %v1769 = vsub.s32 0, %v1768
    %v1770 = vrot.slane %v1702, %v1769
    %v1771 = vlaneseq
    %v1772 = vshrl.u32 %v1771, 7
    %v1773 = vsub.s32 0, %v1772
    %v1774 = vrot.slane %v1710, %v1773
    %v1775 = vlaneseq
    %v1776 = vshrl.u32 %v1775, 7
    %v1777 = vsub.s32 0, %v1776
    %v1778 = vrot.slane %v1712, %v1777
    %v1779 = vlaneseq
    %v1780 = vshrl.u32 %v1779, 7
    %v1781 = vsub.s32 0, %v1780
    %v1782 = vrot.slane %v1695, %v1781
    %v1783 = vlaneseq
    %v1784 = vshrl.u32 %v1783, 7
    %v1785 = vsub.s32 0, %v1784
    %v1786 = vrot.slane %v1709, %v1785
    %v1787 = vlaneseq
    %v1788 = vshrl.u32 %v1787, 7
    %v1789 = vsub.s32 0, %v1788
    %v1790 = vrot.slane %v1711, %v1789
    %v1791 = vlaneseq
    %v1792 = vshrl.u32 %v1791, 7
    %v1793 = vsub.s32 0, %v1792
    %v1794 = vrot.slane %v1713, %v1793
    %v1795 = vlaneseq
    %v1796 = vshrl.u32 %v1795, 7
    %v1797 = vsub.s32 0, %v1796
    %v1798 = vrot.slane %v1737, %v1797
    %v1799 = vlaneseq
    %v1800 = vshrl.u32 %v1799, 7
    %v1801 = vsub.s32 0, %v1800
    %v1802 = vrot.slane %v1751, %v1801
    %v1803 = vlaneseq
    %v1804 = vshrl.u32 %v1803, 7
    %v1805 = vsub.s32 0, %v1804
    %v1806 = vrot.slane %v1759, %v1805
    %v1807 = vlaneseq
    %v1808 = vshrl.u32 %v1807, 7
    %v1809 = vsub.s32 0, %v1808
    %v1810 = vrot.slane %v1761, %v1809
    %v1811 = vlaneseq
    %v1812 = vshrl.u32 %v1811, 7
    %v1813 = vsub.s32 0, %v1812
    %v1814 = vrot.slane %v1744, %v1813
    %v1815 = vlaneseq
    %v1816 = vshrl.u32 %v1815, 7
    %v1817 = vsub.s32 0, %v1816
    %v1818 = vrot.slane %v1758, %v1817
    %v1819 = vlaneseq
    %v1820 = vshrl.u32 %v1819, 7
    %v1821 = vsub.s32 0, %v1820
    %v1822 = vrot.slane %v1760, %v1821
    %v1823 = vlaneseq
    %v1824 = vshrl.u32 %v1823, 7
    %v1825 = vsub.s32 0, %v1824
    %v1826 = vrot.slane %v1762, %v1825
    %v1843 = vmul.f32 %v1766, %v36
    %v1844 = vmul.f32 %v1770, %v36
    %v1845 = vmul.f32 %v1774, %v36
    %v1846 = vmul.f32 %v1778, %v36
    %v1847 = vmul.f32 %v1782, %v36
    %v1848 = vmul.f32 %v1786, %v36
    %v1849 = vmul.f32 %v1790, %v36
    %v1850 = vmul.f32 %v1794, %v36
    %v1851 = vmul.f32 %v1798, %v36
    %v1852 = vmul.f32 %v1802, %v36
    %v1853 = vmul.f32 %v1806, %v36
    %v1854 = vmul.f32 %v1810, %v36
    %v1855 = vmul.f32 %v1814, %v36
    %v1856 = vmul.f32 %v1818, %v36
    %v1857 = vmul.f32 %v1822, %v36
    %v1858 = vmul.f32 %v1826, %v36
    %v1875 = vcombine.low %v1843, %v1844
    %v1876 = vcombine.low %v1845, %v1846
    %v1877 = vcombine.low %v1847, %v1848
    %v1878 = vcombine.low %v1849, %v1850
    %v1879 = vcombine.low %v1851, %v1852
    %v1880 = vcombine.low %v1853, %v1854
    %v1881 = vcombine.low %v1855, %v1856
    %v1882 = vcombine.low %v1857, %v1858
    %v1891 = vpack.c.bf16 %v1876, %v1875
    %v1892 = vpack.c.bf16 %v1878, %v1877
    %v1893 = vpack.c.bf16 %v1880, %v1879
    %v1894 = vpack.c.bf16 %v1882, %v1881
    %v1895 = vpack.c.bf16 %v1595, %v1595
    %v1896 = vpack.c.bf16 %v1598, %v1598
    %v1897 = vpack.c.bf16 %v1657, %v1657
    %v1898 = vpack.c.bf16 %v1660, %v1660
    %v1900 = vsel %vm102, %v1891, 0
    %v1903 = vsel %vm102, %v1892, 0
    %v1906 = vsel %vm102, %v1895, 0
    %1908 = vmatprep.subr.bf16.mxu0 0
    %1909 = vmatpush1.bf16.xpose.msra.mxu0 %v1906
    %1910 = vmatprep.subr.bf16.mxu0 0
    %1911 = vmatpush1.bf16.xpose.msra.mxu0 0
    %1912 = vmatprep.subr.bf16.mxu0 0
    %1913 = vmatpush1.bf16.xpose.msra.mxu0 0
    %1914 = vmatprep.subr.bf16.mxu0 0
    %1915 = vmatpush1.bf16.xpose.msra.mxu0 0
    %1916 = vmatprep.subr.bf16.mxu0 0
    %1917 = vmatpush1.bf16.xpose.msra.mxu0 0
    %1918 = vmatprep.subr.bf16.mxu0 0
    %1919 = vmatpush1.bf16.xpose.msra.mxu0 0
    %1920 = vmatprep.subr.bf16.mxu0 0
    %1921 = vmatpush1.bf16.xpose.msra.mxu0 0
    %1922 = vmatprep.subr.bf16.mxu0 0
    %1923 = vmatpush1.bf16.xpose.msra.mxu0 0
    %1924 = vmatprep.subr.bf16.mxu0 0
    %1925 = vmatpush1.bf16.xpose.msra.mxu0 0
    %1926 = vmatprep.subr.bf16.mxu0 0
    %1927 = vmatpush1.bf16.xpose.msra.mxu0 0
    %1928 = vmatprep.subr.bf16.mxu0 0
    %1929 = vmatpush1.bf16.xpose.msra.mxu0 0
    %1930 = vmatprep.subr.bf16.mxu0 0
    %1931 = vmatpush1.bf16.xpose.msra.mxu0 0
    %1932 = vmatprep.subr.bf16.mxu0 0
    %1933 = vmatpush1.bf16.xpose.msra.mxu0 0
    %1934 = vmatprep.subr.bf16.mxu0 0
    %1935 = vmatpush1.bf16.xpose.msra.mxu0 0
    %1936 = vmatprep.subr.bf16.mxu0 0
    %1937 = vmatpush1.bf16.xpose.msra.mxu0 0
    %1938 = vmatprep.subr.bf16.mxu0 0
    %1939 = vmatpush1.bf16.xpose.msra.mxu0 0
    %1940 = vmatprep.mubr.bf16.mxu0 0
    %1941 = vmatmul.mubr.bf16.gmra.mrb[0].mxu0 %v1900
    %v1942 = vpop.f32.mrb[0].mxu0
    %v1943 = vadd.f32 0.0, %v1942
    %v1944 = vpop.f32.mrb[0].mxu0
    %v1945 = vpop.f32.mrb[0].mxu0
    %v1946 = vadd.f32 0.0, %v1945
    %v1947 = vpop.f32.mrb[0].mxu0
    %1948 = vmatprep.mubr.bf16.mxu0 0
    %1949 = vmatmul.mubr.bf16.gmra.mrb[0].mxu0 %v1903
    %v1950 = vpop.f32.mrb[0].mxu0
    %v1951 = vadd.f32 0.0, %v1950
    %v1952 = vpop.f32.mrb[0].mxu0
    %v1953 = vpop.f32.mrb[0].mxu0
    %v1954 = vadd.f32 0.0, %v1953
    %v1955 = vpop.f32.mrb[0].mxu0
    %1956 = vdwg.mxu0
    %v1958 = vsel %vm102, %v1893, 0
    %v1961 = vsel %vm102, %v1894, 0
    %v1964 = vsel %vm102, %v1896, 0
    %1966 = vmatprep.subr.bf16.mxu0 0
    %1967 = vmatpush1.bf16.xpose.msra.mxu0 %v1964
    %1968 = vmatprep.subr.bf16.mxu0 0
    %1969 = vmatpush1.bf16.xpose.msra.mxu0 0
    %1970 = vmatprep.subr.bf16.mxu0 0
    %1971 = vmatpush1.bf16.xpose.msra.mxu0 0
    %1972 = vmatprep.subr.bf16.mxu0 0
    %1973 = vmatpush1.bf16.xpose.msra.mxu0 0
    %1974 = vmatprep.subr.bf16.mxu0 0
    %1975 = vmatpush1.bf16.xpose.msra.mxu0 0
    %1976 = vmatprep.subr.bf16.mxu0 0
    %1977 = vmatpush1.bf16.xpose.msra.mxu0 0
    %1978 = vmatprep.subr.bf16.mxu0 0
    %1979 = vmatpush1.bf16.xpose.msra.mxu0 0
    %1980 = vmatprep.subr.bf16.mxu0 0
    %1981 = vmatpush1.bf16.xpose.msra.mxu0 0
    %1982 = vmatprep.subr.bf16.mxu0 0
    %1983 = vmatpush1.bf16.xpose.msra.mxu0 0
    %1984 = vmatprep.subr.bf16.mxu0 0
    %1985 = vmatpush1.bf16.xpose.msra.mxu0 0
    %1986 = vmatprep.subr.bf16.mxu0 0
    %1987 = vmatpush1.bf16.xpose.msra.mxu0 0
    %1988 = vmatprep.subr.bf16.mxu0 0
    %1989 = vmatpush1.bf16.xpose.msra.mxu0 0
    %1990 = vmatprep.subr.bf16.mxu0 0
    %1991 = vmatpush1.bf16.xpose.msra.mxu0 0
    %1992 = vmatprep.subr.bf16.mxu0 0
    %1993 = vmatpush1.bf16.xpose.msra.mxu0 0
    %1994 = vmatprep.subr.bf16.mxu0 0
    %1995 = vmatpush1.bf16.xpose.msra.mxu0 0
    %1996 = vmatprep.subr.bf16.mxu0 0
    %1997 = vmatpush1.bf16.xpose.msra.mxu0 0
    %1998 = vmatprep.mubr.bf16.mxu0 0
    %1999 = vmatmul.mubr.bf16.gmra.mrb[0].mxu0 %v1958
    %v2000 = vpop.f32.mrb[0].mxu0
    %v2001 = vadd.f32 0.0, %v2000
    %v2002 = vpop.f32.mrb[0].mxu0
    %v2003 = vpop.f32.mrb[0].mxu0
    %v2004 = vadd.f32 0.0, %v2003
    %v2005 = vpop.f32.mrb[0].mxu0
    %2006 = vmatprep.mubr.bf16.mxu0 0
    %2007 = vmatmul.mubr.bf16.gmra.mrb[0].mxu0 %v1961
    %v2008 = vpop.f32.mrb[0].mxu0
    %v2009 = vadd.f32 0.0, %v2008
    %v2010 = vpop.f32.mrb[0].mxu0
    %v2011 = vpop.f32.mrb[0].mxu0
    %v2012 = vadd.f32 0.0, %v2011
    %v2013 = vpop.f32.mrb[0].mxu0
    %2014 = vdwg.mxu0
    %v2023 = vcombine.high %v1943, %v1943
    %v2024 = vcombine.high %v1946, %v1946
    %v2025 = vcombine.high %v1951, %v1951
    %v2026 = vcombine.high %v1954, %v1954
    %v2027 = vcombine.high %v2001, %v2001
    %v2028 = vcombine.high %v2004, %v2004
    %v2029 = vcombine.high %v2009, %v2009
    %v2030 = vcombine.high %v2012, %v2012
    %v2039 = vmul.f32 %v1943, 0.35355338
    %v2040 = vmul.f32 %v2023, 0.35355338
    %v2041 = vmul.f32 %v1946, 0.35355338
    %v2042 = vmul.f32 %v2024, 0.35355338
    %v2043 = vmul.f32 %v1951, 0.35355338
    %v2044 = vmul.f32 %v2025, 0.35355338
    %v2045 = vmul.f32 %v1954, 0.35355338
    %v2046 = vmul.f32 %v2026, 0.35355338
    %v2047 = vmul.f32 %v2001, 0.35355338
    %v2048 = vmul.f32 %v2027, 0.35355338
    %v2049 = vmul.f32 %v2004, 0.35355338
    %v2050 = vmul.f32 %v2028, 0.35355338
    %v2051 = vmul.f32 %v2009, 0.35355338
    %v2052 = vmul.f32 %v2029, 0.35355338
    %v2053 = vmul.f32 %v2012, 0.35355338
    %v2054 = vmul.f32 %v2030, 0.35355338
    %v2057 = vlaneseq
    %v2058 = vshrl.u32 %v2057, 7
    %v2059 = vsub.s32 0, %v2058
    %v2060 = vrot.slane %v94, %v2059
    %v2061 = vlaneseq
    %v2062 = vshrl.u32 %v2061, 7
    %v2063 = vsub.s32 0, %v2062
    %v2064 = vrot.slane %v95, %v2063
    %v2067 = vadd.f32 %v2039, %v2060
    %v2068 = vadd.f32 %v2040, %v2060
    %v2069 = vadd.f32 %v2041, %v2060
    %v2070 = vadd.f32 %v2042, %v2060
    %v2071 = vadd.f32 %v2043, %v2060
    %v2072 = vadd.f32 %v2044, %v2060
    %v2073 = vadd.f32 %v2045, %v2060
    %v2074 = vadd.f32 %v2046, %v2060
    %v2075 = vadd.f32 %v2047, %v2064
    %v2076 = vadd.f32 %v2048, %v2064
    %v2077 = vadd.f32 %v2049, %v2064
    %v2078 = vadd.f32 %v2050, %v2064
    %v2079 = vadd.f32 %v2051, %v2064
    %v2080 = vadd.f32 %v2052, %v2064
    %v2081 = vadd.f32 %v2053, %v2064
    %v2082 = vadd.f32 %v2054, %v2064
    %v2083 = vsel %vm794, %v2067, -inf
    %2084 = vmax.xlane.f32.xlu0 %v2083
    %v2085 = vpop.xlane.xlu0 %2084
    %v2086 = vsel %vm794, %v2068, -inf
    %2087 = vmax.xlane.f32.xlu0 %v2086
    %v2088 = vpop.xlane.xlu0 %2087
    %v2089 = vsel %vm794, %v2069, -inf
    %2090 = vmax.xlane.f32.xlu0 %v2089
    %v2091 = vpop.xlane.xlu0 %2090
    %v2092 = vsel %vm794, %v2070, -inf
    %2093 = vmax.xlane.f32.xlu0 %v2092
    %v2094 = vpop.xlane.xlu0 %2093
    %v2095 = vsel %vm794, %v2071, -inf
    %2096 = vmax.xlane.f32.xlu0 %v2095
    %v2097 = vpop.xlane.xlu0 %2096
    %v2098 = vsel %vm794, %v2072, -inf
    %2099 = vmax.xlane.f32.xlu0 %v2098
    %v2100 = vpop.xlane.xlu0 %2099
    %v2101 = vsel %vm794, %v2073, -inf
    %2102 = vmax.xlane.f32.xlu0 %v2101
    %v2103 = vpop.xlane.xlu0 %2102
    %v2104 = vsel %vm794, %v2074, -inf
    %2105 = vmax.xlane.f32.xlu0 %v2104
    %v2106 = vpop.xlane.xlu0 %2105
    %v2107 = vsel %vm794, %v2075, -inf
    %2108 = vmax.xlane.f32.xlu0 %v2107
    %v2109 = vpop.xlane.xlu0 %2108
    %v2110 = vsel %vm794, %v2076, -inf
    %2111 = vmax.xlane.f32.xlu0 %v2110
    %v2112 = vpop.xlane.xlu0 %2111
    %v2113 = vsel %vm794, %v2077, -inf
    %2114 = vmax.xlane.f32.xlu0 %v2113
    %v2115 = vpop.xlane.xlu0 %2114
    %v2116 = vsel %vm794, %v2078, -inf
    %2117 = vmax.xlane.f32.xlu0 %v2116
    %v2118 = vpop.xlane.xlu0 %2117
    %v2119 = vsel %vm794, %v2079, -inf
    %2120 = vmax.xlane.f32.xlu0 %v2119
    %v2121 = vpop.xlane.xlu0 %2120
    %v2122 = vsel %vm794, %v2080, -inf
    %2123 = vmax.xlane.f32.xlu0 %v2122
    %v2124 = vpop.xlane.xlu0 %2123
    %v2125 = vsel %vm794, %v2081, -inf
    %2126 = vmax.xlane.f32.xlu0 %v2125
    %v2127 = vpop.xlane.xlu0 %2126
    %v2128 = vsel %vm794, %v2082, -inf
    %2129 = vmax.xlane.f32.xlu0 %v2128
    %v2130 = vpop.xlane.xlu0 %2129
    %v2131 = vsub.f32 %v2067, %v2085
    %v2132 = vsub.f32 %v2068, %v2088
    %v2133 = vsub.f32 %v2069, %v2091
    %v2134 = vsub.f32 %v2070, %v2094
    %v2135 = vsub.f32 %v2071, %v2097
    %v2136 = vsub.f32 %v2072, %v2100
    %v2137 = vsub.f32 %v2073, %v2103
    %v2138 = vsub.f32 %v2074, %v2106
    %v2139 = vsub.f32 %v2075, %v2109
    %v2140 = vsub.f32 %v2076, %v2112
    %v2141 = vsub.f32 %v2077, %v2115
    %v2142 = vsub.f32 %v2078, %v2118
    %v2143 = vsub.f32 %v2079, %v2121
    %v2144 = vsub.f32 %v2080, %v2124
    %v2145 = vsub.f32 %v2081, %v2127
    %v2146 = vsub.f32 %v2082, %v2130
    %v2147 = vmul.f32 %v2131, 1.442695
    %v2148 = vpow.pop %v2147
    %v2149 = vmul.f32 %v2132, 1.442695
    %v2150 = vpow.pop %v2149
    %v2151 = vmul.f32 %v2133, 1.442695
    %v2152 = vpow.pop %v2151
    %v2153 = vmul.f32 %v2134, 1.442695
    %v2154 = vpow.pop %v2153
    %v2155 = vmul.f32 %v2135, 1.442695
    %v2156 = vpow.pop %v2155
    %v2157 = vmul.f32 %v2136, 1.442695
    %v2158 = vpow.pop %v2157
    %v2159 = vmul.f32 %v2137, 1.442695
    %v2160 = vpow.pop %v2159
    %v2161 = vmul.f32 %v2138, 1.442695
    %v2162 = vpow.pop %v2161
    %v2163 = vmul.f32 %v2139, 1.442695
    %v2164 = vpow.pop %v2163
    %v2165 = vmul.f32 %v2140, 1.442695
    %v2166 = vpow.pop %v2165
    %v2167 = vmul.f32 %v2141, 1.442695
    %v2168 = vpow.pop %v2167
    %v2169 = vmul.f32 %v2142, 1.442695
    %v2170 = vpow.pop %v2169
    %v2171 = vmul.f32 %v2143, 1.442695
    %v2172 = vpow.pop %v2171
    %v2173 = vmul.f32 %v2144, 1.442695
    %v2174 = vpow.pop %v2173
    %v2175 = vmul.f32 %v2145, 1.442695
    %v2176 = vpow.pop %v2175
    %v2177 = vmul.f32 %v2146, 1.442695
    %v2178 = vpow.pop %v2177
    %v2179 = vsel %vm794, %v2148, 0.0
    %2180 = vadd.xlane.f32.xlu0 %v2179
    %v2181 = vpop.xlane.xlu0 %2180
    %v2182 = vsel %vm794, %v2150, 0.0
    %2183 = vadd.xlane.f32.xlu0 %v2182
    %v2184 = vpop.xlane.xlu0 %2183
    %v2185 = vsel %vm794, %v2152, 0.0
    %2186 = vadd.xlane.f32.xlu0 %v2185
    %v2187 = vpop.xlane.xlu0 %2186
    %v2188 = vsel %vm794, %v2154, 0.0
    %2189 = vadd.xlane.f32.xlu0 %v2188
    %v2190 = vpop.xlane.xlu0 %2189
    %v2191 = vsel %vm794, %v2156, 0.0
    %2192 = vadd.xlane.f32.xlu0 %v2191
    %v2193 = vpop.xlane.xlu0 %2192
    %v2194 = vsel %vm794, %v2158, 0.0
    %2195 = vadd.xlane.f32.xlu0 %v2194
    %v2196 = vpop.xlane.xlu0 %2195
    %v2197 = vsel %vm794, %v2160, 0.0
    %2198 = vadd.xlane.f32.xlu0 %v2197
    %v2199 = vpop.xlane.xlu0 %2198
    %v2200 = vsel %vm794, %v2162, 0.0
    %2201 = vadd.xlane.f32.xlu0 %v2200
    %v2202 = vpop.xlane.xlu0 %2201
    %v2203 = vsel %vm794, %v2164, 0.0
    %2204 = vadd.xlane.f32.xlu0 %v2203
    %v2205 = vpop.xlane.xlu0 %2204
    %v2206 = vsel %vm794, %v2166, 0.0
    %2207 = vadd.xlane.f32.xlu0 %v2206
    %v2208 = vpop.xlane.xlu0 %2207
    %v2209 = vsel %vm794, %v2168, 0.0
    %2210 = vadd.xlane.f32.xlu0 %v2209
    %v2211 = vpop.xlane.xlu0 %2210
    %v2212 = vsel %vm794, %v2170, 0.0
    %2213 = vadd.xlane.f32.xlu0 %v2212
    %v2214 = vpop.xlane.xlu0 %2213
    %v2215 = vsel %vm794, %v2172, 0.0
    %2216 = vadd.xlane.f32.xlu0 %v2215
    %v2217 = vpop.xlane.xlu0 %2216
    %v2218 = vsel %vm794, %v2174, 0.0
    %2219 = vadd.xlane.f32.xlu0 %v2218
    %v2220 = vpop.xlane.xlu0 %2219
    %v2221 = vsel %vm794, %v2176, 0.0
    %2222 = vadd.xlane.f32.xlu0 %v2221
    %v2223 = vpop.xlane.xlu0 %2222
    %v2224 = vsel %vm794, %v2178, 0.0
    %2225 = vadd.xlane.f32.xlu0 %v2224
    %v2226 = vpop.xlane.xlu0 %2225
    %v2227 = vrcp.pop %v2181
    %v2228 = vrcp.pop %v2184
    %v2229 = vrcp.pop %v2187
    %v2230 = vrcp.pop %v2190
    %v2231 = vrcp.pop %v2193
    %v2232 = vrcp.pop %v2196
    %v2233 = vrcp.pop %v2199
    %v2234 = vrcp.pop %v2202
    %v2235 = vrcp.pop %v2205
    %v2236 = vrcp.pop %v2208
    %v2237 = vrcp.pop %v2211
    %v2238 = vrcp.pop %v2214
    %v2239 = vrcp.pop %v2217
    %v2240 = vrcp.pop %v2220
    %v2241 = vrcp.pop %v2223
    %v2242 = vrcp.pop %v2226
    %v2243 = vmul.f32 %v2148, %v2227
    %v2244 = vmul.f32 %v2150, %v2228
    %v2245 = vmul.f32 %v2152, %v2229
    %v2246 = vmul.f32 %v2154, %v2230
    %v2247 = vmul.f32 %v2156, %v2231
    %v2248 = vmul.f32 %v2158, %v2232
    %v2249 = vmul.f32 %v2160, %v2233
    %v2250 = vmul.f32 %v2162, %v2234
    %v2251 = vmul.f32 %v2164, %v2235
    %v2252 = vmul.f32 %v2166, %v2236
    %v2253 = vmul.f32 %v2168, %v2237
    %v2254 = vmul.f32 %v2170, %v2238
    %v2255 = vmul.f32 %v2172, %v2239
    %v2256 = vmul.f32 %v2174, %v2240
    %v2257 = vmul.f32 %v2176, %v2241
    %v2258 = vmul.f32 %v2178, %v2242
    %v2275 = vcombine.low %v2243, %v2244
    %v2276 = vcombine.low %v2245, %v2246
    %v2277 = vcombine.low %v2247, %v2248
    %v2278 = vcombine.low %v2249, %v2250
    %v2279 = vcombine.low %v2251, %v2252
    %v2280 = vcombine.low %v2253, %v2254
    %v2281 = vcombine.low %v2255, %v2256
    %v2282 = vcombine.low %v2257, %v2258
    %v2291 = vpack.c.bf16 %v2276, %v2275
    %v2292 = vpack.c.bf16 %v2278, %v2277
    %v2293 = vpack.c.bf16 %v2280, %v2279
    %v2294 = vpack.c.bf16 %v2282, %v2281
    %v2296 = vsel %vm1007, %v2291, 0
    %v2299 = vsel %vm1007, %v2292, 0
    %v2302 = vsel %vm1014, %v1897, 0
    %2304 = vmatprep.subr.bf16.mxu0 0
    %2305 = vmatpush1.bf16.msra.mxu0 %v2302
    %2306 = vmatprep.subr.bf16.mxu0 0
    %2307 = vmatpush1.bf16.msra.mxu0 0
    %2308 = vmatprep.subr.bf16.mxu0 0
    %2309 = vmatpush1.bf16.msra.mxu0 0
    %2310 = vmatprep.subr.bf16.mxu0 0
    %2311 = vmatpush1.bf16.msra.mxu0 0
    %2312 = vmatprep.subr.bf16.mxu0 0
    %2313 = vmatpush1.bf16.msra.mxu0 0
    %2314 = vmatprep.subr.bf16.mxu0 0
    %2315 = vmatpush1.bf16.msra.mxu0 0
    %2316 = vmatprep.subr.bf16.mxu0 0
    %2317 = vmatpush1.bf16.msra.mxu0 0
    %2318 = vmatprep.subr.bf16.mxu0 0
    %2319 = vmatpush1.bf16.msra.mxu0 0
    %2320 = vmatprep.subr.bf16.mxu0 0
    %2321 = vmatpush1.bf16.msra.mxu0 0
    %2322 = vmatprep.subr.bf16.mxu0 0
    %2323 = vmatpush1.bf16.msra.mxu0 0
    %2324 = vmatprep.subr.bf16.mxu0 0
    %2325 = vmatpush1.bf16.msra.mxu0 0
    %2326 = vmatprep.subr.bf16.mxu0 0
    %2327 = vmatpush1.bf16.msra.mxu0 0
    %2328 = vmatprep.subr.bf16.mxu0 0
    %2329 = vmatpush1.bf16.msra.mxu0 0
    %2330 = vmatprep.subr.bf16.mxu0 0
    %2331 = vmatpush1.bf16.msra.mxu0 0
    %2332 = vmatprep.subr.bf16.mxu0 0
    %2333 = vmatpush1.bf16.msra.mxu0 0
    %2334 = vmatprep.subr.bf16.mxu0 0
    %2335 = vmatpush1.bf16.msra.mxu0 0
    %2336 = vmatprep.mubr.bf16.mxu0 0
    %2337 = vmatmul.mubr.bf16.gmra.mrb[0].mxu0 %v2296
    %v2338 = vpop.f32.mrb[0].mxu0
    %v2339 = vadd.f32 0.0, %v2338
    %v2340 = vpop.f32.mrb[0].mxu0
    %v2341 = vpop.f32.mrb[0].mxu0
    %v2342 = vadd.f32 0.0, %v2341
    %v2343 = vpop.f32.mrb[0].mxu0
    %2344 = vmatprep.mubr.bf16.mxu0 0
    %2345 = vmatmul.mubr.bf16.gmra.mrb[0].mxu0 %v2299
    %v2346 = vpop.f32.mrb[0].mxu0
    %v2347 = vadd.f32 0.0, %v2346
    %v2348 = vpop.f32.mrb[0].mxu0
    %v2349 = vpop.f32.mrb[0].mxu0
    %v2350 = vadd.f32 0.0, %v2349
    %v2351 = vpop.f32.mrb[0].mxu0
    %2352 = vdwg.mxu0
    %v2354 = vsel %vm1007, %v2293, 0
    %v2357 = vsel %vm1007, %v2294, 0
    %v2360 = vsel %vm1014, %v1898, 0
    %2362 = vmatprep.subr.bf16.mxu0 0
    %2363 = vmatpush1.bf16.msra.mxu0 %v2360
    %2364 = vmatprep.subr.bf16.mxu0 0
    %2365 = vmatpush1.bf16.msra.mxu0 0
    %2366 = vmatprep.subr.bf16.mxu0 0
    %2367 = vmatpush1.bf16.msra.mxu0 0
    %2368 = vmatprep.subr.bf16.mxu0 0
    %2369 = vmatpush1.bf16.msra.mxu0 0
    %2370 = vmatprep.subr.bf16.mxu0 0
    %2371 = vmatpush1.bf16.msra.mxu0 0
    %2372 = vmatprep.subr.bf16.mxu0 0
    %2373 = vmatpush1.bf16.msra.mxu0 0
    %2374 = vmatprep.subr.bf16.mxu0 0
    %2375 = vmatpush1.bf16.msra.mxu0 0
    %2376 = vmatprep.subr.bf16.mxu0 0
    %2377 = vmatpush1.bf16.msra.mxu0 0
    %2378 = vmatprep.subr.bf16.mxu0 0
    %2379 = vmatpush1.bf16.msra.mxu0 0
    %2380 = vmatprep.subr.bf16.mxu0 0
    %2381 = vmatpush1.bf16.msra.mxu0 0
    %2382 = vmatprep.subr.bf16.mxu0 0
    %2383 = vmatpush1.bf16.msra.mxu0 0
    %2384 = vmatprep.subr.bf16.mxu0 0
    %2385 = vmatpush1.bf16.msra.mxu0 0
    %2386 = vmatprep.subr.bf16.mxu0 0
    %2387 = vmatpush1.bf16.msra.mxu0 0
    %2388 = vmatprep.subr.bf16.mxu0 0
    %2389 = vmatpush1.bf16.msra.mxu0 0
    %2390 = vmatprep.subr.bf16.mxu0 0
    %2391 = vmatpush1.bf16.msra.mxu0 0
    %2392 = vmatprep.subr.bf16.mxu0 0
    %2393 = vmatpush1.bf16.msra.mxu0 0
    %2394 = vmatprep.mubr.bf16.mxu0 0
    %2395 = vmatmul.mubr.bf16.gmra.mrb[0].mxu0 %v2354
    %v2396 = vpop.f32.mrb[0].mxu0
    %v2397 = vadd.f32 0.0, %v2396
    %v2398 = vpop.f32.mrb[0].mxu0
    %v2399 = vpop.f32.mrb[0].mxu0
    %v2400 = vadd.f32 0.0, %v2399
    %v2401 = vpop.f32.mrb[0].mxu0
    %2402 = vmatprep.mubr.bf16.mxu0 0
    %2403 = vmatmul.mubr.bf16.gmra.mrb[0].mxu0 %v2357
    %v2404 = vpop.f32.mrb[0].mxu0
    %v2405 = vadd.f32 0.0, %v2404
    %v2406 = vpop.f32.mrb[0].mxu0
    %v2407 = vpop.f32.mrb[0].mxu0
    %v2408 = vadd.f32 0.0, %v2407
    %v2409 = vpop.f32.mrb[0].mxu0
    %2410 = vdwg.mxu0
    %v2419 = vcombine.high %v2339, %v2339
    %v2420 = vcombine.high %v2342, %v2342
    %v2421 = vcombine.high %v2347, %v2347
    %v2422 = vcombine.high %v2350, %v2350
    %v2423 = vcombine.high %v2397, %v2397
    %v2424 = vcombine.high %v2400, %v2400
    %v2425 = vcombine.high %v2405, %v2405
    %v2426 = vcombine.high %v2408, %v2408
    %v2435 = vmul.f32 %v2339, %v36
    %v2436 = vmul.f32 %v2419, %v36
    %v2437 = vmul.f32 %v2342, %v36
    %v2438 = vmul.f32 %v2420, %v36
    %v2439 = vmul.f32 %v2347, %v36
    %v2440 = vmul.f32 %v2421, %v36
    %v2441 = vmul.f32 %v2350, %v36
    %v2442 = vmul.f32 %v2422, %v36
    %v2443 = vmul.f32 %v2397, %v36
    %v2444 = vmul.f32 %v2423, %v36
    %v2445 = vmul.f32 %v2400, %v36
    %v2446 = vmul.f32 %v2424, %v36
    %v2447 = vmul.f32 %v2405, %v36
    %v2448 = vmul.f32 %v2425, %v36
    %v2449 = vmul.f32 %v2408, %v36
    %v2450 = vmul.f32 %v2426, %v36
    %v2451 = vsel %vm1165, %v2435, 0.0
    %v2452 = vrot.slane %v2451, 4
    %v2453 = vadd.f32 %v2451, %v2452
    %v2454 = vrot.slane %v2453, 2
    %v2455 = vadd.f32 %v2453, %v2454
    %v2456 = vrot.slane %v2455, 1
    %v2457 = vadd.f32 %v2455, %v2456
    %v2458 = vsel %vm1165, %v2436, 0.0
    %v2459 = vrot.slane %v2458, 4
    %v2460 = vadd.f32 %v2458, %v2459
    %v2461 = vrot.slane %v2460, 2
    %v2462 = vadd.f32 %v2460, %v2461
    %v2463 = vrot.slane %v2462, 1
    %v2464 = vadd.f32 %v2462, %v2463
    %v2465 = vsel %vm1165, %v2437, 0.0
    %v2466 = vrot.slane %v2465, 4
    %v2467 = vadd.f32 %v2465, %v2466
    %v2468 = vrot.slane %v2467, 2
    %v2469 = vadd.f32 %v2467, %v2468
    %v2470 = vrot.slane %v2469, 1
    %v2471 = vadd.f32 %v2469, %v2470
    %v2472 = vsel %vm1165, %v2438, 0.0
    %v2473 = vrot.slane %v2472, 4
    %v2474 = vadd.f32 %v2472, %v2473
    %v2475 = vrot.slane %v2474, 2
    %v2476 = vadd.f32 %v2474, %v2475
    %v2477 = vrot.slane %v2476, 1
    %v2478 = vadd.f32 %v2476, %v2477
    %v2479 = vsel %vm1165, %v2439, 0.0
    %v2480 = vrot.slane %v2479, 4
    %v2481 = vadd.f32 %v2479, %v2480
    %v2482 = vrot.slane %v2481, 2
    %v2483 = vadd.f32 %v2481, %v2482
    %v2484 = vrot.slane %v2483, 1
    %v2485 = vadd.f32 %v2483, %v2484
    %v2486 = vsel %vm1165, %v2440, 0.0
    %v2487 = vrot.slane %v2486, 4
    %v2488 = vadd.f32 %v2486, %v2487
    %v2489 = vrot.slane %v2488, 2
    %v2490 = vadd.f32 %v2488, %v2489
    %v2491 = vrot.slane %v2490, 1
    %v2492 = vadd.f32 %v2490, %v2491
    %v2493 = vsel %vm1165, %v2441, 0.0
    %v2494 = vrot.slane %v2493, 4
    %v2495 = vadd.f32 %v2493, %v2494
    %v2496 = vrot.slane %v2495, 2
    %v2497 = vadd.f32 %v2495, %v2496
    %v2498 = vrot.slane %v2497, 1
    %v2499 = vadd.f32 %v2497, %v2498
    %v2500 = vsel %vm1165, %v2442, 0.0
    %v2501 = vrot.slane %v2500, 4
    %v2502 = vadd.f32 %v2500, %v2501
    %v2503 = vrot.slane %v2502, 2
    %v2504 = vadd.f32 %v2502, %v2503
    %v2505 = vrot.slane %v2504, 1
    %v2506 = vadd.f32 %v2504, %v2505
    %v2507 = vsel %vm1165, %v2443, 0.0
    %v2508 = vrot.slane %v2507, 4
    %v2509 = vadd.f32 %v2507, %v2508
    %v2510 = vrot.slane %v2509, 2
    %v2511 = vadd.f32 %v2509, %v2510
    %v2512 = vrot.slane %v2511, 1
    %v2513 = vadd.f32 %v2511, %v2512
    %v2514 = vsel %vm1165, %v2444, 0.0
    %v2515 = vrot.slane %v2514, 4
    %v2516 = vadd.f32 %v2514, %v2515
    %v2517 = vrot.slane %v2516, 2
    %v2518 = vadd.f32 %v2516, %v2517
    %v2519 = vrot.slane %v2518, 1
    %v2520 = vadd.f32 %v2518, %v2519
    %v2521 = vsel %vm1165, %v2445, 0.0
    %v2522 = vrot.slane %v2521, 4
    %v2523 = vadd.f32 %v2521, %v2522
    %v2524 = vrot.slane %v2523, 2
    %v2525 = vadd.f32 %v2523, %v2524
    %v2526 = vrot.slane %v2525, 1
    %v2527 = vadd.f32 %v2525, %v2526
    %v2528 = vsel %vm1165, %v2446, 0.0
    %v2529 = vrot.slane %v2528, 4
    %v2530 = vadd.f32 %v2528, %v2529
    %v2531 = vrot.slane %v2530, 2
    %v2532 = vadd.f32 %v2530, %v2531
    %v2533 = vrot.slane %v2532, 1
    %v2534 = vadd.f32 %v2532, %v2533
    %v2535 = vsel %vm1165, %v2447, 0.0
    %v2536 = vrot.slane %v2535, 4
    %v2537 = vadd.f32 %v2535, %v2536
    %v2538 = vrot.slane %v2537, 2
    %v2539 = vadd.f32 %v2537, %v2538
    %v2540 = vrot.slane %v2539, 1
    %v2541 = vadd.f32 %v2539, %v2540
    %v2542 = vsel %vm1165, %v2448, 0.0
    %v2543 = vrot.slane %v2542, 4
    %v2544 = vadd.f32 %v2542, %v2543
    %v2545 = vrot.slane %v2544, 2
    %v2546 = vadd.f32 %v2544, %v2545
    %v2547 = vrot.slane %v2546, 1
    %v2548 = vadd.f32 %v2546, %v2547
    %v2549 = vsel %vm1165, %v2449, 0.0
    %v2550 = vrot.slane %v2549, 4
    %v2551 = vadd.f32 %v2549, %v2550
    %v2552 = vrot.slane %v2551, 2
    %v2553 = vadd.f32 %v2551, %v2552
    %v2554 = vrot.slane %v2553, 1
    %v2555 = vadd.f32 %v2553, %v2554
    %v2556 = vsel %vm1165, %v2450, 0.0
    %v2557 = vrot.slane %v2556, 4
    %v2558 = vadd.f32 %v2556, %v2557
    %v2559 = vrot.slane %v2558, 2
    %v2560 = vadd.f32 %v2558, %v2559
    %v2561 = vrot.slane %v2560, 1
    %v2562 = vadd.f32 %v2560, %v2561
    %v2563 = vpack.c.bf16 %v2457, %v2457
    %v2564 = vpack.c.bf16 %v2464, %v2464
    %v2565 = vpack.c.bf16 %v2471, %v2471
    %v2566 = vpack.c.bf16 %v2478, %v2478
    %v2567 = vpack.c.bf16 %v2485, %v2485
    %v2568 = vpack.c.bf16 %v2492, %v2492
    %v2569 = vpack.c.bf16 %v2499, %v2499
    %v2570 = vpack.c.bf16 %v2506, %v2506
    %v2571 = vpack.c.bf16 %v2513, %v2513
    %v2572 = vpack.c.bf16 %v2520, %v2520
    %v2573 = vpack.c.bf16 %v2527, %v2527
    %v2574 = vpack.c.bf16 %v2534, %v2534
    %v2575 = vpack.c.bf16 %v2541, %v2541
    %v2576 = vpack.c.bf16 %v2548, %v2548
    %v2577 = vpack.c.bf16 %v2555, %v2555
    %v2578 = vpack.c.bf16 %v2562, %v2562
    %v2579 = vld [vmem:[%s4 + $0x70] sm:$0xf]
    %v2580 = vld [vmem:[%s4 + $0x74] sm:$0xf]
    %v2581 = vld [vmem:[%s4 + $0x78] sm:$0xf]
    %v2582 = vld [vmem:[%s4 + $0x7c] sm:$0xf]
    %v2583 = vld [vmem:[%s5 + $0xd] sm:$0x1]
    %v2584 = vlaneseq
    %v2585 = vshrl.u32 %v2584, 7
    %v2586 = vsub.s32 0, %v2585
    %v2587 = vrot.slane %v2583, %v2586
    %v2604 = vunpack.c.l.b16 %v2563
    %v2605 = vunpack.c.l.b16 %v2564
    %v2606 = vunpack.c.l.b16 %v2565
    %v2607 = vunpack.c.l.b16 %v2566
    %v2608 = vunpack.c.l.b16 %v2567
    %v2609 = vunpack.c.l.b16 %v2568
    %v2610 = vunpack.c.l.b16 %v2569
    %v2611 = vunpack.c.l.b16 %v2570
    %v2612 = vunpack.c.l.b16 %v2571
    %v2613 = vunpack.c.l.b16 %v2572
    %v2614 = vunpack.c.l.b16 %v2573
    %v2615 = vunpack.c.l.b16 %v2574
    %v2616 = vunpack.c.l.b16 %v2575
    %v2617 = vunpack.c.l.b16 %v2576
    %v2618 = vunpack.c.l.b16 %v2577
    %v2619 = vunpack.c.l.b16 %v2578
    %v2620 = vsel %vm1335, %v2605, %v2604
    %v2621 = vsel %vm1337, %v2606, %v2620
    %v2622 = vsel %vm1339, %v2607, %v2621
    %v2623 = vsel %vm1341, %v2608, %v2622
    %v2624 = vsel %vm1343, %v2609, %v2623
    %v2625 = vsel %vm1345, %v2610, %v2624
    %v2626 = vsel %vm1347, %v2611, %v2625
    %v2627 = vsel %vm1335, %v2613, %v2612
    %v2628 = vsel %vm1337, %v2614, %v2627
    %v2629 = vsel %vm1339, %v2615, %v2628
    %v2630 = vsel %vm1341, %v2616, %v2629
    %v2631 = vsel %vm1343, %v2617, %v2630
    %v2632 = vsel %vm1345, %v2618, %v2631
    %v2633 = vsel %vm1347, %v2619, %v2632
    %v2634 = vpack.c.b16 %v2633, %v2626
    %v2639 = vunpack.c.l.b16 %v2579
    %v2640 = vunpack.c.l.b16 %v2580
    %v2641 = vunpack.c.l.b16 %v2581
    %v2642 = vunpack.c.l.b16 %v2582
    %v2643 = vpack.c.b16 %v2640, %v2639
    %v2644 = vpack.c.b16 %v2642, %v2641
    %v2648 = vsel %vm102, %v2634, 0
    %2650 = vmatprep.subr.bf16.mxu0 0
    %2651 = vmatpush1.bf16.msra.mxu0 %v2643
    %2652 = vmatprep.subr.bf16.mxu0 0
    %2653 = vmatpush1.bf16.msra.mxu0 %v2644
    %2654 = vmatprep.subr.bf16.mxu0 0
    %2655 = vmatpush1.bf16.msra.mxu0 0
    %2656 = vmatprep.subr.bf16.mxu0 0
    %2657 = vmatpush1.bf16.msra.mxu0 0
    %2658 = vmatprep.subr.bf16.mxu0 0
    %2659 = vmatpush1.bf16.msra.mxu0 0
    %2660 = vmatprep.subr.bf16.mxu0 0
    %2661 = vmatpush1.bf16.msra.mxu0 0
    %2662 = vmatprep.subr.bf16.mxu0 0
    %2663 = vmatpush1.bf16.msra.mxu0 0
    %2664 = vmatprep.subr.bf16.mxu0 0
    %2665 = vmatpush1.bf16.msra.mxu0 0
    %2666 = vmatprep.subr.bf16.mxu0 0
    %2667 = vmatpush1.bf16.msra.mxu0 0
    %2668 = vmatprep.subr.bf16.mxu0 0
    %2669 = vmatpush1.bf16.msra.mxu0 0
    %2670 = vmatprep.subr.bf16.mxu0 0
    %2671 = vmatpush1.bf16.msra.mxu0 0
    %2672 = vmatprep.subr.bf16.mxu0 0
    %2673 = vmatpush1.bf16.msra.mxu0 0
    %2674 = vmatprep.subr.bf16.mxu0 0
    %2675 = vmatpush1.bf16.msra.mxu0 0
    %2676 = vmatprep.subr.bf16.mxu0 0
    %2677 = vmatpush1.bf16.msra.mxu0 0
    %2678 = vmatprep.subr.bf16.mxu0 0
    %2679 = vmatpush1.bf16.msra.mxu0 0
    %2680 = vmatprep.subr.bf16.mxu0 0
    %2681 = vmatpush1.bf16.msra.mxu0 0
    %2682 = vmatprep.mubr.bf16.mxu0 0
    %2683 = vmatmul.mubr.bf16.gmra.mrb[0].mxu0 %v2648
    %v2684 = vpop.f32.mrb[0].mxu0
    %v2685 = vadd.f32 %v2587, %v2684
    %v2686 = vpop.f32.mrb[0].mxu0
    %v2687 = vpop.f32.mrb[0].mxu0
    %v2688 = vadd.f32 %v2587, %v2687
    %v2689 = vpop.f32.mrb[0].mxu0
    %2690 = vdwg.mxu0
    %v2691 = vadd.f32 %v1413, %v2685
    %v2692 = vadd.f32 %v1414, %v2688
    %v2693 = vld [vmem:[%s5 + $0x2] sm:$0x1]
    %v2694 = vld [vmem:[%s5 + $0x5] sm:$0x1]
    %v2695 = vsel %vm102, %v2691, 0.0
    %2696 = vadd.xlane.f32.xlu0 %v2695
    %v2697 = vpop.xlane.xlu0 %2696
    %v2698 = vsel %vm102, %v2692, 0.0
    %2699 = vadd.xlane.f32.xlu0 %v2698
    %v2700 = vpop.xlane.xlu0 %2699
    %v2701 = vmul.f32 %v2697, %v109
    %v2702 = vmul.f32 %v2700, %v109
    %v2703 = vsub.f32 %v2691, %v2701
    %v2704 = vsub.f32 %v2692, %v2702
    %v2705 = vmul.f32 %v2703, %v2703
    %v2706 = vmul.f32 %v2704, %v2704
    %v2707 = vsel %vm102, %v2705, 0.0
    %2708 = vadd.xlane.f32.xlu0 %v2707
    %v2709 = vpop.xlane.xlu0 %2708
    %v2710 = vsel %vm102, %v2706, 0.0
    %2711 = vadd.xlane.f32.xlu0 %v2710
    %v2712 = vpop.xlane.xlu0 %2711
    %v2713 = vmul.f32 %v2709, 0.032258064
    %v2714 = vmul.f32 %v2712, 0.032258064
    %v2715 = vrsqrt.pop %v2713
    %v2716 = vmul.f32 %v2713, %v2715
    %vm2717 = vcmp.eq.f32.partialorder %v2713, inf
    %v2718 = vsel %vm2717, %v2713, %v2716
    %vm2719 = vcmp.eq.f32.partialorder %v2713, 0.0
    %v2720 = vand.u32 %v2713, 2147483648
    %v2721 = vsel %vm2719, %v2720, %v2718
    %v2722 = vrsqrt.pop %v2714
    %v2723 = vmul.f32 %v2714, %v2722
    %vm2724 = vcmp.eq.f32.partialorder %v2714, inf
    %v2725 = vsel %vm2724, %v2714, %v2723
    %vm2726 = vcmp.eq.f32.partialorder %v2714, 0.0
    %v2727 = vand.u32 %v2714, 2147483648
    %v2728 = vsel %vm2726, %v2727, %v2725
    %v2729 = vadd.f32 %v2721, 1e-06
    %v2730 = vadd.f32 %v2728, 1e-06
    %v2731 = vrcp.pop %v2729
    %v2732 = vmul.f32 %v2703, %v2731
    %v2733 = vrcp.pop %v2730
    %v2734 = vmul.f32 %v2704, %v2733
    %v2735 = vlaneseq
    %v2736 = vshrl.u32 %v2735, 7
    %v2737 = vsub.s32 0, %v2736
    %v2738 = vrot.slane %v2693, %v2737
    %v2739 = vmul.f32 %v2738, %v2732
    %v2740 = vmul.f32 %v2738, %v2734
    %v2741 = vlaneseq
    %v2742 = vshrl.u32 %v2741, 7
    %v2743 = vsub.s32 0, %v2742
    %v2744 = vrot.slane %v2694, %v2743
    %v2745 = vadd.f32 %v2739, %v2744
    %v2746 = vadd.f32 %v2740, %v2744
    %v2747 = vld [vmem:[%s5 + $0x10] sm:$0x1]
    %v2748 = vpack.c.bf16 %v2746, %v2745
    %v2749 = vld [vmem:[%s4 + $0x80] sm:$0xf]
    %v2750 = vld [vmem:[%s4 + $0x84] sm:$0xf]
    %v2751 = vld [vmem:[%s4 + $0x88] sm:$0xf]
    %v2752 = vld [vmem:[%s4 + $0x8c] sm:$0xf]
    %v2753 = vld [vmem:[%s5 + $0xe] sm:$0x1]
    %v2754 = vlaneseq
    %v2755 = vshrl.u32 %v2754, 7
    %v2756 = vsub.s32 0, %v2755
    %v2757 = vrot.slane %v2753, %v2756
    %v2762 = vunpack.c.l.b16 %v2749
    %v2763 = vunpack.c.l.b16 %v2750
    %v2764 = vunpack.c.l.b16 %v2751
    %v2765 = vunpack.c.l.b16 %v2752
    %v2766 = vpack.c.b16 %v2763, %v2762
    %v2767 = vpack.c.b16 %v2765, %v2764
    %v2771 = vsel %vm102, %v2748, 0
    %2773 = vmatprep.subr.bf16.mxu0 0
    %2774 = vmatpush1.bf16.msra.mxu0 %v2766
    %2775 = vmatprep.subr.bf16.mxu0 0
    %2776 = vmatpush1.bf16.msra.mxu0 %v2767
    %2777 = vmatprep.subr.bf16.mxu0 0
    %2778 = vmatpush1.bf16.msra.mxu0 0
    %2779 = vmatprep.subr.bf16.mxu0 0
    %2780 = vmatpush1.bf16.msra.mxu0 0
    %2781 = vmatprep.subr.bf16.mxu0 0
    %2782 = vmatpush1.bf16.msra.mxu0 0
    %2783 = vmatprep.subr.bf16.mxu0 0
    %2784 = vmatpush1.bf16.msra.mxu0 0
    %2785 = vmatprep.subr.bf16.mxu0 0
    %2786 = vmatpush1.bf16.msra.mxu0 0
    %2787 = vmatprep.subr.bf16.mxu0 0
    %2788 = vmatpush1.bf16.msra.mxu0 0
    %2789 = vmatprep.subr.bf16.mxu0 0
    %2790 = vmatpush1.bf16.msra.mxu0 0
    %2791 = vmatprep.subr.bf16.mxu0 0
    %2792 = vmatpush1.bf16.msra.mxu0 0
    %2793 = vmatprep.subr.bf16.mxu0 0
    %2794 = vmatpush1.bf16.msra.mxu0 0
    %2795 = vmatprep.subr.bf16.mxu0 0
    %2796 = vmatpush1.bf16.msra.mxu0 0
    %2797 = vmatprep.subr.bf16.mxu0 0
    %2798 = vmatpush1.bf16.msra.mxu0 0
    %2799 = vmatprep.subr.bf16.mxu0 0
    %2800 = vmatpush1.bf16.msra.mxu0 0
    %2801 = vmatprep.subr.bf16.mxu0 0
    %2802 = vmatpush1.bf16.msra.mxu0 0
    %2803 = vmatprep.subr.bf16.mxu0 0
    %2804 = vmatpush1.bf16.msra.mxu0 0
    %2805 = vmatprep.mubr.bf16.mxu0 0
    %2806 = vmatmul.mubr.bf16.gmra.mrb[0].mxu0 %v2771
    %v2807 = vpop.f32.mrb[0].mxu0
    %v2808 = vadd.f32 %v2757, %v2807
    %v2809 = vpop.f32.mrb[0].mxu0
    %v2810 = vpop.f32.mrb[0].mxu0
    %v2811 = vadd.f32 %v2757, %v2810
    %v2812 = vpop.f32.mrb[0].mxu0
    %2813 = vdwg.mxu0
    %v2814 = vmax.f32 %v2808, 0.0
    %v2815 = vmax.f32 %v2811, 0.0
    %v2816 = vpack.c.bf16 %v2815, %v2814
    %v2817 = vld [vmem:[%s4 + $0xa0] sm:$0xf]
    %v2818 = vld [vmem:[%s4 + $0xa4] sm:$0xf]
    %v2819 = vld [vmem:[%s4 + $0xa8] sm:$0xf]
    %v2820 = vld [vmem:[%s4 + $0xac] sm:$0xf]
    %v2825 = vunpack.c.l.b16 %v2817
    %v2826 = vunpack.c.l.b16 %v2818
    %v2827 = vunpack.c.l.b16 %v2819
    %v2828 = vunpack.c.l.b16 %v2820
    %v2829 = vpack.c.b16 %v2826, %v2825
    %v2830 = vpack.c.b16 %v2828, %v2827
    %v2834 = vsel %vm102, %v2816, 0
    %2836 = vmatprep.subr.bf16.mxu0 0
    %2837 = vmatpush1.bf16.msra.mxu0 %v2829
    %2838 = vmatprep.subr.bf16.mxu0 0
    %2839 = vmatpush1.bf16.msra.mxu0 %v2830
    %2840 = vmatprep.subr.bf16.mxu0 0
    %2841 = vmatpush1.bf16.msra.mxu0 0
    %2842 = vmatprep.subr.bf16.mxu0 0
    %2843 = vmatpush1.bf16.msra.mxu0 0
    %2844 = vmatprep.subr.bf16.mxu0 0
    %2845 = vmatpush1.bf16.msra.mxu0 0
    %2846 = vmatprep.subr.bf16.mxu0 0
    %2847 = vmatpush1.bf16.msra.mxu0 0
    %2848 = vmatprep.subr.bf16.mxu0 0
    %2849 = vmatpush1.bf16.msra.mxu0 0
    %2850 = vmatprep.subr.bf16.mxu0 0
    %2851 = vmatpush1.bf16.msra.mxu0 0
    %2852 = vmatprep.subr.bf16.mxu0 0
    %2853 = vmatpush1.bf16.msra.mxu0 0
    %2854 = vmatprep.subr.bf16.mxu0 0
    %2855 = vmatpush1.bf16.msra.mxu0 0
    %2856 = vmatprep.subr.bf16.mxu0 0
    %2857 = vmatpush1.bf16.msra.mxu0 0
    %2858 = vmatprep.subr.bf16.mxu0 0
    %2859 = vmatpush1.bf16.msra.mxu0 0
    %2860 = vmatprep.subr.bf16.mxu0 0
    %2861 = vmatpush1.bf16.msra.mxu0 0
    %2862 = vmatprep.subr.bf16.mxu0 0
    %2863 = vmatpush1.bf16.msra.mxu0 0
    %2864 = vmatprep.subr.bf16.mxu0 0
    %2865 = vmatpush1.bf16.msra.mxu0 0
    %2866 = vmatprep.subr.bf16.mxu0 0
    %2867 = vmatpush1.bf16.msra.mxu0 0
    %2868 = vmatprep.mubr.bf16.mxu0 0
    %2869 = vmatmul.mubr.bf16.gmra.mrb[0].mxu0 %v2834
    %v2870 = vpop.f32.mrb[0].mxu0
    %v2871 = vadd.f32 0.0, %v2870
    %v2872 = vpop.f32.mrb[0].mxu0
    %v2873 = vpop.f32.mrb[0].mxu0
    %v2874 = vadd.f32 0.0, %v2873
    %v2875 = vpop.f32.mrb[0].mxu0
    %2876 = vdwg.mxu0
    %v2877 = vlaneseq
    %v2878 = vshrl.u32 %v2877, 7
    %v2879 = vsub.s32 0, %v2878
    %v2880 = vrot.slane %v2747, %v2879
    %v2881 = vadd.f32 %v2880, %v2871
    %v2882 = vadd.f32 %v2880, %v2874
    %v2883 = vld [vmem:[%s4 + $0x90] sm:$0xf]
    %v2884 = vld [vmem:[%s4 + $0x94] sm:$0xf]
    %v2885 = vld [vmem:[%s4 + $0x98] sm:$0xf]
    %v2886 = vld [vmem:[%s4 + $0x9c] sm:$0xf]
    %v2887 = vld [vmem:[%s5 + $0xf] sm:$0x1]
    %v2888 = vlaneseq
    %v2889 = vshrl.u32 %v2888, 7
    %v2890 = vsub.s32 0, %v2889
    %v2891 = vrot.slane %v2887, %v2890
    %v2896 = vunpack.c.l.b16 %v2883
    %v2897 = vunpack.c.l.b16 %v2884
    %v2898 = vunpack.c.l.b16 %v2885
    %v2899 = vunpack.c.l.b16 %v2886
    %v2900 = vpack.c.b16 %v2897, %v2896
    %v2901 = vpack.c.b16 %v2899, %v2898
    %2904 = vmatprep.subr.bf16.mxu0 0
    %2905 = vmatpush1.bf16.msra.mxu0 %v2900
    %2906 = vmatprep.subr.bf16.mxu0 0
    %2907 = vmatpush1.bf16.msra.mxu0 %v2901
    %2908 = vmatprep.subr.bf16.mxu0 0
    %2909 = vmatpush1.bf16.msra.mxu0 0
    %2910 = vmatprep.subr.bf16.mxu0 0
    %2911 = vmatpush1.bf16.msra.mxu0 0
    %2912 = vmatprep.subr.bf16.mxu0 0
    %2913 = vmatpush1.bf16.msra.mxu0 0
    %2914 = vmatprep.subr.bf16.mxu0 0
    %2915 = vmatpush1.bf16.msra.mxu0 0
    %2916 = vmatprep.subr.bf16.mxu0 0
    %2917 = vmatpush1.bf16.msra.mxu0 0
    %2918 = vmatprep.subr.bf16.mxu0 0
    %2919 = vmatpush1.bf16.msra.mxu0 0
    %2920 = vmatprep.subr.bf16.mxu0 0
    %2921 = vmatpush1.bf16.msra.mxu0 0
    %2922 = vmatprep.subr.bf16.mxu0 0
    %2923 = vmatpush1.bf16.msra.mxu0 0
    %2924 = vmatprep.subr.bf16.mxu0 0
    %2925 = vmatpush1.bf16.msra.mxu0 0
    %2926 = vmatprep.subr.bf16.mxu0 0
    %2927 = vmatpush1.bf16.msra.mxu0 0
    %2928 = vmatprep.subr.bf16.mxu0 0
    %2929 = vmatpush1.bf16.msra.mxu0 0
    %2930 = vmatprep.subr.bf16.mxu0 0
    %2931 = vmatpush1.bf16.msra.mxu0 0
    %2932 = vmatprep.subr.bf16.mxu0 0
    %2933 = vmatpush1.bf16.msra.mxu0 0
    %2934 = vmatprep.subr.bf16.mxu0 0
    %2935 = vmatpush1.bf16.msra.mxu0 0
    %2936 = vmatprep.mubr.bf16.mxu0 0
    %2937 = vmatmul.mubr.bf16.gmra.mrb[0].mxu0 %v2771
    %v2938 = vpop.f32.mrb[0].mxu0
    %v2939 = vadd.f32 %v2891, %v2938
    %v2940 = vpop.f32.mrb[0].mxu0
    %v2941 = vpop.f32.mrb[0].mxu0
    %v2942 = vadd.f32 %v2891, %v2941
    %v2943 = vpop.f32.mrb[0].mxu0
    %2944 = vdwg.mxu0
    %v2945 = vmax.f32 %v2939, 0.0
    %v2946 = vmax.f32 %v2942, 0.0
    %v2947 = vpack.c.bf16 %v2946, %v2945
    %v2948 = vld [vmem:[%s4 + $0xb0] sm:$0xf]
    %v2949 = vld [vmem:[%s4 + $0xb4] sm:$0xf]
    %v2950 = vld [vmem:[%s4 + $0xb8] sm:$0xf]
    %v2951 = vld [vmem:[%s4 + $0xbc] sm:$0xf]
    %v2956 = vunpack.c.l.b16 %v2948
    %v2957 = vunpack.c.l.b16 %v2949
    %v2958 = vunpack.c.l.b16 %v2950
    %v2959 = vunpack.c.l.b16 %v2951
    %v2960 = vpack.c.b16 %v2957, %v2956
    %v2961 = vpack.c.b16 %v2959, %v2958
    %v2965 = vsel %vm102, %v2947, 0
    %2967 = vmatprep.subr.bf16.mxu0 0
    %2968 = vmatpush1.bf16.msra.mxu0 %v2960
    %2969 = vmatprep.subr.bf16.mxu0 0
    %2970 = vmatpush1.bf16.msra.mxu0 %v2961
    %2971 = vmatprep.subr.bf16.mxu0 0
    %2972 = vmatpush1.bf16.msra.mxu0 0
    %2973 = vmatprep.subr.bf16.mxu0 0
    %2974 = vmatpush1.bf16.msra.mxu0 0
    %2975 = vmatprep.subr.bf16.mxu0 0
    %2976 = vmatpush1.bf16.msra.mxu0 0
    %2977 = vmatprep.subr.bf16.mxu0 0
    %2978 = vmatpush1.bf16.msra.mxu0 0
    %2979 = vmatprep.subr.bf16.mxu0 0
    %2980 = vmatpush1.bf16.msra.mxu0 0
    %2981 = vmatprep.subr.bf16.mxu0 0
    %2982 = vmatpush1.bf16.msra.mxu0 0
    %2983 = vmatprep.subr.bf16.mxu0 0
    %2984 = vmatpush1.bf16.msra.mxu0 0
    %2985 = vmatprep.subr.bf16.mxu0 0
    %2986 = vmatpush1.bf16.msra.mxu0 0
    %2987 = vmatprep.subr.bf16.mxu0 0
    %2988 = vmatpush1.bf16.msra.mxu0 0
    %2989 = vmatprep.subr.bf16.mxu0 0
    %2990 = vmatpush1.bf16.msra.mxu0 0
    %2991 = vmatprep.subr.bf16.mxu0 0
    %2992 = vmatpush1.bf16.msra.mxu0 0
    %2993 = vmatprep.subr.bf16.mxu0 0
    %2994 = vmatpush1.bf16.msra.mxu0 0
    %2995 = vmatprep.subr.bf16.mxu0 0
    %2996 = vmatpush1.bf16.msra.mxu0 0
    %2997 = vmatprep.subr.bf16.mxu0 0
    %2998 = vmatpush1.bf16.msra.mxu0 0
    %2999 = vmatprep.mubr.bf16.mxu0 0
    %3000 = vmatmul.mubr.bf16.gmra.mrb[0].mxu0 %v2965
    %v3001 = vpop.f32.mrb[0].mxu0
    %v3002 = vadd.f32 0.0, %v3001
    %v3003 = vpop.f32.mrb[0].mxu0
    %v3004 = vpop.f32.mrb[0].mxu0
    %v3005 = vadd.f32 0.0, %v3004
    %v3006 = vpop.f32.mrb[0].mxu0
    %3007 = vdwg.mxu0
    %v3008 = vadd.f32 %v2881, %v3002
    %v3009 = vadd.f32 %v2882, %v3005
    %v3010 = vadd.f32 %v2691, %v3008
    %v3011 = vadd.f32 %v2692, %v3009
    %3012 = vst.msk [vmem:[#allocation2] sm:$0xff] %vm102, %v3010
    %3013 = vst.msk [vmem:[#allocation2 + $0x8] sm:$0xff] %vm102, %v3011
    // Predicated region
    $region26: #{tpu_custom_call.1} parent=1 // pred_check
      _
    $region27: #{tpu_custom_call.1} parent=1 // pred_check_branch
      %3015 = sbr.rel (0) target = $region29
    $region28: #{tpu_custom_call.1} parent=1 // pred_region
      %s3017 = ssub.s32 256, 256
      %3018 = vsyncadd [#allocation3], %s3017
      %s3019 = sshll.u32 [#allocation2], 4
      %s3020 = int_to_ptr.vmem [resolvable:$true] %s3019
      %3025 = dma.vmem_to_hbm [thread:$0]  %s3020, 256, %s6, [#allocation3], 128, 128, 8
    $region29: #{tpu_custom_call.1} parent=1 // pred_fallthru
      _
    // Predicated region
    $region30: #{tpu_custom_call.1} parent=1 // pred_check
      _
    $region31: #{tpu_custom_call.1} parent=1 // pred_check_branch
      %3027 = sbr.rel (0) target = $region33
    $region32: #{tpu_custom_call.1} parent=1 // pred_region
      %3028 = dma.done [#allocation3], 256
    $region33: #{tpu_custom_call.1} parent=1 // pred_fallthru
      _
    %3029 = vsyncpa [#allocation3], 1

</llo_original>
